<compile_context>
chip_gen: v7x
topology: tpu7x:2x2x1
jax: 0.10.0
libtpu: 0.0.40
codegen_flags: <defaults>
</compile_context>

<pallas_src>
import functools
import math

import jax
import jax.numpy as jnp
from jax.experimental import pallas as pl
from jax.experimental.pallas import tpu as pltpu

# ----------------------------- synthetic LLM config -----------------------------
VOCAB = 64
VOCAB_PAD = 128                 # lane-dense logits (sliced back to VOCAB outside)
N_HEADS = 2
HEAD_DIM = 128                  # full 128-lane head dim -> aligned per-head tiles
HIDDEN = N_HEADS * HEAD_DIM     # 256
N_LAYERS = 2
MLP = 512
SEQ_LEN = 8                     # model.sequence_length
CTX_LEN = 16                    # model.context_length
CS = CTX_LEN - SEQ_LEN          # KV-cache length
EOS_TOKEN_ID = 0
EPS = 1e-5


# ----------------------------- fused Pallas kernel -------------------------------
def _decoder_layer_kernel(x_ref, fm_ref, cos_ref, sin_ref, pk_ref, pv_ref,
                          wqkv_ref, wo_ref, w1_ref, w2_ref,
                          ln1_ref, ln2_ref, lnf_ref, lmh_ref,
                          logits_ref, newk_ref, newv_ref,
                          x_scr, q_scr, kf_scr, vf_scr,
                          *, S, C, H, Dh, D, n_layers):
    """One (batch, layer) grid step of the decoder; residual carried in VMEM."""
    layer = pl.program_id(1)
    CSl = C - S

    def rms(v, w):                      # v: [S, D] f32, w: [1, D] f32
        var = jnp.mean(v * v, axis=-1, keepdims=True)
        return v * jax.lax.rsqrt(var + EPS) * w

    def mm(a, w):                       # bf16 MXU operands, f32 accumulate
        return jnp.dot(a.astype(jnp.bfloat16), w,
                       preferred_element_type=jnp.float32)

    # residual initialisation on the first layer of each batch element
    @pl.when(layer == 0)
    def _():
        x_scr[...] = x_ref[...]

    x = x_scr[...]                                           # [S, D] f32

    # ---------------- attention ----------------
    h = rms(x, ln1_ref[...])
    qkv = mm(h, wqkv_ref[...])                               # [S, 3D]  Q|K|V

    cos_b = cos_ref[...]                                     # [S, Dh]
    lane = jax.lax.broadcasted_iota(jnp.int32, (S, Dh), 1)
    sin_signed = jnp.where(lane < Dh // 2, -1.0, 1.0) * sin_ref[...]

    def rope(t):                                             # t: [S, Dh] f32 tile
        # rotate_half(t) = sign * roll(t, Dh/2); 1/sqrt(Dh) already folded in Wq
        return t * cos_b + pltpu.roll(t, shift=Dh // 2, axis=1) * sin_signed

    for hh in range(H):                  # 128-lane aligned, full-width slices only
        q_h = rope(qkv[:, hh * Dh:(hh + 1) * Dh])
        k_h = rope(qkv[:, D + hh * Dh:D + (hh + 1) * Dh])
        v_h = qkv[:, 2 * D + hh * Dh:2 * D + (hh + 1) * Dh]
        q_scr[hh] = q_h
        newk_ref[hh] = k_h.astype(jnp.bfloat16)              # lane-dense [S,128]
        newv_ref[hh] = v_h.astype(jnp.bfloat16)
        kf_scr[hh, CSl:, :] = k_h                            # stage new K/V ...
        vf_scr[hh, CSl:, :] = v_h
    kf_scr[:, :CSl, :] = pk_ref[...].astype(jnp.float32)     # ... next to past K/V
    vf_scr[:, :CSl, :] = pv_ref[...].astype(jnp.float32)

    # additive causal + padding mask, built in-kernel from the [1, C] validity row
    q_pos = jax.lax.broadcasted_iota(jnp.int32, (S, C), 0) + (C - S)
    kv_pos = jax.lax.broadcasted_iota(jnp.int32, (S, C), 1)
    allowed = (kv_pos <= q_pos) & (fm_ref[...] > 0.0)
    bias = jnp.where(allowed, 0.0, -50.0)                    # [S, C] f32

    q = q_scr[...].astype(jnp.bfloat16)                      # [H, S, Dh]
    kf = kf_scr[...].astype(jnp.bfloat16)                    # [H, C, Dh]
    vf = vf_scr[...].astype(jnp.bfloat16)

    s = jnp.einsum("hsd,htd->hst", q, kf,
                   preferred_element_type=jnp.float32)       # [H, S, C]
    s = s + bias[None]
    s = s - jnp.max(s, axis=-1, keepdims=True)
    p = jnp.exp(s)
    p = p * pl.reciprocal(jnp.sum(p, axis=-1, keepdims=True), approx=True)
    o = jnp.einsum("hst,htd->hsd", p.astype(jnp.bfloat16), vf,
                   preferred_element_type=jnp.float32)       # [H, S, Dh]

    attn = jnp.concatenate([o[hh] for hh in range(H)], axis=-1)   # [S, D]
    x = x + mm(attn, wo_ref[...])

    # ---------------- MLP ----------------
    hm = rms(x, ln2_ref[...])
    x = x + mm(jax.nn.relu(mm(hm, w1_ref[...])), w2_ref[...])
    x_scr[...] = x

    # ---------------- final norm + lm head (lane-padded vocab) ----------------
    @pl.when(layer == n_layers - 1)
    def _():
        xf = rms(x, lnf_ref[...])
        logits_ref[...] = mm(xf, lmh_ref[...])               # [S, VOCAB_PAD]


def fused_forward(x_emb, full_mask, cos, sin, past_k, past_v, p):
    """x_emb:[B,S,D]  full_mask:[B,1,C]  cos/sin:[B,S,Dh]  past_k/v:[L,B,H,CS,Dh]."""
    B = x_emb.shape[0]
    S, C, H, Dh, D = SEQ_LEN, CTX_LEN, N_HEADS, HEAD_DIM, HIDDEN
    kernel = functools.partial(_decoder_layer_kernel, S=S, C=C, H=H, Dh=Dh,
                               D=D, n_layers=N_LAYERS)

    in_specs = [
        pl.BlockSpec((None, S, D), lambda b, l: (b, 0, 0)),             # x_emb
        pl.BlockSpec((None, 1, C), lambda b, l: (b, 0, 0)),             # validity row
        pl.BlockSpec((None, S, Dh), lambda b, l: (b, 0, 0)),            # cos
        pl.BlockSpec((None, S, Dh), lambda b, l: (b, 0, 0)),            # sin
        pl.BlockSpec((None, None, H, CS, Dh), lambda b, l: (l, b, 0, 0, 0)),  # past K
        pl.BlockSpec((None, None, H, CS, Dh), lambda b, l: (l, b, 0, 0, 0)),  # past V
        pl.BlockSpec((None, D, 3 * D), lambda b, l: (l, 0, 0)),         # Wqkv
        pl.BlockSpec((None, D, D), lambda b, l: (l, 0, 0)),             # Wo
        pl.BlockSpec((None, D, MLP), lambda b, l: (l, 0, 0)),           # W1
        pl.BlockSpec((None, MLP, D), lambda b, l: (l, 0, 0)),           # W2
        pl.BlockSpec((None, 1, D), lambda b, l: (l, 0, 0)),             # ln1
        pl.BlockSpec((None, 1, D), lambda b, l: (l, 0, 0)),             # ln2
        pl.BlockSpec((1, D), lambda b, l: (0, 0)),                      # ln_f
        pl.BlockSpec((D, VOCAB_PAD), lambda b, l: (0, 0)),              # lm_head
    ]
    out_specs = [
        pl.BlockSpec((None, S, VOCAB_PAD), lambda b, l: (b, 0, 0)),             # logits
        pl.BlockSpec((None, None, H, S, Dh), lambda b, l: (l, b, 0, 0, 0)),     # new K
        pl.BlockSpec((None, None, H, S, Dh), lambda b, l: (l, b, 0, 0, 0)),     # new V
    ]
    out_shape = (
        jax.ShapeDtypeStruct((B, S, VOCAB_PAD), jnp.float32),
        jax.ShapeDtypeStruct((N_LAYERS, B, H, S, Dh), jnp.bfloat16),
        jax.ShapeDtypeStruct((N_LAYERS, B, H, S, Dh), jnp.bfloat16),
    )
    scratch = [
        pltpu.VMEM((S, D), jnp.float32),        # residual carried across layers
        pltpu.VMEM((H, S, Dh), jnp.float32),    # Q (head-major)
        pltpu.VMEM((H, C, Dh), jnp.float32),    # staged past|new K
        pltpu.VMEM((H, C, Dh), jnp.float32),    # staged past|new V
    ]
    return pl.pallas_call(
        kernel,
        out_shape=out_shape,
        grid_spec=pltpu.PrefetchScalarGridSpec(
            num_scalar_prefetch=0, grid=(B, N_LAYERS),
            in_specs=in_specs, out_specs=out_specs, scratch_shapes=scratch),
        compiler_params=pltpu.CompilerParams(
            dimension_semantics=("parallel", "arbitrary")),
    )(x_emb, full_mask, cos, sin, past_k, past_v,
      p["wqkv"], p["wo"], p["w1"], p["w2"],
      p["ln1"], p["ln2"], p["ln_f"], p["lm_head"])


# ----------------------------- model parameters ----------------------------------
class RopeEmbedding:
    """Stand-in for the `Embedding` helper: rotary cos/sin for position ids."""

    def __init__(self, head_dim, base=10000.0):
        self.inv_freq = 1.0 / (
            base ** (jnp.arange(0, head_dim, 2, dtype=jnp.float32) / head_dim))

    def get_embedding(self, position_ids):
        pos = position_ids.astype(jnp.float32)
        freqs = pos[..., None] * self.inv_freq[None, None, :]
        emb = jnp.concatenate([freqs, freqs], axis=-1)
        return jnp.cos(emb)[:, None], jnp.sin(emb)[:, None]


def init_params(key):
    def nrm(k, shape, scale=0.05):
        return scale * jax.random.normal(k, shape, dtype=jnp.float32)

    keys = jax.random.split(key, 4 + N_LAYERS)
    params = {
        "embed": nrm(keys[0], (VOCAB, HIDDEN)),
        "ln_f": jnp.ones((HIDDEN,), jnp.float32),
        "lm_head": nrm(keys[1], (HIDDEN, VOCAB)),
        "layers": [],
    }
    for li in range(N_LAYERS):
        lk = jax.random.split(keys[4 + li], 6)
        params["layers"].append({
            "ln1": jnp.ones((HIDDEN,), jnp.float32),
            "ln2": jnp.ones((HIDDEN,), jnp.float32),
            "wq": nrm(lk[0], (HIDDEN, HIDDEN)),
            "wk": nrm(lk[1], (HIDDEN, HIDDEN)),
            "wv": nrm(lk[2], (HIDDEN, HIDDEN)),
            "wo": nrm(lk[3], (HIDDEN, HIDDEN)),
            "w1": nrm(lk[4], (HIDDEN, MLP)),
            "w2": nrm(lk[5], (MLP, HIDDEN)),
        })
    return params


def pack_params(params, embedding):
    """Stack per-layer weights, fold the softmax scale into Wq, pre-cast to bf16,
    and pad lm_head to a lane-dense (128) vocab."""
    layers = params["layers"]

    def stack(name):
        return jnp.stack([l[name] for l in layers], axis=0)

    wq = stack("wq") * (1.0 / math.sqrt(HEAD_DIM))   # RoPE is linear -> exact fold
    wk, wv = stack("wk"), stack("wv")
    lm_head = jnp.pad(params["lm_head"], ((0, 0), (0, VOCAB_PAD - VOCAB)))
    return {
        "embed": params["embed"],                                  # f32 (gather outside)
        "inv_freq": embedding.inv_freq,                            # f32
        "wqkv": jnp.concatenate([wq, wk, wv], -1).astype(jnp.bfloat16),  # [L, D, 3D]
        "wo": stack("wo").astype(jnp.bfloat16),
        "w1": stack("w1").astype(jnp.bfloat16),
        "w2": stack("w2").astype(jnp.bfloat16),
        "ln1": stack("ln1")[:, None, :],                           # [L, 1, D] f32
        "ln2": stack("ln2")[:, None, :],
        "ln_f": params["ln_f"][None, :],                           # [1, D] f32
        "lm_head": lm_head.astype(jnp.bfloat16),                   # [D, VOCAB_PAD]
    }


# ----------------------------- per-slice jitted step ------------------------------
@functools.partial(jax.jit, donate_argnums=(3, 4))
def _generator_step(packed, ids_slice, mask_slice, cache_k, cache_v, cur_len):
    """prepare_inputs + fused forward + fixed-shape KV-cache shift for one slice.

    cache_k / cache_v : [N_LAYERS, B, H, CS, Dh] bf16 (time-major, left padded);
    buffers are donated so the shift updates in place at the XLA level.
    """
    B, num_valid = ids_slice.shape
    S, C = SEQ_LEN, CTX_LEN
    pad = S - num_valid

    # --- left-pad ids / mask to sequence_length ---
    ids_ext = jnp.full((B, pad), EOS_TOKEN_ID, dtype=ids_slice.dtype)
    padded_ids = jnp.concatenate([ids_ext, ids_slice], axis=-1)
    padded_attn = jnp.concatenate(
        [jnp.zeros((B, pad), jnp.float32), mask_slice.astype(jnp.float32)], axis=-1)

    # --- per-position validity row (KV cache part + new tokens) ---
    kv_idx = jnp.arange(CS)
    kv_mask = jnp.broadcast_to(
        (kv_idx >= (CS - cur_len)).astype(jnp.float32)[None, :], (B, CS))
    full_mask = jnp.concatenate([kv_mask, padded_attn], axis=-1)      # [B, C]

    # --- position ids -> rotary cos/sin ---
    position_ids = jnp.clip(
        jnp.cumsum(full_mask, axis=1).astype(jnp.int32) - 1, 0, C - 1)[..., -S:]
    pos = position_ids.astype(jnp.float32)
    freqs = pos[..., None] * packed["inv_freq"][None, None, :]
    emb = jnp.concatenate([freqs, freqs], axis=-1)                    # [B, S, Dh]
    cos, sin = jnp.cos(emb), jnp.sin(emb)

    # --- embedding lookup + fused Pallas forward ---
    x_emb = jnp.take(packed["embed"], padded_ids, axis=0)             # [B, S, D]
    logits_p, new_k, new_v = fused_forward(
        x_emb, full_mask[:, None, :], cos, sin, cache_k, cache_v, packed)

    # --- outputs: last num_valid logits (un-pad vocab), fixed-shape cache shift ---
    local_logits = logits_p[:, S - num_valid:, :VOCAB]
    newk_valid = new_k[..., S - num_valid:, :]
    newv_valid = new_v[..., S - num_valid:, :]
    # TODO(synk): a ring-buffer write index would make this O(S) instead of O(C)
    # per step; the shift form mirrors get_past_keyval_with_shift exactly.
    upd_k = jnp.concatenate([cache_k, newk_valid], axis=-2)[..., -CS:, :]
    upd_v = jnp.concatenate([cache_v, newv_valid], axis=-2)[..., -CS:, :]
    return local_logits, upd_k, upd_v


# ----------------------------- LLM_Generator logic --------------------------------
def slice_inputs_for_inference(input_ids, attention_mask, sequence_length):
    input_length = input_ids.shape[-1]
    for idx in list(range(0, input_length, sequence_length))[::-1]:
        idx = input_length - idx
        yield (input_ids[:, max(0, idx - sequence_length):idx],
               attention_mask[:, max(0, idx - sequence_length):idx])


class LLMGenerator:
    """JAX/Pallas port of LLM_Generator.forward (single selected model)."""
    # TODO(synk): HuggingFace GenerationMixin / tokenizer / DynamicCache plumbing
    # and AIMET-ONNX model switching (select_model / LLM_Loader I/O) have no
    # Pallas equivalent; only the numeric forward path is reproduced here.

    def __init__(self, params, embedding,
                 sequence_length=SEQ_LEN, context_length=CTX_LEN):
        self.packed = pack_params(params, embedding)
        self.S = sequence_length
        self.C = context_length

    def forward(self, input_ids, attention_mask=None):
        if attention_mask is None:
            attention_mask = jnp.ones_like(input_ids)
        B = input_ids.shape[0]
        cs = self.C - self.S
        # fixed-shape, time-major, bf16 KV cache (no per-step shape changes)
        cache_k = jnp.zeros((N_LAYERS, B, N_HEADS, cs, HEAD_DIM), jnp.bfloat16)
        cache_v = jnp.zeros((N_LAYERS, B, N_HEADS, cs, HEAD_DIM), jnp.bfloat16)
        cur_len = 0
        logits_parts = []
        # TODO(synk): fold this per-slice loop into lax.scan once slices are uniform.
        for ids_s, mask_s in slice_inputs_for_inference(
                input_ids, attention_mask, self.S):
            num_valid = ids_s.shape[-1]
            local_logits, cache_k, cache_v = _generator_step(
                self.packed, ids_s, mask_s, cache_k, cache_v, cur_len)
            logits_parts.append(local_logits)
            cur_len = min(cur_len + num_valid, cs)
        logits = jnp.concatenate(logits_parts, axis=1)
        # present the module-conformant layouts: key [B,H,Dh,T], value [B,H,T,Dh]
        key_cache = [jnp.swapaxes(cache_k[li, :, :, cs - cur_len:, :], -1, -2)
                        .astype(jnp.float32) for li in range(N_LAYERS)]
        value_cache = [cache_v[li, :, :, cs - cur_len:, :].astype(jnp.float32)
                       for li in range(N_LAYERS)]
        return logits, key_cache, value_cache


# ----------------------------------- main ----------------------------------------
if __name__ == "__main__":
    key = jax.random.PRNGKey(0)
    pkey, ikey = jax.random.split(key)
    params = init_params(pkey)
    embedding = RopeEmbedding(HEAD_DIM)

    B, L = 2, 12   # L > SEQ_LEN so both the padded slice and the full slice run
    input_ids = jax.random.randint(ikey, (B, L), 0, VOCAB, dtype=jnp.int32)
    attention_mask = jnp.ones((B, L), dtype=jnp.int32)

    gen = LLMGenerator(params, embedding)
    logits, key_cache, value_cache = gen.forward(input_ids, attention_mask)

    jax.block_until_ready(logits)
    for k, v in zip(key_cache, value_cache):
        jax.block_until_ready(k)
        jax.block_until_ready(v)

    assert logits.shape == (B, L, VOCAB)
    assert key_cache[0].shape == (B, N_HEADS, HEAD_DIM, CTX_LEN - SEQ_LEN)
    assert value_cache[0].shape == (B, N_HEADS, CTX_LEN - SEQ_LEN, HEAD_DIM)
    print("KERNEL_OK")
</pallas_src>

<mosaic_0001>
module attributes {stable_mosaic.version = 11 : i64} {
  func.func @_decoder_layer_kernel(%arg0: i32, %arg1: i32, %arg2: memref<1x8x256xf32, #tpu.memory_space<vmem>>, %arg3: memref<1x1x16xf32, #tpu.memory_space<vmem>>, %arg4: memref<1x8x128xf32, #tpu.memory_space<vmem>>, %arg5: memref<1x8x128xf32, #tpu.memory_space<vmem>>, %arg6: memref<1x1x2x8x128xbf16, #tpu.memory_space<vmem>>, %arg7: memref<1x1x2x8x128xbf16, #tpu.memory_space<vmem>>, %arg8: memref<1x256x768xbf16, #tpu.memory_space<vmem>>, %arg9: memref<1x256x256xbf16, #tpu.memory_space<vmem>>, %arg10: memref<1x256x512xbf16, #tpu.memory_space<vmem>>, %arg11: memref<1x512x256xbf16, #tpu.memory_space<vmem>>, %arg12: memref<1x1x256xf32, #tpu.memory_space<vmem>>, %arg13: memref<1x1x256xf32, #tpu.memory_space<vmem>>, %arg14: memref<1x256xf32, #tpu.memory_space<vmem>>, %arg15: memref<256x128xbf16, #tpu.memory_space<vmem>>, %arg16: memref<1x8x128xf32, #tpu.memory_space<vmem>>, %arg17: memref<1x1x2x8x128xbf16, #tpu.memory_space<vmem>>, %arg18: memref<1x1x2x8x128xbf16, #tpu.memory_space<vmem>>, %arg19: memref<8x256xf32, #tpu.memory_space<vmem>>, %arg20: memref<2x8x128xf32, #tpu.memory_space<vmem>>, %arg21: memref<2x16x128xf32, #tpu.memory_space<vmem>>, %arg22: memref<2x16x128xf32, #tpu.memory_space<vmem>>) attributes {dimension_semantics = [#tpu.dimension_semantics<parallel>, #tpu.dimension_semantics<arbitrary>], iteration_bounds = array<i64: 2, 2>, scalar_prefetch = 0 : i64, scratch_operands = 4 : i64, tpu.core_type = #tpu.core_type<tc>, window_params = [{transform_indices = @transform_0, window_bounds = array<i64: 1, 8, 256>}, {transform_indices = @transform_1, window_bounds = array<i64: 1, 1, 16>}, {transform_indices = @transform_2, window_bounds = array<i64: 1, 8, 128>}, {transform_indices = @transform_3, window_bounds = array<i64: 1, 8, 128>}, {transform_indices = @transform_4, window_bounds = array<i64: 1, 1, 2, 8, 128>}, {transform_indices = @transform_5, window_bounds = array<i64: 1, 1, 2, 8, 128>}, {transform_indices = @transform_6, window_bounds = array<i64: 1, 256, 768>}, {transform_indices = @transform_7, window_bounds = array<i64: 1, 256, 256>}, {transform_indices = @transform_8, window_bounds = array<i64: 1, 256, 512>}, {transform_indices = @transform_9, window_bounds = array<i64: 1, 512, 256>}, {transform_indices = @transform_10, window_bounds = array<i64: 1, 1, 256>}, {transform_indices = @transform_11, window_bounds = array<i64: 1, 1, 256>}, {pipeline_mode = #tpu.pipeline_mode<synchronous>, transform_indices = @transform_12, window_bounds = array<i64: 1, 256>}, {pipeline_mode = #tpu.pipeline_mode<synchronous>, transform_indices = @transform_13, window_bounds = array<i64: 256, 128>}, {transform_indices = @transform_14, window_bounds = array<i64: 1, 8, 128>}, {transform_indices = @transform_15, window_bounds = array<i64: 1, 1, 2, 8, 128>}, {transform_indices = @transform_16, window_bounds = array<i64: 1, 1, 2, 8, 128>}]} {
    %c0_i32 = arith.constant 0 : i32
    %0 = arith.cmpi eq, %arg1, %c0_i32 : i32
    %1 = arith.extui %0 : i1 to i32
    %c0_i32_0 = arith.constant 0 : i32
    %2 = arith.cmpi ne, %1, %c0_i32_0 : i32
    scf.if %2 {
      %c0_116 = arith.constant 0 : index
      %c0_117 = arith.constant 0 : index
      %c0_118 = arith.constant 0 : index
      %172 = vector.load %arg2[%c0_116, %c0_117, %c0_118] : memref<1x8x256xf32, #tpu.memory_space<vmem>>, vector<1x8x256xf32>
      %173 = vector.shape_cast %172 : vector<1x8x256xf32> to vector<8x256xf32>
      %c0_119 = arith.constant 0 : index
      %c0_120 = arith.constant 0 : index
      %174 = vector.load %arg19[%c0_119, %c0_120] : memref<8x256xf32, #tpu.memory_space<vmem>>, vector<8x256xf32>
      tpu.vector_store %arg19[%c0_119, %c0_120], %173 {strides = array<i32>} : memref<8x256xf32, #tpu.memory_space<vmem>>, vector<8x256xf32>,
    } else {
    }
    %c0 = arith.constant 0 : index
    %c0_1 = arith.constant 0 : index
    %3 = vector.load %arg19[%c0, %c0_1] : memref<8x256xf32, #tpu.memory_space<vmem>>, vector<8x256xf32>
    %c0_2 = arith.constant 0 : index
    %c0_3 = arith.constant 0 : index
    %c0_4 = arith.constant 0 : index
    %4 = vector.load %arg12[%c0_2, %c0_3, %c0_4] : memref<1x1x256xf32, #tpu.memory_space<vmem>>, vector<1x1x256xf32>
    %5 = vector.shape_cast %4 : vector<1x1x256xf32> to vector<1x256xf32>
    %6 = arith.mulf %3, %3 : vector<8x256xf32>
    %cst = arith.constant dense<0.000000e+00> : vector<8xf32>
    %7 = vector.multi_reduction <add>, %6, %cst [1] : vector<8x256xf32> to vector<8xf32>
    %8 = vector.shape_cast %7 : vector<8xf32> to vector<8x1xf32>
    %cst_5 = arith.constant 2.560000e+02 : f32
    %9 = vector.broadcast %cst_5 : f32 to vector<8x1xf32>
    %10 = arith.divf %8, %9 : vector<8x1xf32>
    %cst_6 = arith.constant 9.99999974E-6 : f32
    %11 = vector.broadcast %cst_6 : f32 to vector<8x1xf32>
    %12 = arith.addf %10, %11 : vector<8x1xf32>
    %13 = math.rsqrt %12 : vector<8x1xf32>
    %14 = vector.broadcast %13 : vector<8x1xf32> to vector<8x256xf32>
    %15 = arith.mulf %3, %14 : vector<8x256xf32>
    %16 = vector.broadcast %5 : vector<1x256xf32> to vector<8x256xf32>
    %17 = arith.mulf %15, %16 : vector<8x256xf32>
    %c0_7 = arith.constant 0 : index
    %c0_8 = arith.constant 0 : index
    %c0_9 = arith.constant 0 : index
    %18 = vector.load %arg8[%c0_7, %c0_8, %c0_9] : memref<1x256x768xbf16, #tpu.memory_space<vmem>>, vector<1x256x768xbf16>
    %19 = vector.shape_cast %18 : vector<1x256x768xbf16> to vector<256x768xbf16>
    %20 = arith.truncf %17 : vector<8x256xf32> to vector<8x256xbf16>
    %cst_10 = arith.constant dense<0.000000e+00> : vector<8x768xf32>
    %21 = tpu.matmul %20, %19, %cst_10 {dimension_numbers = #tpu.dot_dimension_numbers<[1], [0], [0], [1], [0, 0, 1, 1], [], []>} : vector<8x256xbf16>, vector<256x768xbf16>, vector<8x768xf32> -> vector<8x768xf32>
    %c0_11 = arith.constant 0 : index
    %c0_12 = arith.constant 0 : index
    %c0_13 = arith.constant 0 : index
    %22 = vector.load %arg4[%c0_11, %c0_12, %c0_13] : memref<1x8x128xf32, #tpu.memory_space<vmem>>, vector<1x8x128xf32>
    %23 = vector.shape_cast %22 : vector<1x8x128xf32> to vector<8x128xf32>
    %24 = tpu.iota {dimensions = array<i32: 1>} : vector<8x128xi32>
    %c64_i32 = arith.constant 64 : i32
    %25 = vector.broadcast %c64_i32 : i32 to vector<8x128xi32>
    %26 = arith.cmpi slt, %24, %25 : vector<8x128xi32>
    %cst_14 = arith.constant -1.000000e+00 : f32
    %cst_15 = arith.constant 1.000000e+00 : f32
    %27 = vector.broadcast %cst_14 : f32 to vector<8x128xf32>
    %28 = vector.broadcast %cst_15 : f32 to vector<8x128xf32>
    %29 = arith.select %26, %27, %28 : vector<8x128xi1>, vector<8x128xf32>
    %c0_16 = arith.constant 0 : index
    %c0_17 = arith.constant 0 : index
    %c0_18 = arith.constant 0 : index
    %30 = vector.load %arg5[%c0_16, %c0_17, %c0_18] : memref<1x8x128xf32, #tpu.memory_space<vmem>>, vector<1x8x128xf32>
    %31 = vector.shape_cast %30 : vector<1x8x128xf32> to vector<8x128xf32>
    %32 = arith.mulf %29, %31 : vector<8x128xf32>
    %33 = vector.extract_strided_slice %21 {offsets = [0, 0], sizes = [8, 128], strides = [1, 1]} : vector<8x768xf32> to vector<8x128xf32>
    %34 = arith.mulf %33, %23 : vector<8x128xf32>
    %c64_i32_19 = arith.constant 64 : i32
    %35 = tpu.dynamic_rotate %33 by %c64_i32_19 dim 1 : vector<8x128xf32>, i32 -> vector<8x128xf32>
    %36 = arith.mulf %35, %32 : vector<8x128xf32>
    %37 = arith.addf %34, %36 : vector<8x128xf32>
    %38 = vector.extract_strided_slice %21 {offsets = [0, 256], sizes = [8, 128], strides = [1, 1]} : vector<8x768xf32> to vector<8x128xf32>
    %39 = arith.mulf %38, %23 : vector<8x128xf32>
    %c64_i32_20 = arith.constant 64 : i32
    %40 = tpu.dynamic_rotate %38 by %c64_i32_20 dim 1 : vector<8x128xf32>, i32 -> vector<8x128xf32>
    %41 = arith.mulf %40, %32 : vector<8x128xf32>
    %42 = arith.addf %39, %41 : vector<8x128xf32>
    %43 = vector.extract_strided_slice %21 {offsets = [0, 512], sizes = [8, 128], strides = [1, 1]} : vector<8x768xf32> to vector<8x128xf32>
    %c0_21 = arith.constant 0 : index
    %c0_22 = arith.constant 0 : index
    %c0_23 = arith.constant 0 : index
    %44 = vector.load %arg20[%c0_21, %c0_22, %c0_23] : memref<2x8x128xf32, #tpu.memory_space<vmem>>, vector<1x8x128xf32>
    %45 = vector.shape_cast %44 : vector<1x8x128xf32> to vector<8x128xf32>
    %46 = vector.shape_cast %37 : vector<8x128xf32> to vector<1x8x128xf32>
    tpu.vector_store %arg20[%c0_21, %c0_22, %c0_23], %46 {strides = array<i32>} : memref<2x8x128xf32, #tpu.memory_space<vmem>>, vector<1x8x128xf32>,
    %47 = arith.truncf %42 : vector<8x128xf32> to vector<8x128xbf16>
    %c0_24 = arith.constant 0 : index
    %c0_25 = arith.constant 0 : index
    %c0_26 = arith.constant 0 : index
    %c0_27 = arith.constant 0 : index
    %c0_28 = arith.constant 0 : index
    %48 = vector.load %arg17[%c0_24, %c0_25, %c0_26, %c0_27, %c0_28] : memref<1x1x2x8x128xbf16, #tpu.memory_space<vmem>>, vector<1x1x1x8x128xbf16>
    %49 = vector.shape_cast %48 : vector<1x1x1x8x128xbf16> to vector<8x128xbf16>
    %50 = vector.shape_cast %47 : vector<8x128xbf16> to vector<1x1x1x8x128xbf16>
    tpu.vector_store %arg17[%c0_24, %c0_25, %c0_26, %c0_27, %c0_28], %50 {strides = array<i32>} : memref<1x1x2x8x128xbf16, #tpu.memory_space<vmem>>, vector<1x1x1x8x128xbf16>,
    %51 = arith.truncf %43 : vector<8x128xf32> to vector<8x128xbf16>
    %c0_29 = arith.constant 0 : index
    %c0_30 = arith.constant 0 : index
    %c0_31 = arith.constant 0 : index
    %c0_32 = arith.constant 0 : index
    %c0_33 = arith.constant 0 : index
    %52 = vector.load %arg18[%c0_29, %c0_30, %c0_31, %c0_32, %c0_33] : memref<1x1x2x8x128xbf16, #tpu.memory_space<vmem>>, vector<1x1x1x8x128xbf16>
    %53 = vector.shape_cast %52 : vector<1x1x1x8x128xbf16> to vector<8x128xbf16>
    %54 = vector.shape_cast %51 : vector<8x128xbf16> to vector<1x1x1x8x128xbf16>
    tpu.vector_store %arg18[%c0_29, %c0_30, %c0_31, %c0_32, %c0_33], %54 {strides = array<i32>} : memref<1x1x2x8x128xbf16, #tpu.memory_space<vmem>>, vector<1x1x1x8x128xbf16>,
    %c0_34 = arith.constant 0 : index
    %c8 = arith.constant 8 : index
    %c0_35 = arith.constant 0 : index
    %55 = vector.load %arg21[%c0_34, %c8, %c0_35] : memref<2x16x128xf32, #tpu.memory_space<vmem>>, vector<1x8x128xf32>
    %56 = vector.shape_cast %55 : vector<1x8x128xf32> to vector<8x128xf32>
    %57 = vector.shape_cast %42 : vector<8x128xf32> to vector<1x8x128xf32>
    tpu.vector_store %arg21[%c0_34, %c8, %c0_35], %57 {strides = array<i32>} : memref<2x16x128xf32, #tpu.memory_space<vmem>>, vector<1x8x128xf32>,
    %c0_36 = arith.constant 0 : index
    %c8_37 = arith.constant 8 : index
    %c0_38 = arith.constant 0 : index
    %58 = vector.load %arg22[%c0_36, %c8_37, %c0_38] : memref<2x16x128xf32, #tpu.memory_space<vmem>>, vector<1x8x128xf32>
    %59 = vector.shape_cast %58 : vector<1x8x128xf32> to vector<8x128xf32>
    %60 = vector.shape_cast %43 : vector<8x128xf32> to vector<1x8x128xf32>
    tpu.vector_store %arg22[%c0_36, %c8_37, %c0_38], %60 {strides = array<i32>} : memref<2x16x128xf32, #tpu.memory_space<vmem>>, vector<1x8x128xf32>,
    %61 = vector.extract_strided_slice %21 {offsets = [0, 128], sizes = [8, 128], strides = [1, 1]} : vector<8x768xf32> to vector<8x128xf32>
    %62 = arith.mulf %61, %23 : vector<8x128xf32>
    %c64_i32_39 = arith.constant 64 : i32
    %63 = tpu.dynamic_rotate %61 by %c64_i32_39 dim 1 : vector<8x128xf32>, i32 -> vector<8x128xf32>
    %64 = arith.mulf %63, %32 : vector<8x128xf32>
    %65 = arith.addf %62, %64 : vector<8x128xf32>
    %66 = vector.extract_strided_slice %21 {offsets = [0, 384], sizes = [8, 128], strides = [1, 1]} : vector<8x768xf32> to vector<8x128xf32>
    %67 = arith.mulf %66, %23 : vector<8x128xf32>
    %c64_i32_40 = arith.constant 64 : i32
    %68 = tpu.dynamic_rotate %66 by %c64_i32_40 dim 1 : vector<8x128xf32>, i32 -> vector<8x128xf32>
    %69 = arith.mulf %68, %32 : vector<8x128xf32>
    %70 = arith.addf %67, %69 : vector<8x128xf32>
    %71 = vector.extract_strided_slice %21 {offsets = [0, 640], sizes = [8, 128], strides = [1, 1]} : vector<8x768xf32> to vector<8x128xf32>
    %c1 = arith.constant 1 : index
    %c0_41 = arith.constant 0 : index
    %c0_42 = arith.constant 0 : index
    %72 = vector.load %arg20[%c1, %c0_41, %c0_42] : memref<2x8x128xf32, #tpu.memory_space<vmem>>, vector<1x8x128xf32>
    %73 = vector.shape_cast %72 : vector<1x8x128xf32> to vector<8x128xf32>
    %74 = vector.shape_cast %65 : vector<8x128xf32> to vector<1x8x128xf32>
    tpu.vector_store %arg20[%c1, %c0_41, %c0_42], %74 {strides = array<i32>} : memref<2x8x128xf32, #tpu.memory_space<vmem>>, vector<1x8x128xf32>,
    %75 = arith.truncf %70 : vector<8x128xf32> to vector<8x128xbf16>
    %c0_43 = arith.constant 0 : index
    %c0_44 = arith.constant 0 : index
    %c1_45 = arith.constant 1 : index
    %c0_46 = arith.constant 0 : index
    %c0_47 = arith.constant 0 : index
    %76 = vector.load %arg17[%c0_43, %c0_44, %c1_45, %c0_46, %c0_47] : memref<1x1x2x8x128xbf16, #tpu.memory_space<vmem>>, vector<1x1x1x8x128xbf16>
    %77 = vector.shape_cast %76 : vector<1x1x1x8x128xbf16> to vector<8x128xbf16>
    %78 = vector.shape_cast %75 : vector<8x128xbf16> to vector<1x1x1x8x128xbf16>
    tpu.vector_store %arg17[%c0_43, %c0_44, %c1_45, %c0_46, %c0_47], %78 {strides = array<i32>} : memref<1x1x2x8x128xbf16, #tpu.memory_space<vmem>>, vector<1x1x1x8x128xbf16>,
    %79 = arith.truncf %71 : vector<8x128xf32> to vector<8x128xbf16>
    %c0_48 = arith.constant 0 : index
    %c0_49 = arith.constant 0 : index
    %c1_50 = arith.constant 1 : index
    %c0_51 = arith.constant 0 : index
    %c0_52 = arith.constant 0 : index
    %80 = vector.load %arg18[%c0_48, %c0_49, %c1_50, %c0_51, %c0_52] : memref<1x1x2x8x128xbf16, #tpu.memory_space<vmem>>, vector<1x1x1x8x128xbf16>
    %81 = vector.shape_cast %80 : vector<1x1x1x8x128xbf16> to vector<8x128xbf16>
    %82 = vector.shape_cast %79 : vector<8x128xbf16> to vector<1x1x1x8x128xbf16>
    tpu.vector_store %arg18[%c0_48, %c0_49, %c1_50, %c0_51, %c0_52], %82 {strides = array<i32>} : memref<1x1x2x8x128xbf16, #tpu.memory_space<vmem>>, vector<1x1x1x8x128xbf16>,
    %c1_53 = arith.constant 1 : index
    %c8_54 = arith.constant 8 : index
    %c0_55 = arith.constant 0 : index
    %83 = vector.load %arg21[%c1_53, %c8_54, %c0_55] : memref<2x16x128xf32, #tpu.memory_space<vmem>>, vector<1x8x128xf32>
    %84 = vector.shape_cast %83 : vector<1x8x128xf32> to vector<8x128xf32>
    %85 = vector.shape_cast %70 : vector<8x128xf32> to vector<1x8x128xf32>
    tpu.vector_store %arg21[%c1_53, %c8_54, %c0_55], %85 {strides = array<i32>} : memref<2x16x128xf32, #tpu.memory_space<vmem>>, vector<1x8x128xf32>,
    %c1_56 = arith.constant 1 : index
    %c8_57 = arith.constant 8 : index
    %c0_58 = arith.constant 0 : index
    %86 = vector.load %arg22[%c1_56, %c8_57, %c0_58] : memref<2x16x128xf32, #tpu.memory_space<vmem>>, vector<1x8x128xf32>
    %87 = vector.shape_cast %86 : vector<1x8x128xf32> to vector<8x128xf32>
    %88 = vector.shape_cast %71 : vector<8x128xf32> to vector<1x8x128xf32>
    tpu.vector_store %arg22[%c1_56, %c8_57, %c0_58], %88 {strides = array<i32>} : memref<2x16x128xf32, #tpu.memory_space<vmem>>, vector<1x8x128xf32>,
    %c0_59 = arith.constant 0 : index
    %c0_60 = arith.constant 0 : index
    %c0_61 = arith.constant 0 : index
    %c0_62 = arith.constant 0 : index
    %c0_63 = arith.constant 0 : index
    %89 = vector.load %arg6[%c0_59, %c0_60, %c0_61, %c0_62, %c0_63] : memref<1x1x2x8x128xbf16, #tpu.memory_space<vmem>>, vector<1x1x2x8x128xbf16>
    %90 = vector.shape_cast %89 : vector<1x1x2x8x128xbf16> to vector<2x8x128xbf16>
    %91 = arith.extf %90 : vector<2x8x128xbf16> to vector<2x8x128xf32>
    %c0_64 = arith.constant 0 : index
    %c0_65 = arith.constant 0 : index
    %c0_66 = arith.constant 0 : index
    %92 = vector.load %arg21[%c0_64, %c0_65, %c0_66] : memref<2x16x128xf32, #tpu.memory_space<vmem>>, vector<2x8x128xf32>
    tpu.vector_store %arg21[%c0_64, %c0_65, %c0_66], %91 {strides = array<i32>} : memref<2x16x128xf32, #tpu.memory_space<vmem>>, vector<2x8x128xf32>,
    %c0_67 = arith.constant 0 : index
    %c0_68 = arith.constant 0 : index
    %c0_69 = arith.constant 0 : index
    %c0_70 = arith.constant 0 : index
    %c0_71 = arith.constant 0 : index
    %93 = vector.load %arg7[%c0_67, %c0_68, %c0_69, %c0_70, %c0_71] : memref<1x1x2x8x128xbf16, #tpu.memory_space<vmem>>, vector<1x1x2x8x128xbf16>
    %94 = vector.shape_cast %93 : vector<1x1x2x8x128xbf16> to vector<2x8x128xbf16>
    %95 = arith.extf %94 : vector<2x8x128xbf16> to vector<2x8x128xf32>
    %c0_72 = arith.constant 0 : index
    %c0_73 = arith.constant 0 : index
    %c0_74 = arith.constant 0 : index
    %96 = vector.load %arg22[%c0_72, %c0_73, %c0_74] : memref<2x16x128xf32, #tpu.memory_space<vmem>>, vector<2x8x128xf32>
    tpu.vector_store %arg22[%c0_72, %c0_73, %c0_74], %95 {strides = array<i32>} : memref<2x16x128xf32, #tpu.memory_space<vmem>>, vector<2x8x128xf32>,
    %97 = tpu.iota {dimensions = array<i32: 0>} : vector<8x16xi32>
    %c8_i32 = arith.constant 8 : i32
    %98 = vector.broadcast %c8_i32 : i32 to vector<8x16xi32>
    %99 = arith.addi %97, %98 : vector<8x16xi32>
    %100 = tpu.iota {dimensions = array<i32: 1>} : vector<8x16xi32>
    %101 = arith.cmpi sle, %100, %99 : vector<8x16xi32>
    %c0_75 = arith.constant 0 : index
    %c0_76 = arith.constant 0 : index
    %c0_77 = arith.constant 0 : index
    %102 = vector.load %arg3[%c0_75, %c0_76, %c0_77] : memref<1x1x16xf32, #tpu.memory_space<vmem>>, vector<1x1x16xf32>
    %103 = vector.shape_cast %102 : vector<1x1x16xf32> to vector<1x16xf32>
    %cst_78 = arith.constant 0.000000e+00 : f32
    %104 = vector.broadcast %cst_78 : f32 to vector<1x16xf32>
    %105 = arith.cmpf ogt, %103, %104 : vector<1x16xf32>
    %106 = vector.broadcast %105 : vector<1x16xi1> to vector<8x16xi1>
    %107 = arith.andi %101, %106 : vector<8x16xi1>
    %cst_79 = arith.constant 0.000000e+00 : f32
    %cst_80 = arith.constant -5.000000e+01 : f32
    %108 = vector.broadcast %cst_79 : f32 to vector<8x16xf32>
    %109 = vector.broadcast %cst_80 : f32 to vector<8x16xf32>
    %110 = arith.select %107, %108, %109 : vector<8x16xi1>, vector<8x16xf32>
    %c0_81 = arith.constant 0 : index
    %c0_82 = arith.constant 0 : index
    %c0_83 = arith.constant 0 : index
    %111 = vector.load %arg20[%c0_81, %c0_82, %c0_83] : memref<2x8x128xf32, #tpu.memory_space<vmem>>, vector<2x8x128xf32>
    %112 = arith.truncf %111 : vector<2x8x128xf32> to vector<2x8x128xbf16>
    %c0_84 = arith.constant 0 : index
    %c0_85 = arith.constant 0 : index
    %c0_86 = arith.constant 0 : index
    %113 = vector.load %arg21[%c0_84, %c0_85, %c0_86] : memref<2x16x128xf32, #tpu.memory_space<vmem>>, vector<2x16x128xf32>
    %114 = arith.truncf %113 : vector<2x16x128xf32> to vector<2x16x128xbf16>
    %c0_87 = arith.constant 0 : index
    %c0_88 = arith.constant 0 : index
    %c0_89 = arith.constant 0 : index
    %115 = vector.load %arg22[%c0_87, %c0_88, %c0_89] : memref<2x16x128xf32, #tpu.memory_space<vmem>>, vector<2x16x128xf32>
    %116 = arith.truncf %115 : vector<2x16x128xf32> to vector<2x16x128xbf16>
    "tpu.trace_start"() <{level = 10 : i32, message = "hsd,htd->hst"}> : () -> ()
    %cst_90 = arith.constant dense<0.000000e+00> : vector<2x8x16xf32>
    %117 = tpu.matmul %112, %114, %cst_90 {dimension_numbers = #tpu.dot_dimension_numbers<[2], [2], [1], [1], [0, 0, 0, 1, 1, 1], [0], [0]>} : vector<2x8x128xbf16>, vector<2x16x128xbf16>, vector<2x8x16xf32> -> vector<2x8x16xf32>
    "tpu.trace_stop"() : () -> ()
    %118 = vector.shape_cast %110 : vector<8x16xf32> to vector<1x8x16xf32>
    %119 = vector.broadcast %118 : vector<1x8x16xf32> to vector<2x8x16xf32>
    %120 = arith.addf %117, %119 : vector<2x8x16xf32>
    %cst_91 = arith.constant dense<0xFF800000> : vector<2x8xf32>
    %121 = vector.multi_reduction <maximumf>, %120, %cst_91 [2] : vector<2x8x16xf32> to vector<2x8xf32>
    %122 = vector.shape_cast %121 : vector<2x8xf32> to vector<2x8x1xf32>
    %123 = vector.broadcast %122 : vector<2x8x1xf32> to vector<2x8x16xf32>
    %124 = arith.subf %120, %123 : vector<2x8x16xf32>
    %125 = math.exp %124 : vector<2x8x16xf32>
    %cst_92 = arith.constant dense<0.000000e+00> : vector<2x8xf32>
    %126 = vector.multi_reduction <add>, %125, %cst_92 [2] : vector<2x8x16xf32> to vector<2x8xf32>
    %127 = vector.shape_cast %126 : vector<2x8xf32> to vector<2x8x1xf32>
    %128 = tpu.reciprocal %127 {approx = true} : vector<2x8x1xf32> -> vector<2x8x1xf32>
    %129 = vector.broadcast %128 : vector<2x8x1xf32> to vector<2x8x16xf32>
    %130 = arith.mulf %125, %129 : vector<2x8x16xf32>
    %131 = arith.truncf %130 : vector<2x8x16xf32> to vector<2x8x16xbf16>
    "tpu.trace_start"() <{level = 10 : i32, message = "hst,htd->hsd"}> : () -> ()
    %cst_93 = arith.constant dense<0.000000e+00> : vector<2x8x128xf32>
    %132 = tpu.matmul %131, %116, %cst_93 {dimension_numbers = #tpu.dot_dimension_numbers<[2], [1], [1], [2], [0, 0, 0, 1, 1, 2], [0], [0]>} : vector<2x8x16xbf16>, vector<2x16x128xbf16>, vector<2x8x128xf32> -> vector<2x8x128xf32>
    "tpu.trace_stop"() : () -> ()
    %133 = vector.extract_strided_slice %132 {offsets = [0, 0, 0], sizes = [1, 8, 128], strides = [1, 1, 1]} : vector<2x8x128xf32> to vector<1x8x128xf32>
    %134 = vector.shape_cast %133 : vector<1x8x128xf32> to vector<8x128xf32>
    %135 = vector.extract_strided_slice %132 {offsets = [1, 0, 0], sizes = [1, 8, 128], strides = [1, 1, 1]} : vector<2x8x128xf32> to vector<1x8x128xf32>
    %136 = vector.shape_cast %135 : vector<1x8x128xf32> to vector<8x128xf32>
    %137 = tpu.concatenate %134, %136 in 1 : vector<8x128xf32>, vector<8x128xf32> -> vector<8x256xf32>
    %c0_94 = arith.constant 0 : index
    %c0_95 = arith.constant 0 : index
    %c0_96 = arith.constant 0 : index
    %138 = vector.load %arg9[%c0_94, %c0_95, %c0_96] : memref<1x256x256xbf16, #tpu.memory_space<vmem>>, vector<1x256x256xbf16>
    %139 = vector.shape_cast %138 : vector<1x256x256xbf16> to vector<256x256xbf16>
    %140 = arith.truncf %137 : vector<8x256xf32> to vector<8x256xbf16>
    %cst_97 = arith.constant dense<0.000000e+00> : vector<8x256xf32>
    %141 = tpu.matmul %140, %139, %cst_97 {dimension_numbers = #tpu.dot_dimension_numbers<[1], [0], [0], [1], [0, 0, 1, 1], [], []>} : vector<8x256xbf16>, vector<256x256xbf16>, vector<8x256xf32> -> vector<8x256xf32>
    %142 = arith.addf %3, %141 : vector<8x256xf32>
    %c0_98 = arith.constant 0 : index
    %c0_99 = arith.constant 0 : index
    %c0_100 = arith.constant 0 : index
    %143 = vector.load %arg13[%c0_98, %c0_99, %c0_100] : memref<1x1x256xf32, #tpu.memory_space<vmem>>, vector<1x1x256xf32>
    %144 = vector.shape_cast %143 : vector<1x1x256xf32> to vector<1x256xf32>
    %145 = arith.mulf %142, %142 : vector<8x256xf32>
    %cst_101 = arith.constant dense<0.000000e+00> : vector<8xf32>
    %146 = vector.multi_reduction <add>, %145, %cst_101 [1] : vector<8x256xf32> to vector<8xf32>
    %147 = vector.shape_cast %146 : vector<8xf32> to vector<8x1xf32>
    %cst_102 = arith.constant 2.560000e+02 : f32
    %148 = vector.broadcast %cst_102 : f32 to vector<8x1xf32>
    %149 = arith.divf %147, %148 : vector<8x1xf32>
    %cst_103 = arith.constant 9.99999974E-6 : f32
    %150 = vector.broadcast %cst_103 : f32 to vector<8x1xf32>
    %151 = arith.addf %149, %150 : vector<8x1xf32>
    %152 = math.rsqrt %151 : vector<8x1xf32>
    %153 = vector.broadcast %152 : vector<8x1xf32> to vector<8x256xf32>
    %154 = arith.mulf %142, %153 : vector<8x256xf32>
    %155 = vector.broadcast %144 : vector<1x256xf32> to vector<8x256xf32>
    %156 = arith.mulf %154, %155 : vector<8x256xf32>
    %c0_104 = arith.constant 0 : index
    %c0_105 = arith.constant 0 : index
    %c0_106 = arith.constant 0 : index
    %157 = vector.load %arg10[%c0_104, %c0_105, %c0_106] : memref<1x256x512xbf16, #tpu.memory_space<vmem>>, vector<1x256x512xbf16>
    %158 = vector.shape_cast %157 : vector<1x256x512xbf16> to vector<256x512xbf16>
    %159 = arith.truncf %156 : vector<8x256xf32> to vector<8x256xbf16>
    %cst_107 = arith.constant dense<0.000000e+00> : vector<8x512xf32>
    %160 = tpu.matmul %159, %158, %cst_107 {dimension_numbers = #tpu.dot_dimension_numbers<[1], [0], [0], [1], [0, 0, 1, 1], [], []>} : vector<8x256xbf16>, vector<256x512xbf16>, vector<8x512xf32> -> vector<8x512xf32>
    %cst_108 = arith.constant 0.000000e+00 : f32
    %161 = vector.broadcast %cst_108 : f32 to vector<8x512xf32>
    %162 = arith.maximumf %160, %161 : vector<8x512xf32>
    %c0_109 = arith.constant 0 : index
    %c0_110 = arith.constant 0 : index
    %c0_111 = arith.constant 0 : index
    %163 = vector.load %arg11[%c0_109, %c0_110, %c0_111] : memref<1x512x256xbf16, #tpu.memory_space<vmem>>, vector<1x512x256xbf16>
    %164 = vector.shape_cast %163 : vector<1x512x256xbf16> to vector<512x256xbf16>
    %165 = arith.truncf %162 : vector<8x512xf32> to vector<8x512xbf16>
    %cst_112 = arith.constant dense<0.000000e+00> : vector<8x256xf32>
    %166 = tpu.matmul %165, %164, %cst_112 {dimension_numbers = #tpu.dot_dimension_numbers<[1], [0], [0], [1], [0, 0, 1, 1], [], []>} : vector<8x512xbf16>, vector<512x256xbf16>, vector<8x256xf32> -> vector<8x256xf32>
    %167 = arith.addf %142, %166 : vector<8x256xf32>
    %c0_113 = arith.constant 0 : index
    %c0_114 = arith.constant 0 : index
    %168 = vector.load %arg19[%c0_113, %c0_114] : memref<8x256xf32, #tpu.memory_space<vmem>>, vector<8x256xf32>
    tpu.vector_store %arg19[%c0_113, %c0_114], %167 {strides = array<i32>} : memref<8x256xf32, #tpu.memory_space<vmem>>, vector<8x256xf32>,
    %c1_i32 = arith.constant 1 : i32
    %169 = arith.cmpi eq, %arg1, %c1_i32 : i32
    %170 = arith.extui %169 : i1 to i32
    %c0_i32_115 = arith.constant 0 : i32
    %171 = arith.cmpi ne, %170, %c0_i32_115 : i32
    scf.if %171 {
      %c0_116 = arith.constant 0 : index
      %c0_117 = arith.constant 0 : index
      %172 = vector.load %arg14[%c0_116, %c0_117] : memref<1x256xf32, #tpu.memory_space<vmem>>, vector<1x256xf32>
      %173 = arith.mulf %167, %167 : vector<8x256xf32>
      %cst_118 = arith.constant dense<0.000000e+00> : vector<8xf32>
      %174 = vector.multi_reduction <add>, %173, %cst_118 [1] : vector<8x256xf32> to vector<8xf32>
      %175 = vector.shape_cast %174 : vector<8xf32> to vector<8x1xf32>
      %cst_119 = arith.constant 2.560000e+02 : f32
      %176 = vector.broadcast %cst_119 : f32 to vector<8x1xf32>
      %177 = arith.divf %175, %176 : vector<8x1xf32>
      %cst_120 = arith.constant 9.99999974E-6 : f32
      %178 = vector.broadcast %cst_120 : f32 to vector<8x1xf32>
      %179 = arith.addf %177, %178 : vector<8x1xf32>
      %180 = math.rsqrt %179 : vector<8x1xf32>
      %181 = vector.broadcast %180 : vector<8x1xf32> to vector<8x256xf32>
      %182 = arith.mulf %167, %181 : vector<8x256xf32>
      %183 = vector.broadcast %172 : vector<1x256xf32> to vector<8x256xf32>
      %184 = arith.mulf %182, %183 : vector<8x256xf32>
      %c0_121 = arith.constant 0 : index
      %c0_122 = arith.constant 0 : index
      %185 = vector.load %arg15[%c0_121, %c0_122] : memref<256x128xbf16, #tpu.memory_space<vmem>>, vector<256x128xbf16>
      %186 = arith.truncf %184 : vector<8x256xf32> to vector<8x256xbf16>
      %cst_123 = arith.constant dense<0.000000e+00> : vector<8x128xf32>
      %187 = tpu.matmul %186, %185, %cst_123 {dimension_numbers = #tpu.dot_dimension_numbers<[1], [0], [0], [1], [0, 0, 1, 1], [], []>} : vector<8x256xbf16>, vector<256x128xbf16>, vector<8x128xf32> -> vector<8x128xf32>
      %c0_124 = arith.constant 0 : index
      %c0_125 = arith.constant 0 : index
      %c0_126 = arith.constant 0 : index
      %188 = vector.load %arg16[%c0_124, %c0_125, %c0_126] : memref<1x8x128xf32, #tpu.memory_space<vmem>>, vector<1x8x128xf32>
      %189 = vector.shape_cast %188 : vector<1x8x128xf32> to vector<8x128xf32>
      %190 = vector.shape_cast %187 : vector<8x128xf32> to vector<1x8x128xf32>
      tpu.vector_store %arg16[%c0_124, %c0_125, %c0_126], %190 {strides = array<i32>} : memref<1x8x128xf32, #tpu.memory_space<vmem>>, vector<1x8x128xf32>,
    } else {
    }
    return
  }
  func.func @transform_0(%arg0: i32, %arg1: i32) -> (i32, i32, i32) {
    %c0_i32 = arith.constant 0 : i32
    %c0_i32_0 = arith.constant 0 : i32
    %c0_i32_1 = arith.constant 0 : i32
    return %arg0, %c0_i32, %c0_i32_0 : i32, i32, i32
  }
  func.func @transform_1(%arg0: i32, %arg1: i32) -> (i32, i32, i32) {
    %c0_i32 = arith.constant 0 : i32
    %c0_i32_0 = arith.constant 0 : i32
    %c0_i32_1 = arith.constant 0 : i32
    return %arg0, %c0_i32, %c0_i32_0 : i32, i32, i32
  }
  func.func @transform_2(%arg0: i32, %arg1: i32) -> (i32, i32, i32) {
    %c0_i32 = arith.constant 0 : i32
    %c0_i32_0 = arith.constant 0 : i32
    %c0_i32_1 = arith.constant 0 : i32
    return %arg0, %c0_i32, %c0_i32_0 : i32, i32, i32
  }
  func.func @transform_3(%arg0: i32, %arg1: i32) -> (i32, i32, i32) {
    %c0_i32 = arith.constant 0 : i32
    %c0_i32_0 = arith.constant 0 : i32
    %c0_i32_1 = arith.constant 0 : i32
    return %arg0, %c0_i32, %c0_i32_0 : i32, i32, i32
  }
  func.func @transform_4(%arg0: i32, %arg1: i32) -> (i32, i32, i32, i32, i32) {
    %c0_i32 = arith.constant 0 : i32
    %c0_i32_0 = arith.constant 0 : i32
    %c0_i32_1 = arith.constant 0 : i32
    %c0_i32_2 = arith.constant 0 : i32
    return %arg1, %arg0, %c0_i32, %c0_i32_0, %c0_i32_1 : i32, i32, i32, i32, i32
  }
  func.func @transform_5(%arg0: i32, %arg1: i32) -> (i32, i32, i32, i32, i32) {
    %c0_i32 = arith.constant 0 : i32
    %c0_i32_0 = arith.constant 0 : i32
    %c0_i32_1 = arith.constant 0 : i32
    %c0_i32_2 = arith.constant 0 : i32
    return %arg1, %arg0, %c0_i32, %c0_i32_0, %c0_i32_1 : i32, i32, i32, i32, i32
  }
  func.func @transform_6(%arg0: i32, %arg1: i32) -> (i32, i32, i32) {
    %c0_i32 = arith.constant 0 : i32
    %c0_i32_0 = arith.constant 0 : i32
    %c0_i32_1 = arith.constant 0 : i32
    return %arg1, %c0_i32, %c0_i32_0 : i32, i32, i32
  }
  func.func @transform_7(%arg0: i32, %arg1: i32) -> (i32, i32, i32) {
    %c0_i32 = arith.constant 0 : i32
    %c0_i32_0 = arith.constant 0 : i32
    %c0_i32_1 = arith.constant 0 : i32
    return %arg1, %c0_i32, %c0_i32_0 : i32, i32, i32
  }
  func.func @transform_8(%arg0: i32, %arg1: i32) -> (i32, i32, i32) {
    %c0_i32 = arith.constant 0 : i32
    %c0_i32_0 = arith.constant 0 : i32
    %c0_i32_1 = arith.constant 0 : i32
    return %arg1, %c0_i32, %c0_i32_0 : i32, i32, i32
  }
  func.func @transform_9(%arg0: i32, %arg1: i32) -> (i32, i32, i32) {
    %c0_i32 = arith.constant 0 : i32
    %c0_i32_0 = arith.constant 0 : i32
    %c0_i32_1 = arith.constant 0 : i32
    return %arg1, %c0_i32, %c0_i32_0 : i32, i32, i32
  }
  func.func @transform_10(%arg0: i32, %arg1: i32) -> (i32, i32, i32) {
    %c0_i32 = arith.constant 0 : i32
    %c0_i32_0 = arith.constant 0 : i32
    %c0_i32_1 = arith.constant 0 : i32
    return %arg1, %c0_i32, %c0_i32_0 : i32, i32, i32
  }
  func.func @transform_11(%arg0: i32, %arg1: i32) -> (i32, i32, i32) {
    %c0_i32 = arith.constant 0 : i32
    %c0_i32_0 = arith.constant 0 : i32
    %c0_i32_1 = arith.constant 0 : i32
    return %arg1, %c0_i32, %c0_i32_0 : i32, i32, i32
  }
  func.func @transform_12(%arg0: i32, %arg1: i32) -> (i32, i32) {
    %c0_i32 = arith.constant 0 : i32
    %c0_i32_0 = arith.constant 0 : i32
    %c0_i32_1 = arith.constant 0 : i32
    return %c0_i32, %c0_i32_0 : i32, i32
  }
  func.func @transform_13(%arg0: i32, %arg1: i32) -> (i32, i32) {
    %c0_i32 = arith.constant 0 : i32
    %c0_i32_0 = arith.constant 0 : i32
    %c0_i32_1 = arith.constant 0 : i32
    return %c0_i32, %c0_i32_0 : i32, i32
  }
  func.func @transform_14(%arg0: i32, %arg1: i32) -> (i32, i32, i32) {
    %c0_i32 = arith.constant 0 : i32
    %c0_i32_0 = arith.constant 0 : i32
    %c0_i32_1 = arith.constant 0 : i32
    return %arg0, %c0_i32, %c0_i32_0 : i32, i32, i32
  }
  func.func @transform_15(%arg0: i32, %arg1: i32) -> (i32, i32, i32, i32, i32) {
    %c0_i32 = arith.constant 0 : i32
    %c0_i32_0 = arith.constant 0 : i32
    %c0_i32_1 = arith.constant 0 : i32
    %c0_i32_2 = arith.constant 0 : i32
    return %arg1, %arg0, %c0_i32, %c0_i32_0, %c0_i32_1 : i32, i32, i32, i32, i32
  }
  func.func @transform_16(%arg0: i32, %arg1: i32) -> (i32, i32, i32, i32, i32) {
    %c0_i32 = arith.constant 0 : i32
    %c0_i32_0 = arith.constant 0 : i32
    %c0_i32_1 = arith.constant 0 : i32
    %c0_i32_2 = arith.constant 0 : i32
    return %arg1, %arg0, %c0_i32, %c0_i32_0, %c0_i32_1 : i32, i32, i32, i32, i32
  }
}

</mosaic_0001>

<llo_original>
// kernel: _generator_step.1
$region0: #{_generator_step.1}
  #allocation0 [shape = 'u32[]', space=smem, size = 0x4, offset = 0x4, fixed_abs, tag = 'smem constant byte address 0x4 - core index']
  #allocation1 [shape = 'u32[144,128]{1,0:T(1,128)}', space=vmem, size = 0x12000, scoped, tag = 'internal scratch']
  #allocation2 [shape = 'f32[8,256]{1,0:T(8,128)}', space=vmem, size = 0x2000, scoped, tag = 'scratch operand']
  #allocation3 [shape = 'f32[2,8,128]{2,1,0:T(8,128)}', space=vmem, size = 0x2000, scoped, tag = 'scratch operand']
  #allocation4 [shape = 'f32[2,16,128]{2,1,0:T(8,128)}', space=vmem, size = 0x4000, scoped, tag = 'scratch operand']
  #allocation5 [shape = 'f32[2,16,128]{2,1,0:T(8,128)}', space=vmem, size = 0x4000, scoped, tag = 'scratch operand']
  %s0 = inlined_call_operand.vmem [shape: f32[2,8,256], index: 0, kind: input, shape index: {}]
  %s1 = inlined_call_operand.vmem [shape: f32[2,1,16], index: 1, kind: input, shape index: {}]
  %s2 = inlined_call_operand.vmem [shape: f32[2,8,128], index: 2, kind: input, shape index: {}]
  %s3 = inlined_call_operand.vmem [shape: f32[2,8,128], index: 3, kind: input, shape index: {}]
  %s4 = inlined_call_operand.vmem [shape: bf16[2,2,2,8,128], index: 4, kind: input, shape index: {}]
  %s5 = inlined_call_operand.vmem [shape: bf16[2,2,2,8,128], index: 5, kind: input, shape index: {}]
  %s6 = inlined_call_operand.hbm [shape: bf16[2,256,768], index: 6, kind: input, shape index: {}]
  %s7 = inlined_call_operand.vmem [shape: bf16[2,256,256], index: 7, kind: input, shape index: {}]
  %s8 = inlined_call_operand.hbm [shape: bf16[2,256,512], index: 8, kind: input, shape index: {}]
  %s9 = inlined_call_operand.hbm [shape: bf16[2,512,256], index: 9, kind: input, shape index: {}]
  %s10 = inlined_call_operand.vmem [shape: f32[2,1,256], index: 10, kind: input, shape index: {}]
  %s11 = inlined_call_operand.vmem [shape: f32[2,1,256], index: 11, kind: input, shape index: {}]
  %s12 = inlined_call_operand.vmem [shape: f32[1,256], index: 12, kind: input, shape index: {}]
  %s13 = inlined_call_operand.vmem [shape: bf16[256,128], index: 13, kind: input, shape index: {}]
  %s14 = inlined_call_operand.vmem [shape: f32[2,8,128], index: 14, kind: output, shape index: {0}]
  %s15 = inlined_call_operand.vmem [shape: bf16[2,2,2,8,128], index: 15, kind: output, shape index: {1}]
  %s16 = inlined_call_operand.vmem [shape: bf16[2,2,2,8,128], index: 16, kind: output, shape index: {2}]
  %17 = xla_tuple %s14, %s15, %s16
  %s18 = sld [smem:[#allocation0]]
  $region125: #{_generator_step.1} parent=0
    _
  %s20 = ssub.s32 1, %s18
  %s21 = scalar_select 0, %s20, %s18
  $region1: #{_generator_step.1} parent=0
    #allocation6 [shape = 'u8[786432]{0}', space=vmem, size = 0xc0000, scoped, tag = 'input window, operand 6']
    #allocation7 [shape = 's32[2]{0}', space=sflag, size = 0x8, scoped, tag = 'scoped memory for _generator_step.1']
    #allocation8 [shape = 'u8[524288]{0}', space=vmem, size = 0x80000, scoped, tag = 'input window, operand 8']
    #allocation9 [shape = 's32[2]{0}', space=sflag, size = 0x8, scoped, tag = 'scoped memory for _generator_step.1']
    #allocation10 [shape = 'u8[524288]{0}', space=vmem, size = 0x80000, scoped, tag = 'input window, operand 9']
    %22 = vsyncpa [#allocation7], 0
    %s23 = scalar_lea.sflag [#allocation7], 1
    %24 = vsyncpa %s23, 0
    %25 = vsyncpa [#allocation9], 0
    %s26 = scalar_lea.sflag [#allocation9], 1
    %27 = vsyncpa %s26, 0
    loop: start=0, step=1, limit=6
    $region2: #{_generator_step.1} parent=1 // loop_pre_header
      _
    $region3: #{_generator_step.1} parent=1 // loop_header
      %s29 = sphi 0, %s33
      %p30 = scmp.ge.s32.totalorder %s29, 6
      %s36 = sphi 0, %s48
      %s37 = sphi 0, %s44
      %s38 = sphi 0, %s36
      %s39 = sphi 0, %s37
      %s40 = sphi 0, %s38
      %s41 = sphi 0, %s39
      %s51 = sphi 0, %s53
      %s54 = sphi 0, %s51
      %s55 = sphi 0, %s54
      %s71 = sphi 0, %s55
      %s77 = sphi 0, %s79
      %s80 = sphi 0, %s77
      %s81 = sphi 0, %s80
      %s97 = sphi 0, %s81
      %s103 = sphi 0, %s105
      %s106 = sphi 0, %s103
      %s107 = sphi 0, %s106
      %s123 = sphi 0, %s107
      %s129 = sphi 0, %s131
      %s132 = sphi 0, %s129
      %s133 = sphi 0, %s132
      %s149 = sphi 0, %s133
      %s157 = sphi 0, %s159
      %s160 = sphi 0, %s157
      %s161 = sphi 0, %s160
      %s177 = sphi 0, %s161
      %s185 = sphi 0, %s187
      %s188 = sphi 0, %s185
      %s189 = sphi 0, %s188
      %s205 = sphi 0, %s189
      %s211 = sphi 0, %s213
      %s214 = sphi 0, %s211
      %s215 = sphi 0, %s214
      %s231 = sphi 0, %s215
      %s237 = sphi 0, %s239
      %s240 = sphi 0, %s237
      %s241 = sphi 0, %s240
      %s257 = sphi 0, %s241
      %s263 = sphi 0, %s265
      %s266 = sphi 0, %s263
      %s267 = sphi 0, %s266
      %s283 = sphi 0, %s267
      %s289 = sphi 0, %s291
      %s292 = sphi 0, %s289
      %s293 = sphi 0, %s292
      %s309 = sphi 0, %s293
      %s315 = sphi 0, %s317
      %s318 = sphi 0, %s315
      %s319 = sphi 0, %s318
      %s335 = sphi 0, %s319
      %s341 = sphi 0, %s343
      %s344 = sphi 0, %s341
      %s345 = sphi 0, %s344
      %s361 = sphi 0, %s345
      %s365 = sphi 0, %s365
      %s367 = sphi 0, %s365
      %s368 = sphi 0, %s367
      %s382 = sphi 0, %s368
      %s386 = sphi 0, %s386
      %s388 = sphi 0, %s386
      %s389 = sphi 0, %s388
      %s403 = sphi 0, %s389
      %s409 = sphi 0, %s411
      %s412 = sphi 0, %s409
      %s413 = sphi 0, %s412
      %s429 = sphi 0, %s413
      %s437 = sphi 0, %s439
      %s440 = sphi 0, %s437
      %s441 = sphi 0, %s440
      %s457 = sphi 0, %s441
      %s465 = sphi 0, %s467
      %s468 = sphi 0, %s465
      %s469 = sphi 0, %s468
      %s485 = sphi 0, %s469
    $region4: #{_generator_step.1} parent=1 // loop_header_branch
      %32 = sbr.rel (%p30) target = $region8
    $region5: #{_generator_step.1} parent=1 // loop_body
      %s34 = ssub.s32 %s29, 1
      %s35 = ssub.s32 %s29, 2
      %s42 = sadd.s32 1, %s37
      %p43 = scmp.ge.s32.totalorder %s42, 2
      %s44 = scalar_select %p43, 0, %s42
      %s45 = sadd.s32 1, %s36
      %s46 = scalar_select %p43, %s45, %s36
      %p47 = scmp.ge.s32.totalorder %s46, 2
      %s48 = scalar_select %p47, 0, %s46
      %s49 = ssub.s32 %s36, %s48
      %p50 = scmp.eq.s32.totalorder %s49, 0
      %s52 = sadd.s32 %s51, 1
      %s53 = scalar_select %p50, %s51, %s52
      %p56 = pneg %p50
      %p57 = scmp.eq.s32.totalorder %s29, 3
      %p58 = por %p56, %p57
      %p59 = scmp.ne.s32.totalorder %s51, %s54
      %p60 = scmp.eq.s32.totalorder %s29, 0
      %p61 = por %p59, %p60
      %p62 = scmp.ne.s32.totalorder %s51, %s54
      %p63 = scmp.eq.s32.totalorder %s34, 3
      %p64 = por %p62, %p63
      %p65 = scmp.ne.s32.totalorder %s54, %s55
      %p66 = scmp.eq.s32.totalorder %s34, 0
      %p67 = por %p65, %p66
      %p68 = scmp.ne.s32.totalorder %s54, %s55
      %p69 = scmp.eq.s32.totalorder %s35, 3
      %p70 = por %p68, %p69
      %p72 = scmp.ne.s32.totalorder %s55, %s71
      %p73 = scmp.eq.s32.totalorder %s35, 0
      %p74 = por %p72, %p73
      %s75 = ssub.s32 %s36, %s48
      %p76 = scmp.eq.s32.totalorder %s75, 0
      %s78 = sadd.s32 %s77, 1
      %s79 = scalar_select %p76, %s77, %s78
      %p82 = pneg %p76
      %p83 = scmp.eq.s32.totalorder %s29, 3
      %p84 = por %p82, %p83
      %p85 = scmp.ne.s32.totalorder %s77, %s80
      %p86 = scmp.eq.s32.totalorder %s29, 0
      %p87 = por %p85, %p86
      %p88 = scmp.ne.s32.totalorder %s77, %s80
      %p89 = scmp.eq.s32.totalorder %s34, 3
      %p90 = por %p88, %p89
      %p91 = scmp.ne.s32.totalorder %s80, %s81
      %p92 = scmp.eq.s32.totalorder %s34, 0
      %p93 = por %p91, %p92
      %p94 = scmp.ne.s32.totalorder %s80, %s81
      %p95 = scmp.eq.s32.totalorder %s35, 3
      %p96 = por %p94, %p95
      %p98 = scmp.ne.s32.totalorder %s81, %s97
      %p99 = scmp.eq.s32.totalorder %s35, 0
      %p100 = por %p98, %p99
      %s101 = ssub.s32 %s36, %s48
      %p102 = scmp.eq.s32.totalorder %s101, 0
      %s104 = sadd.s32 %s103, 1
      %s105 = scalar_select %p102, %s103, %s104
      %p108 = pneg %p102
      %p109 = scmp.eq.s32.totalorder %s29, 3
      %p110 = por %p108, %p109
      %p111 = scmp.ne.s32.totalorder %s103, %s106
      %p112 = scmp.eq.s32.totalorder %s29, 0
      %p113 = por %p111, %p112
      %p114 = scmp.ne.s32.totalorder %s103, %s106
      %p115 = scmp.eq.s32.totalorder %s34, 3
      %p116 = por %p114, %p115
      %p117 = scmp.ne.s32.totalorder %s106, %s107
      %p118 = scmp.eq.s32.totalorder %s34, 0
      %p119 = por %p117, %p118
      %p120 = scmp.ne.s32.totalorder %s106, %s107
      %p121 = scmp.eq.s32.totalorder %s35, 3
      %p122 = por %p120, %p121
      %p124 = scmp.ne.s32.totalorder %s107, %s123
      %p125 = scmp.eq.s32.totalorder %s35, 0
      %p126 = por %p124, %p125
      %s127 = ssub.s32 %s36, %s48
      %p128 = scmp.eq.s32.totalorder %s127, 0
      %s130 = sadd.s32 %s129, 1
      %s131 = scalar_select %p128, %s129, %s130
      %p134 = pneg %p128
      %p135 = scmp.eq.s32.totalorder %s29, 3
      %p136 = por %p134, %p135
      %p137 = scmp.ne.s32.totalorder %s129, %s132
      %p138 = scmp.eq.s32.totalorder %s29, 0
      %p139 = por %p137, %p138
      %p140 = scmp.ne.s32.totalorder %s129, %s132
      %p141 = scmp.eq.s32.totalorder %s34, 3
      %p142 = por %p140, %p141
      %p143 = scmp.ne.s32.totalorder %s132, %s133
      %p144 = scmp.eq.s32.totalorder %s34, 0
      %p145 = por %p143, %p144
      %p146 = scmp.ne.s32.totalorder %s132, %s133
      %p147 = scmp.eq.s32.totalorder %s35, 3
      %p148 = por %p146, %p147
      %p150 = scmp.ne.s32.totalorder %s133, %s149
      %p151 = scmp.eq.s32.totalorder %s35, 0
      %p152 = por %p150, %p151
      %s153 = ssub.s32 %s37, %s44
      %s154 = ssub.s32 %s36, %s48
      %s155 = sor.u32 %s153, %s154
      %p156 = scmp.eq.s32.totalorder %s155, 0
      %s158 = sadd.s32 %s157, 1
      %s159 = scalar_select %p156, %s157, %s158
      %p162 = pneg %p156
      %p163 = scmp.eq.s32.totalorder %s29, 3
      %p164 = por %p162, %p163
      %p165 = scmp.ne.s32.totalorder %s157, %s160
      %p166 = scmp.eq.s32.totalorder %s29, 0
      %p167 = por %p165, %p166
      %p168 = scmp.ne.s32.totalorder %s157, %s160
      %p169 = scmp.eq.s32.totalorder %s34, 3
      %p170 = por %p168, %p169
      %p171 = scmp.ne.s32.totalorder %s160, %s161
      %p172 = scmp.eq.s32.totalorder %s34, 0
      %p173 = por %p171, %p172
      %p174 = scmp.ne.s32.totalorder %s160, %s161
      %p175 = scmp.eq.s32.totalorder %s35, 3
      %p176 = por %p174, %p175
      %p178 = scmp.ne.s32.totalorder %s161, %s177
      %p179 = scmp.eq.s32.totalorder %s35, 0
      %p180 = por %p178, %p179
      %s181 = ssub.s32 %s37, %s44
      %s182 = ssub.s32 %s36, %s48
      %s183 = sor.u32 %s181, %s182
      %p184 = scmp.eq.s32.totalorder %s183, 0
      %s186 = sadd.s32 %s185, 1
      %s187 = scalar_select %p184, %s185, %s186
      %p190 = pneg %p184
      %p191 = scmp.eq.s32.totalorder %s29, 3
      %p192 = por %p190, %p191
      %p193 = scmp.ne.s32.totalorder %s185, %s188
      %p194 = scmp.eq.s32.totalorder %s29, 0
      %p195 = por %p193, %p194
      %p196 = scmp.ne.s32.totalorder %s185, %s188
      %p197 = scmp.eq.s32.totalorder %s34, 3
      %p198 = por %p196, %p197
      %p199 = scmp.ne.s32.totalorder %s188, %s189
      %p200 = scmp.eq.s32.totalorder %s34, 0
      %p201 = por %p199, %p200
      %p202 = scmp.ne.s32.totalorder %s188, %s189
      %p203 = scmp.eq.s32.totalorder %s35, 3
      %p204 = por %p202, %p203
      %p206 = scmp.ne.s32.totalorder %s189, %s205
      %p207 = scmp.eq.s32.totalorder %s35, 0
      %p208 = por %p206, %p207
      %s209 = ssub.s32 %s37, %s44
      %p210 = scmp.eq.s32.totalorder %s209, 0
      %s212 = sadd.s32 %s211, 1
      %s213 = scalar_select %p210, %s211, %s212
      %p216 = pneg %p210
      %p217 = scmp.eq.s32.totalorder %s29, 3
      %p218 = por %p216, %p217
      %p219 = scmp.ne.s32.totalorder %s211, %s214
      %p220 = scmp.eq.s32.totalorder %s29, 0
      %p221 = por %p219, %p220
      %p222 = scmp.ne.s32.totalorder %s211, %s214
      %p223 = scmp.eq.s32.totalorder %s34, 3
      %p224 = por %p222, %p223
      %p225 = scmp.ne.s32.totalorder %s214, %s215
      %p226 = scmp.eq.s32.totalorder %s34, 0
      %p227 = por %p225, %p226
      %p228 = scmp.ne.s32.totalorder %s214, %s215
      %p229 = scmp.eq.s32.totalorder %s35, 3
      %p230 = por %p228, %p229
      %p232 = scmp.ne.s32.totalorder %s215, %s231
      %p233 = scmp.eq.s32.totalorder %s35, 0
      %p234 = por %p232, %p233
      %s235 = ssub.s32 %s37, %s44
      %p236 = scmp.eq.s32.totalorder %s235, 0
      %s238 = sadd.s32 %s237, 1
      %s239 = scalar_select %p236, %s237, %s238
      %p242 = pneg %p236
      %p243 = scmp.eq.s32.totalorder %s29, 3
      %p244 = por %p242, %p243
      %p245 = scmp.ne.s32.totalorder %s237, %s240
      %p246 = scmp.eq.s32.totalorder %s29, 0
      %p247 = por %p245, %p246
      %p248 = scmp.ne.s32.totalorder %s237, %s240
      %p249 = scmp.eq.s32.totalorder %s34, 3
      %p250 = por %p248, %p249
      %p251 = scmp.ne.s32.totalorder %s240, %s241
      %p252 = scmp.eq.s32.totalorder %s34, 0
      %p253 = por %p251, %p252
      %p254 = scmp.ne.s32.totalorder %s240, %s241
      %p255 = scmp.eq.s32.totalorder %s35, 3
      %p256 = por %p254, %p255
      %p258 = scmp.ne.s32.totalorder %s241, %s257
      %p259 = scmp.eq.s32.totalorder %s35, 0
      %p260 = por %p258, %p259
      %s261 = ssub.s32 %s37, %s44
      %p262 = scmp.eq.s32.totalorder %s261, 0
      %s264 = sadd.s32 %s263, 1
      %s265 = scalar_select %p262, %s263, %s264
      %p268 = pneg %p262
      %p269 = scmp.eq.s32.totalorder %s29, 3
      %p270 = por %p268, %p269
      %p271 = scmp.ne.s32.totalorder %s263, %s266
      %p272 = scmp.eq.s32.totalorder %s29, 0
      %p273 = por %p271, %p272
      %p274 = scmp.ne.s32.totalorder %s263, %s266
      %p275 = scmp.eq.s32.totalorder %s34, 3
      %p276 = por %p274, %p275
      %p277 = scmp.ne.s32.totalorder %s266, %s267
      %p278 = scmp.eq.s32.totalorder %s34, 0
      %p279 = por %p277, %p278
      %p280 = scmp.ne.s32.totalorder %s266, %s267
      %p281 = scmp.eq.s32.totalorder %s35, 3
      %p282 = por %p280, %p281
      %p284 = scmp.ne.s32.totalorder %s267, %s283
      %p285 = scmp.eq.s32.totalorder %s35, 0
      %p286 = por %p284, %p285
      %s287 = ssub.s32 %s37, %s44
      %p288 = scmp.eq.s32.totalorder %s287, 0
      %s290 = sadd.s32 %s289, 1
      %s291 = scalar_select %p288, %s289, %s290
      %p294 = pneg %p288
      %p295 = scmp.eq.s32.totalorder %s29, 3
      %p296 = por %p294, %p295
      %p297 = scmp.ne.s32.totalorder %s289, %s292
      %p298 = scmp.eq.s32.totalorder %s29, 0
      %p299 = por %p297, %p298
      %p300 = scmp.ne.s32.totalorder %s289, %s292
      %p301 = scmp.eq.s32.totalorder %s34, 3
      %p302 = por %p300, %p301
      %p303 = scmp.ne.s32.totalorder %s292, %s293
      %p304 = scmp.eq.s32.totalorder %s34, 0
      %p305 = por %p303, %p304
      %p306 = scmp.ne.s32.totalorder %s292, %s293
      %p307 = scmp.eq.s32.totalorder %s35, 3
      %p308 = por %p306, %p307
      %p310 = scmp.ne.s32.totalorder %s293, %s309
      %p311 = scmp.eq.s32.totalorder %s35, 0
      %p312 = por %p310, %p311
      %s313 = ssub.s32 %s37, %s44
      %p314 = scmp.eq.s32.totalorder %s313, 0
      %s316 = sadd.s32 %s315, 1
      %s317 = scalar_select %p314, %s315, %s316
      %p320 = pneg %p314
      %p321 = scmp.eq.s32.totalorder %s29, 3
      %p322 = por %p320, %p321
      %p323 = scmp.ne.s32.totalorder %s315, %s318
      %p324 = scmp.eq.s32.totalorder %s29, 0
      %p325 = por %p323, %p324
      %p326 = scmp.ne.s32.totalorder %s315, %s318
      %p327 = scmp.eq.s32.totalorder %s34, 3
      %p328 = por %p326, %p327
      %p329 = scmp.ne.s32.totalorder %s318, %s319
      %p330 = scmp.eq.s32.totalorder %s34, 0
      %p331 = por %p329, %p330
      %p332 = scmp.ne.s32.totalorder %s318, %s319
      %p333 = scmp.eq.s32.totalorder %s35, 3
      %p334 = por %p332, %p333
      %p336 = scmp.ne.s32.totalorder %s319, %s335
      %p337 = scmp.eq.s32.totalorder %s35, 0
      %p338 = por %p336, %p337
      %s339 = ssub.s32 %s37, %s44
      %p340 = scmp.eq.s32.totalorder %s339, 0
      %s342 = sadd.s32 %s341, 1
      %s343 = scalar_select %p340, %s341, %s342
      %p346 = pneg %p340
      %p347 = scmp.eq.s32.totalorder %s29, 3
      %p348 = por %p346, %p347
      %p349 = scmp.ne.s32.totalorder %s341, %s344
      %p350 = scmp.eq.s32.totalorder %s29, 0
      %p351 = por %p349, %p350
      %p352 = scmp.ne.s32.totalorder %s341, %s344
      %p353 = scmp.eq.s32.totalorder %s34, 3
      %p354 = por %p352, %p353
      %p355 = scmp.ne.s32.totalorder %s344, %s345
      %p356 = scmp.eq.s32.totalorder %s34, 0
      %p357 = por %p355, %p356
      %p358 = scmp.ne.s32.totalorder %s344, %s345
      %p359 = scmp.eq.s32.totalorder %s35, 3
      %p360 = por %p358, %p359
      %p362 = scmp.ne.s32.totalorder %s345, %s361
      %p363 = scmp.eq.s32.totalorder %s35, 0
      %p364 = por %p362, %p363
      %s366 = sadd.s32 %s365, 1
      %p369 = scmp.eq.s32.totalorder %s29, 3
      %p370 = scmp.ne.s32.totalorder %s365, %s367
      %p371 = scmp.eq.s32.totalorder %s29, 0
      %p372 = por %p370, %p371
      %p373 = scmp.ne.s32.totalorder %s365, %s367
      %p374 = scmp.eq.s32.totalorder %s34, 3
      %p375 = por %p373, %p374
      %p376 = scmp.ne.s32.totalorder %s367, %s368
      %p377 = scmp.eq.s32.totalorder %s34, 0
      %p378 = por %p376, %p377
      %p379 = scmp.ne.s32.totalorder %s367, %s368
      %p380 = scmp.eq.s32.totalorder %s35, 3
      %p381 = por %p379, %p380
      %p383 = scmp.ne.s32.totalorder %s368, %s382
      %p384 = scmp.eq.s32.totalorder %s35, 0
      %p385 = por %p383, %p384
      %s387 = sadd.s32 %s386, 1
      %p390 = scmp.eq.s32.totalorder %s29, 3
      %p391 = scmp.ne.s32.totalorder %s386, %s388
      %p392 = scmp.eq.s32.totalorder %s29, 0
      %p393 = por %p391, %p392
      %p394 = scmp.ne.s32.totalorder %s386, %s388
      %p395 = scmp.eq.s32.totalorder %s34, 3
      %p396 = por %p394, %p395
      %p397 = scmp.ne.s32.totalorder %s388, %s389
      %p398 = scmp.eq.s32.totalorder %s34, 0
      %p399 = por %p397, %p398
      %p400 = scmp.ne.s32.totalorder %s388, %s389
      %p401 = scmp.eq.s32.totalorder %s35, 3
      %p402 = por %p400, %p401
      %p404 = scmp.ne.s32.totalorder %s389, %s403
      %p405 = scmp.eq.s32.totalorder %s35, 0
      %p406 = por %p404, %p405
      %s407 = ssub.s32 %s36, %s48
      %p408 = scmp.eq.s32.totalorder %s407, 0
      %s410 = sadd.s32 %s409, 1
      %s411 = scalar_select %p408, %s409, %s410
      %p414 = pneg %p408
      %p415 = scmp.eq.s32.totalorder %s29, 3
      %p416 = por %p414, %p415
      %p417 = scmp.ne.s32.totalorder %s409, %s412
      %p418 = scmp.eq.s32.totalorder %s29, 0
      %p419 = por %p417, %p418
      %p420 = scmp.ne.s32.totalorder %s409, %s412
      %p421 = scmp.eq.s32.totalorder %s34, 3
      %p422 = por %p420, %p421
      %p423 = scmp.ne.s32.totalorder %s412, %s413
      %p424 = scmp.eq.s32.totalorder %s34, 0
      %p425 = por %p423, %p424
      %p426 = scmp.ne.s32.totalorder %s412, %s413
      %p427 = scmp.eq.s32.totalorder %s35, 3
      %p428 = por %p426, %p427
      %p430 = scmp.ne.s32.totalorder %s413, %s429
      %p431 = scmp.eq.s32.totalorder %s35, 0
      %p432 = por %p430, %p431
      %s433 = ssub.s32 %s37, %s44
      %s434 = ssub.s32 %s36, %s48
      %s435 = sor.u32 %s433, %s434
      %p436 = scmp.eq.s32.totalorder %s435, 0
      %s438 = sadd.s32 %s437, 1
      %s439 = scalar_select %p436, %s437, %s438
      %p442 = pneg %p436
      %p443 = scmp.eq.s32.totalorder %s29, 3
      %p444 = por %p442, %p443
      %p445 = scmp.ne.s32.totalorder %s437, %s440
      %p446 = scmp.eq.s32.totalorder %s29, 0
      %p447 = por %p445, %p446
      %p448 = scmp.ne.s32.totalorder %s437, %s440
      %p449 = scmp.eq.s32.totalorder %s34, 3
      %p450 = por %p448, %p449
      %p451 = scmp.ne.s32.totalorder %s440, %s441
      %p452 = scmp.eq.s32.totalorder %s34, 0
      %p453 = por %p451, %p452
      %p454 = scmp.ne.s32.totalorder %s440, %s441
      %p455 = scmp.eq.s32.totalorder %s35, 3
      %p456 = por %p454, %p455
      %p458 = scmp.ne.s32.totalorder %s441, %s457
      %p459 = scmp.eq.s32.totalorder %s35, 0
      %p460 = por %p458, %p459
      %s461 = ssub.s32 %s37, %s44
      %s462 = ssub.s32 %s36, %s48
      %s463 = sor.u32 %s461, %s462
      %p464 = scmp.eq.s32.totalorder %s463, 0
      %s466 = sadd.s32 %s465, 1
      %s467 = scalar_select %p464, %s465, %s466
      %p470 = pneg %p464
      %p471 = scmp.eq.s32.totalorder %s29, 3
      %p472 = por %p470, %p471
      %p473 = scmp.ne.s32.totalorder %s465, %s468
      %p474 = scmp.eq.s32.totalorder %s29, 0
      %p475 = por %p473, %p474
      %p476 = scmp.ne.s32.totalorder %s465, %s468
      %p477 = scmp.eq.s32.totalorder %s34, 3
      %p478 = por %p476, %p477
      %p479 = scmp.ne.s32.totalorder %s468, %s469
      %p480 = scmp.eq.s32.totalorder %s34, 0
      %p481 = por %p479, %p480
      %p482 = scmp.ne.s32.totalorder %s468, %s469
      %p483 = scmp.eq.s32.totalorder %s35, 3
      %p484 = por %p482, %p483
      %p486 = scmp.ne.s32.totalorder %s469, %s485
      %p487 = scmp.eq.s32.totalorder %s35, 0
      %p488 = por %p486, %p487
      %p489 = scmp.le.s32.totalorder 1, %s29
      %p490 = scmp.lt.s32.totalorder %s29, 5
      %p491 = pnand %p489, %p490
      %p492 = pneg %p491
      // Predicated region
      $region9: #{_generator_step.1} parent=5 // pred_check
        _
      $region10: #{_generator_step.1} parent=5 // pred_check_branch
        %494 = sbr.rel (%p491) target = $region12
      $region11: #{_generator_step.1} parent=5 // pred_region
        %s495 = ssub.s32 %s29, 1
        // Predicated region
        $region13: #{_generator_step.1} parent=11 // pred_check
          %p496 = pneg %p378
        $region14: #{_generator_step.1} parent=11 // pred_check_branch
          %498 = sbr.rel (%p496) target = $region16
        $region15: #{_generator_step.1} parent=11 // pred_region
          _
        $region16: #{_generator_step.1} parent=11 // pred_fallthru
          _
        // Predicated region
        $region17: #{_generator_step.1} parent=11 // pred_check
          %p499 = pneg %p399
        $region18: #{_generator_step.1} parent=11 // pred_check_branch
          %501 = sbr.rel (%p499) target = $region20
        $region19: #{_generator_step.1} parent=11 // pred_region
          _
        $region20: #{_generator_step.1} parent=11 // pred_fallthru
          _
      $region12: #{_generator_step.1} parent=5 // pred_fallthru
        _
      %p502 = scmp.lt.s32.totalorder %s29, 4
      // Predicated region
      $region21: #{_generator_step.1} parent=5 // pred_check
        %p503 = pneg %p502
      $region22: #{_generator_step.1} parent=5 // pred_check_branch
        %505 = sbr.rel (%p503) target = $region24
      $region23: #{_generator_step.1} parent=5 // pred_region
        // Predicated region
        $region25: #{_generator_step.1} parent=23 // pred_check
          %p506 = pneg %p61
        $region26: #{_generator_step.1} parent=23 // pred_check_branch
          %508 = sbr.rel (%p506) target = $region28
        $region27: #{_generator_step.1} parent=23 // pred_region
          %p509 = scmp.lt.s32.totalorder %s36, 1
          %s510 = scalar_select %p509, %s36, 1
          %s511 = smul.addr %s510, 2
          %s512 = smul.addr %s511, 8
          %s513 = scalar_lea.vmem %s0, %s512
        $region28: #{_generator_step.1} parent=23 // pred_fallthru
          _
        // Predicated region
        $region29: #{_generator_step.1} parent=23 // pred_check
          %p514 = pneg %p87
        $region30: #{_generator_step.1} parent=23 // pred_check_branch
          %516 = sbr.rel (%p514) target = $region32
        $region31: #{_generator_step.1} parent=23 // pred_region
          %p517 = scmp.lt.s32.totalorder %s36, 1
          %s518 = scalar_select %p517, %s36, 1
          %s519 = scalar_lea.vmem %s1, %s518
        $region32: #{_generator_step.1} parent=23 // pred_fallthru
          _
        // Predicated region
        $region33: #{_generator_step.1} parent=23 // pred_check
          %p520 = pneg %p113
        $region34: #{_generator_step.1} parent=23 // pred_check_branch
          %522 = sbr.rel (%p520) target = $region36
        $region35: #{_generator_step.1} parent=23 // pred_region
          %p523 = scmp.lt.s32.totalorder %s36, 1
          %s524 = scalar_select %p523, %s36, 1
          %s525 = smul.addr %s524, 8
          %s526 = scalar_lea.vmem %s2, %s525
        $region36: #{_generator_step.1} parent=23 // pred_fallthru
          _
        // Predicated region
        $region37: #{_generator_step.1} parent=23 // pred_check
          %p527 = pneg %p139
        $region38: #{_generator_step.1} parent=23 // pred_check_branch
          %529 = sbr.rel (%p527) target = $region40
        $region39: #{_generator_step.1} parent=23 // pred_region
          %p530 = scmp.lt.s32.totalorder %s36, 1
          %s531 = scalar_select %p530, %s36, 1
          %s532 = smul.addr %s531, 8
          %s533 = scalar_lea.vmem %s3, %s532
        $region40: #{_generator_step.1} parent=23 // pred_fallthru
          _
        // Predicated region
        $region41: #{_generator_step.1} parent=23 // pred_check
          %p534 = pneg %p167
        $region42: #{_generator_step.1} parent=23 // pred_check_branch
          %536 = sbr.rel (%p534) target = $region44
        $region43: #{_generator_step.1} parent=23 // pred_region
          %p537 = scmp.lt.s32.totalorder %s37, 1
          %s538 = scalar_select %p537, %s37, 1
          %p539 = scmp.lt.s32.totalorder %s36, 1
          %s540 = scalar_select %p539, %s36, 1
          %s541 = smul.addr %s540, 2
          %s542 = smul.addr %s538, 4
          %s543 = sadd.s32 %s541, %s542
          %s544 = smul.addr %s543, 4
          %s545 = scalar_lea.vmem %s4, %s544
        $region44: #{_generator_step.1} parent=23 // pred_fallthru
          _
        // Predicated region
        $region45: #{_generator_step.1} parent=23 // pred_check
          %p546 = pneg %p195
        $region46: #{_generator_step.1} parent=23 // pred_check_branch
          %548 = sbr.rel (%p546) target = $region48
        $region47: #{_generator_step.1} parent=23 // pred_region
          %p549 = scmp.lt.s32.totalorder %s37, 1
          %s550 = scalar_select %p549, %s37, 1
          %p551 = scmp.lt.s32.totalorder %s36, 1
          %s552 = scalar_select %p551, %s36, 1
          %s553 = smul.addr %s552, 2
          %s554 = smul.addr %s550, 4
          %s555 = sadd.s32 %s553, %s554
          %s556 = smul.addr %s555, 4
          %s557 = scalar_lea.vmem %s5, %s556
        $region48: #{_generator_step.1} parent=23 // pred_fallthru
          _
        // Predicated region
        $region49: #{_generator_step.1} parent=23 // pred_check
          %p558 = pneg %p221
        $region50: #{_generator_step.1} parent=23 // pred_check_branch
          %560 = sbr.rel (%p558) target = $region52
        $region51: #{_generator_step.1} parent=23 // pred_region
          %s561 = sand.u32 %s211, 1
          %s562 = scalar_lea.sflag [#allocation7], %s561
          %s563 = sand.u32 %s211, 1
          %s564 = smul.addr %s563, 768
          %s565 = scalar_lea.vmem [#allocation6], %s564
          %s567 = ssub.s32 12288, 12288
          %568 = vsyncadd %s562, %s567
          %s569 = smul.addr %s37, 192
          %s570 = smul.addr %s569, 64
          %s571 = scalar_lea.hbm %s6, %s570
          %s572 = sshll.u32 %s565, 4
          %s573 = int_to_ptr.vmem [resolvable:$true] %s572
          %578 = dma.hbm_to_vmem [thread:$0]  %s571, 12288, %s573, %s562, 384, 384, 24
        $region52: #{_generator_step.1} parent=23 // pred_fallthru
          _
        // Predicated region
        $region53: #{_generator_step.1} parent=23 // pred_check
          %p579 = pneg %p247
        $region54: #{_generator_step.1} parent=23 // pred_check_branch
          %581 = sbr.rel (%p579) target = $region56
        $region55: #{_generator_step.1} parent=23 // pred_region
          %p582 = scmp.lt.s32.totalorder %s37, 1
          %s583 = scalar_select %p582, %s37, 1
          %s584 = smul.addr %s583, 64
          %s585 = smul.addr %s584, 4
          %s586 = scalar_lea.vmem %s7, %s585
        $region56: #{_generator_step.1} parent=23 // pred_fallthru
          _
        // Predicated region
        $region57: #{_generator_step.1} parent=23 // pred_check
          %p587 = pneg %p273
        $region58: #{_generator_step.1} parent=23 // pred_check_branch
          %589 = sbr.rel (%p587) target = $region60
        $region59: #{_generator_step.1} parent=23 // pred_region
          %s590 = sand.u32 %s29, 1
          %s591 = scalar_lea.sflag [#allocation9], %s590
          %s592 = sand.u32 %s263, 1
          %s593 = smul.addr %s592, 512
          %s594 = scalar_lea.vmem [#allocation8], %s593
          %s596 = ssub.s32 8192, 8192
          %597 = vsyncadd %s591, %s596
          %s598 = smul.addr %s37, 128
          %s599 = smul.addr %s598, 64
          %s600 = scalar_lea.hbm %s8, %s599
          %s601 = sshll.u32 %s594, 4
          %s602 = int_to_ptr.vmem [resolvable:$true] %s601
          %607 = dma.hbm_to_vmem [thread:$0]  %s600, 8192, %s602, %s591, 256, 256, 16
        $region60: #{_generator_step.1} parent=23 // pred_fallthru
          _
        // Predicated region
        $region61: #{_generator_step.1} parent=23 // pred_check
          %p608 = pneg %p299
        $region62: #{_generator_step.1} parent=23 // pred_check_branch
          %610 = sbr.rel (%p608) target = $region64
        $region63: #{_generator_step.1} parent=23 // pred_region
          %s611 = sand.u32 %s29, 1
          %s612 = scalar_lea.sflag [#allocation9], %s611
          %s613 = sand.u32 %s289, 1
          %s614 = smul.addr %s613, 512
          %s615 = scalar_lea.vmem [#allocation10], %s614
          %s617 = ssub.s32 8192, 8192
          %618 = vsyncadd %s612, %s617
          %s619 = smul.addr %s37, 128
          %s620 = smul.addr %s619, 64
          %s621 = scalar_lea.hbm %s9, %s620
          %s622 = sshll.u32 %s615, 4
          %s623 = int_to_ptr.vmem [resolvable:$true] %s622
          %628 = dma.hbm_to_vmem [thread:$0]  %s621, 8192, %s623, %s612, 128, 128, 8
        $region64: #{_generator_step.1} parent=23 // pred_fallthru
          _
        // Predicated region
        $region65: #{_generator_step.1} parent=23 // pred_check
          %p629 = pneg %p325
        $region66: #{_generator_step.1} parent=23 // pred_check_branch
          %631 = sbr.rel (%p629) target = $region68
        $region67: #{_generator_step.1} parent=23 // pred_region
          %p632 = scmp.lt.s32.totalorder %s37, 1
          %s633 = scalar_select %p632, %s37, 1
          %s634 = smul.addr %s633, 2
          %s635 = scalar_lea.vmem %s10, %s634
        $region68: #{_generator_step.1} parent=23 // pred_fallthru
          _
        // Predicated region
        $region69: #{_generator_step.1} parent=23 // pred_check
          %p636 = pneg %p351
        $region70: #{_generator_step.1} parent=23 // pred_check_branch
          %638 = sbr.rel (%p636) target = $region72
        $region71: #{_generator_step.1} parent=23 // pred_region
          %p639 = scmp.lt.s32.totalorder %s37, 1
          %s640 = scalar_select %p639, %s37, 1
          %s641 = smul.addr %s640, 2
          %s642 = scalar_lea.vmem %s11, %s641
        $region72: #{_generator_step.1} parent=23 // pred_fallthru
          _
      $region24: #{_generator_step.1} parent=5 // pred_fallthru
        _
      %p643 = scmp.le.s32.totalorder 1, %s29
      %p644 = scmp.lt.s32.totalorder %s29, 5
      %p645 = pnand %p643, %p644
      %p646 = pneg %p645
      // Predicated region
      $region73: #{_generator_step.1} parent=5 // pred_check
        _
      $region74: #{_generator_step.1} parent=5 // pred_check_branch
        %648 = sbr.rel (%p645) target = $region76
      $region75: #{_generator_step.1} parent=5 // pred_region
        %s649 = ssub.s32 %s29, 1
        %s650 = sand.u32 %s214, 1
        %s651 = scalar_lea.sflag [#allocation7], %s650
        %s652 = sand.u32 %s214, 1
        %s653 = smul.addr %s652, 768
        %s654 = scalar_lea.vmem [#allocation6], %s653
        // Predicated region
        $region77: #{_generator_step.1} parent=75 // pred_check
          %p655 = pneg %p227
        $region78: #{_generator_step.1} parent=75 // pred_check_branch
          %657 = sbr.rel (%p655) target = $region80
        $region79: #{_generator_step.1} parent=75 // pred_region
          %658 = dma.done %s651, 12288
        $region80: #{_generator_step.1} parent=75 // pred_fallthru
          _
        %s659 = sand.u32 %s34, 1
        %s660 = scalar_lea.sflag [#allocation9], %s659
        %s661 = sand.u32 %s266, 1
        %s662 = smul.addr %s661, 512
        %s663 = scalar_lea.vmem [#allocation8], %s662
        // Predicated region
        $region81: #{_generator_step.1} parent=75 // pred_check
          %p664 = pneg %p279
        $region82: #{_generator_step.1} parent=75 // pred_check_branch
          %666 = sbr.rel (%p664) target = $region84
        $region83: #{_generator_step.1} parent=75 // pred_region
          %667 = dma.done %s660, 8192
        $region84: #{_generator_step.1} parent=75 // pred_fallthru
          _
        %s668 = sand.u32 %s34, 1
        %s669 = scalar_lea.sflag [#allocation9], %s668
        %s670 = sand.u32 %s292, 1
        %s671 = smul.addr %s670, 512
        %s672 = scalar_lea.vmem [#allocation10], %s671
        // Predicated region
        $region85: #{_generator_step.1} parent=75 // pred_check
          %p673 = pneg %p305
        $region86: #{_generator_step.1} parent=75 // pred_check_branch
          %675 = sbr.rel (%p673) target = $region88
        $region87: #{_generator_step.1} parent=75 // pred_region
          %676 = dma.done %s669, 8192
        $region88: #{_generator_step.1} parent=75 // pred_fallthru
          _
        %p677 = scmp.lt.s32.totalorder %s38, 1
        %s678 = scalar_select %p677, %s38, 1
        %s679 = smul.addr %s678, 2
        %s680 = smul.addr %s679, 8
        %s681 = scalar_lea.vmem %s0, %s680
        %p682 = pneg %p67
        %p683 = pneg %p64
        %p684 = scmp.lt.s32.totalorder %s38, 1
        %s685 = scalar_select %p684, %s38, 1
        %s686 = scalar_lea.vmem %s1, %s685
        %p687 = pneg %p93
        %p688 = pneg %p90
        %p689 = scmp.lt.s32.totalorder %s38, 1
        %s690 = scalar_select %p689, %s38, 1
        %s691 = smul.addr %s690, 8
        %s692 = scalar_lea.vmem %s2, %s691
        %p693 = pneg %p119
        %p694 = pneg %p116
        %p695 = scmp.lt.s32.totalorder %s38, 1
        %s696 = scalar_select %p695, %s38, 1
        %s697 = smul.addr %s696, 8
        %s698 = scalar_lea.vmem %s3, %s697
        %p699 = pneg %p145
        %p700 = pneg %p142
        %p701 = scmp.lt.s32.totalorder %s39, 1
        %s702 = scalar_select %p701, %s39, 1
        %p703 = scmp.lt.s32.totalorder %s38, 1
        %s704 = scalar_select %p703, %s38, 1
        %s705 = smul.addr %s704, 2
        %s706 = smul.addr %s702, 4
        %s707 = sadd.s32 %s705, %s706
        %s708 = smul.addr %s707, 4
        %s709 = scalar_lea.vmem %s4, %s708
        %p710 = pneg %p173
        %p711 = pneg %p170
        %p712 = scmp.lt.s32.totalorder %s39, 1
        %s713 = scalar_select %p712, %s39, 1
        %p714 = scmp.lt.s32.totalorder %s38, 1
        %s715 = scalar_select %p714, %s38, 1
        %s716 = smul.addr %s715, 2
        %s717 = smul.addr %s713, 4
        %s718 = sadd.s32 %s716, %s717
        %s719 = smul.addr %s718, 4
        %s720 = scalar_lea.vmem %s5, %s719
        %p721 = pneg %p201
        %p722 = pneg %p198
        %s723 = sand.u32 %s214, 1
        %s724 = scalar_lea.sflag [#allocation7], %s723
        %s725 = sand.u32 %s214, 1
        %s726 = smul.addr %s725, 768
        %s727 = scalar_lea.vmem [#allocation6], %s726
        %p728 = pneg %p227
        %p729 = pneg %p224
        %p730 = scmp.lt.s32.totalorder %s39, 1
        %s731 = scalar_select %p730, %s39, 1
        %s732 = smul.addr %s731, 64
        %s733 = smul.addr %s732, 4
        %s734 = scalar_lea.vmem %s7, %s733
        %p735 = pneg %p253
        %p736 = pneg %p250
        %s737 = sand.u32 %s34, 1
        %s738 = scalar_lea.sflag [#allocation9], %s737
        %s739 = sand.u32 %s266, 1
        %s740 = smul.addr %s739, 512
        %s741 = scalar_lea.vmem [#allocation8], %s740
        %p742 = pneg %p279
        %p743 = pneg %p276
        %s744 = sand.u32 %s34, 1
        %s745 = scalar_lea.sflag [#allocation9], %s744
        %s746 = sand.u32 %s292, 1
        %s747 = smul.addr %s746, 512
        %s748 = scalar_lea.vmem [#allocation10], %s747
        %p749 = pneg %p305
        %p750 = pneg %p302
        %p751 = scmp.lt.s32.totalorder %s39, 1
        %s752 = scalar_select %p751, %s39, 1
        %s753 = smul.addr %s752, 2
        %s754 = scalar_lea.vmem %s10, %s753
        %p755 = pneg %p331
        %p756 = pneg %p328
        %p757 = scmp.lt.s32.totalorder %s39, 1
        %s758 = scalar_select %p757, %s39, 1
        %s759 = smul.addr %s758, 2
        %s760 = scalar_lea.vmem %s11, %s759
        %p761 = pneg %p357
        %p762 = pneg %p354
        %p763 = pneg %p378
        %p764 = pneg %p375
        %p765 = pneg %p399
        %p766 = pneg %p396
        %p767 = pneg %p425
        %p768 = pneg %p422
        %p769 = scmp.lt.s32.totalorder %s38, 1
        %s770 = scalar_select %p769, %s38, 1
        %s771 = smul.addr %s770, 8
        %s772 = scalar_lea.vmem %s14, %s771
        %p773 = pneg %p453
        %p774 = pneg %p450
        %p775 = scmp.lt.s32.totalorder %s39, 1
        %s776 = scalar_select %p775, %s39, 1
        %p777 = scmp.lt.s32.totalorder %s38, 1
        %s778 = scalar_select %p777, %s38, 1
        %s779 = smul.addr %s778, 2
        %s780 = smul.addr %s776, 4
        %s781 = sadd.s32 %s779, %s780
        %s782 = smul.addr %s781, 4
        %s783 = scalar_lea.vmem %s15, %s782
        %p784 = pneg %p481
        %p785 = pneg %p478
        %p786 = scmp.lt.s32.totalorder %s39, 1
        %s787 = scalar_select %p786, %s39, 1
        %p788 = scmp.lt.s32.totalorder %s38, 1
        %s789 = scalar_select %p788, %s38, 1
        %s790 = smul.addr %s789, 2
        %s791 = smul.addr %s787, 4
        %s792 = sadd.s32 %s790, %s791
        %s793 = smul.addr %s792, 4
        %s794 = scalar_lea.vmem %s16, %s793
        %p795 = scmp.lt.s32.totalorder %s38, 1
        %s796 = scalar_select %p795, %s38, 1
        %s797 = smul.addr %s796, 2
        %s798 = smul.addr %s797, 8
        %s799 = scalar_lea.vmem %s0, %s798
        %p800 = scmp.lt.s32.totalorder %s38, 1
        %s801 = scalar_select %p800, %s38, 1
        %s802 = scalar_lea.vmem %s1, %s801
        %p803 = scmp.lt.s32.totalorder %s38, 1
        %s804 = scalar_select %p803, %s38, 1
        %s805 = smul.addr %s804, 8
        %s806 = scalar_lea.vmem %s2, %s805
        %p807 = scmp.lt.s32.totalorder %s38, 1
        %s808 = scalar_select %p807, %s38, 1
        %s809 = smul.addr %s808, 8
        %s810 = scalar_lea.vmem %s3, %s809
        %p811 = scmp.lt.s32.totalorder %s39, 1
        %s812 = scalar_select %p811, %s39, 1
        %p813 = scmp.lt.s32.totalorder %s38, 1
        %s814 = scalar_select %p813, %s38, 1
        %s815 = smul.addr %s814, 2
        %s816 = smul.addr %s812, 4
        %s817 = sadd.s32 %s815, %s816
        %s818 = smul.addr %s817, 4
        %s819 = scalar_lea.vmem %s4, %s818
        %p820 = scmp.lt.s32.totalorder %s39, 1
        %s821 = scalar_select %p820, %s39, 1
        %p822 = scmp.lt.s32.totalorder %s38, 1
        %s823 = scalar_select %p822, %s38, 1
        %s824 = smul.addr %s823, 2
        %s825 = smul.addr %s821, 4
        %s826 = sadd.s32 %s824, %s825
        %s827 = smul.addr %s826, 4
        %s828 = scalar_lea.vmem %s5, %s827
        %p829 = scmp.lt.s32.totalorder %s39, 1
        %s830 = scalar_select %p829, %s39, 1
        %s831 = smul.addr %s830, 64
        %s832 = smul.addr %s831, 4
        %s833 = scalar_lea.vmem %s7, %s832
        %p834 = scmp.lt.s32.totalorder %s39, 1
        %s835 = scalar_select %p834, %s39, 1
        %s836 = smul.addr %s835, 2
        %s837 = scalar_lea.vmem %s10, %s836
        %p838 = scmp.lt.s32.totalorder %s39, 1
        %s839 = scalar_select %p838, %s39, 1
        %s840 = smul.addr %s839, 2
        %s841 = scalar_lea.vmem %s11, %s840
        %p842 = scmp.lt.s32.totalorder %s38, 1
        %s843 = scalar_select %p842, %s38, 1
        %s844 = smul.addr %s843, 8
        %s845 = scalar_lea.vmem %s14, %s844
        %p846 = scmp.lt.s32.totalorder %s39, 1
        %s847 = scalar_select %p846, %s39, 1
        %p848 = scmp.lt.s32.totalorder %s38, 1
        %s849 = scalar_select %p848, %s38, 1
        %s850 = smul.addr %s849, 2
        %s851 = smul.addr %s847, 4
        %s852 = sadd.s32 %s850, %s851
        %s853 = smul.addr %s852, 4
        %s854 = scalar_lea.vmem %s15, %s853
        %p855 = scmp.lt.s32.totalorder %s39, 1
        %s856 = scalar_select %p855, %s39, 1
        %p857 = scmp.lt.s32.totalorder %s38, 1
        %s858 = scalar_select %p857, %s38, 1
        %s859 = smul.addr %s858, 2
        %s860 = smul.addr %s856, 4
        %s861 = sadd.s32 %s859, %s860
        %s862 = smul.addr %s861, 4
        %s863 = scalar_lea.vmem %s16, %s862
        %p865 = scmp.eq.s32.totalorder %s39, 0
        // Predicated region
        $region89: #{_generator_step.1} parent=75 // pred_check
          %p866 = pneg %p865
        $region90: #{_generator_step.1} parent=75 // pred_check_branch
          %868 = sbr.rel (%p866) target = $region92
        $region91: #{_generator_step.1} parent=75 // pred_region
          %v869 = vld [vmem:[%s799] sm:$0xff]
          %v870 = vld [vmem:[%s799 + $0x8] sm:$0xff]
          %871 = vst [vmem:[#allocation2] sm:$0xff] %v869
          %872 = vst [vmem:[#allocation2 + $0x8] sm:$0xff] %v870
        $region92: #{_generator_step.1} parent=75 // pred_fallthru
          _
        %v873 = vld [vmem:[#allocation2] sm:$0xff]
        %v874 = vld [vmem:[#allocation2 + $0x8] sm:$0xff]
        %v875 = vld [vmem:[%s837] sm:$0x3]
        %v876 = vmul.f32 %v873, %v873
        %v877 = vmul.f32 %v874, %v874
        %v878 = vadd.f32 %v876, %v877
        %879 = vadd.xlane.f32.xlu0 %v878
        %v880 = vpop.xlane.xlu0 %879
        %v881 = vrcp.pop 256.0
        %v882 = vmul.f32 %v880, %v881
        %v883 = vadd.f32 %v882, 1e-05
        %v884 = vrsqrt.pop %v883
        %v885 = vmul.f32 %v873, %v884
        %v886 = vmul.f32 %v874, %v884
        %v888 = vlaneseq
        %v889 = vshrl.u32 %v888, 7
        %v890 = vsub.s32 0, %v889
        %v891 = vrot.slane %v875, %v890
        %v892 = vlaneseq
        %v893 = vshrl.u32 %v892, 7
        %v894 = vsub.s32 1, %v893
        %v895 = vrot.slane %v875, %v894
        %v898 = vmul.f32 %v885, %v891
        %v899 = vmul.f32 %v886, %v895
        %v900 = vld [vmem:[%s654] sm:$0xff]
        %v901 = vld [vmem:[%s654 + $0x8] sm:$0xff]
        %v902 = vld [vmem:[%s654 + $0x10] sm:$0xff]
        %v903 = vld [vmem:[%s654 + $0x18] sm:$0xff]
        %v904 = vld [vmem:[%s654 + $0x20] sm:$0xff]
        %v905 = vld [vmem:[%s654 + $0x28] sm:$0xff]
        %v906 = vld [vmem:[%s654 + $0x30] sm:$0xff]
        %v907 = vld [vmem:[%s654 + $0x38] sm:$0xff]
        %v908 = vld [vmem:[%s654 + $0x40] sm:$0xff]
        %v909 = vld [vmem:[%s654 + $0x48] sm:$0xff]
        %v910 = vld [vmem:[%s654 + $0x50] sm:$0xff]
        %v911 = vld [vmem:[%s654 + $0x58] sm:$0xff]
        %v912 = vld [vmem:[%s654 + $0x60] sm:$0xff]
        %v913 = vld [vmem:[%s654 + $0x68] sm:$0xff]
        %v914 = vld [vmem:[%s654 + $0x70] sm:$0xff]
        %v915 = vld [vmem:[%s654 + $0x78] sm:$0xff]
        %v916 = vld [vmem:[%s654 + $0x80] sm:$0xff]
        %v917 = vld [vmem:[%s654 + $0x88] sm:$0xff]
        %v918 = vld [vmem:[%s654 + $0x90] sm:$0xff]
        %v919 = vld [vmem:[%s654 + $0x98] sm:$0xff]
        %v920 = vld [vmem:[%s654 + $0xa0] sm:$0xff]
        %v921 = vld [vmem:[%s654 + $0xa8] sm:$0xff]
        %v922 = vld [vmem:[%s654 + $0xb0] sm:$0xff]
        %v923 = vld [vmem:[%s654 + $0xb8] sm:$0xff]
        %v924 = vld [vmem:[%s654 + $0xc0] sm:$0xff]
        %v925 = vld [vmem:[%s654 + $0xc8] sm:$0xff]
        %v926 = vld [vmem:[%s654 + $0xd0] sm:$0xff]
        %v927 = vld [vmem:[%s654 + $0xd8] sm:$0xff]
        %v928 = vld [vmem:[%s654 + $0xe0] sm:$0xff]
        %v929 = vld [vmem:[%s654 + $0xe8] sm:$0xff]
        %v930 = vld [vmem:[%s654 + $0xf0] sm:$0xff]
        %v931 = vld [vmem:[%s654 + $0xf8] sm:$0xff]
        %v932 = vld [vmem:[%s654 + $0x100] sm:$0xff]
        %v933 = vld [vmem:[%s654 + $0x108] sm:$0xff]
        %v934 = vld [vmem:[%s654 + $0x110] sm:$0xff]
        %v935 = vld [vmem:[%s654 + $0x118] sm:$0xff]
        %v936 = vld [vmem:[%s654 + $0x120] sm:$0xff]
        %v937 = vld [vmem:[%s654 + $0x128] sm:$0xff]
        %v938 = vld [vmem:[%s654 + $0x130] sm:$0xff]
        %v939 = vld [vmem:[%s654 + $0x138] sm:$0xff]
        %v940 = vld [vmem:[%s654 + $0x140] sm:$0xff]
        %v941 = vld [vmem:[%s654 + $0x148] sm:$0xff]
        %v942 = vld [vmem:[%s654 + $0x150] sm:$0xff]
        %v943 = vld [vmem:[%s654 + $0x158] sm:$0xff]
        %v944 = vld [vmem:[%s654 + $0x160] sm:$0xff]
        %v945 = vld [vmem:[%s654 + $0x168] sm:$0xff]
        %v946 = vld [vmem:[%s654 + $0x170] sm:$0xff]
        %v947 = vld [vmem:[%s654 + $0x178] sm:$0xff]
        %v948 = vld [vmem:[%s654 + $0x180] sm:$0xff]
        %v949 = vld [vmem:[%s654 + $0x188] sm:$0xff]
        %v950 = vld [vmem:[%s654 + $0x190] sm:$0xff]
        %v951 = vld [vmem:[%s654 + $0x198] sm:$0xff]
        %v952 = vld [vmem:[%s654 + $0x1a0] sm:$0xff]
        %v953 = vld [vmem:[%s654 + $0x1a8] sm:$0xff]
        %v954 = vld [vmem:[%s654 + $0x1b0] sm:$0xff]
        %v955 = vld [vmem:[%s654 + $0x1b8] sm:$0xff]
        %v956 = vld [vmem:[%s654 + $0x1c0] sm:$0xff]
        %v957 = vld [vmem:[%s654 + $0x1c8] sm:$0xff]
        %v958 = vld [vmem:[%s654 + $0x1d0] sm:$0xff]
        %v959 = vld [vmem:[%s654 + $0x1d8] sm:$0xff]
        %v960 = vld [vmem:[%s654 + $0x1e0] sm:$0xff]
        %v961 = vld [vmem:[%s654 + $0x1e8] sm:$0xff]
        %v962 = vld [vmem:[%s654 + $0x1f0] sm:$0xff]
        %v963 = vld [vmem:[%s654 + $0x1f8] sm:$0xff]
        %v964 = vld [vmem:[%s654 + $0x200] sm:$0xff]
        %v965 = vld [vmem:[%s654 + $0x208] sm:$0xff]
        %v966 = vld [vmem:[%s654 + $0x210] sm:$0xff]
        %v967 = vld [vmem:[%s654 + $0x218] sm:$0xff]
        %v968 = vld [vmem:[%s654 + $0x220] sm:$0xff]
        %v969 = vld [vmem:[%s654 + $0x228] sm:$0xff]
        %v970 = vld [vmem:[%s654 + $0x230] sm:$0xff]
        %v971 = vld [vmem:[%s654 + $0x238] sm:$0xff]
        %v972 = vld [vmem:[%s654 + $0x240] sm:$0xff]
        %v973 = vld [vmem:[%s654 + $0x248] sm:$0xff]
        %v974 = vld [vmem:[%s654 + $0x250] sm:$0xff]
        %v975 = vld [vmem:[%s654 + $0x258] sm:$0xff]
        %v976 = vld [vmem:[%s654 + $0x260] sm:$0xff]
        %v977 = vld [vmem:[%s654 + $0x268] sm:$0xff]
        %v978 = vld [vmem:[%s654 + $0x270] sm:$0xff]
        %v979 = vld [vmem:[%s654 + $0x278] sm:$0xff]
        %v980 = vld [vmem:[%s654 + $0x280] sm:$0xff]
        %v981 = vld [vmem:[%s654 + $0x288] sm:$0xff]
        %v982 = vld [vmem:[%s654 + $0x290] sm:$0xff]
        %v983 = vld [vmem:[%s654 + $0x298] sm:$0xff]
        %v984 = vld [vmem:[%s654 + $0x2a0] sm:$0xff]
        %v985 = vld [vmem:[%s654 + $0x2a8] sm:$0xff]
        %v986 = vld [vmem:[%s654 + $0x2b0] sm:$0xff]
        %v987 = vld [vmem:[%s654 + $0x2b8] sm:$0xff]
        %v988 = vld [vmem:[%s654 + $0x2c0] sm:$0xff]
        %v989 = vld [vmem:[%s654 + $0x2c8] sm:$0xff]
        %v990 = vld [vmem:[%s654 + $0x2d0] sm:$0xff]
        %v991 = vld [vmem:[%s654 + $0x2d8] sm:$0xff]
        %v992 = vld [vmem:[%s654 + $0x2e0] sm:$0xff]
        %v993 = vld [vmem:[%s654 + $0x2e8] sm:$0xff]
        %v994 = vld [vmem:[%s654 + $0x2f0] sm:$0xff]
        %v995 = vld [vmem:[%s654 + $0x2f8] sm:$0xff]
        %v996 = vpack.c.bf16 %v898, %v898
        %v997 = vpack.c.bf16 %v899, %v899
        %v1094 = vunpack.c.l.b16 %v900
        %v1095 = vunpack.c.h.b16 %v900
        %v1096 = vunpack.c.l.b16 %v901
        %v1097 = vunpack.c.h.b16 %v901
        %v1098 = vunpack.c.l.b16 %v902
        %v1099 = vunpack.c.h.b16 %v902
        %v1100 = vunpack.c.l.b16 %v903
        %v1101 = vunpack.c.h.b16 %v903
        %v1102 = vunpack.c.l.b16 %v904
        %v1103 = vunpack.c.h.b16 %v904
        %v1104 = vunpack.c.l.b16 %v905
        %v1105 = vunpack.c.h.b16 %v905
        %v1106 = vunpack.c.l.b16 %v906
        %v1107 = vunpack.c.h.b16 %v906
        %v1108 = vunpack.c.l.b16 %v907
        %v1109 = vunpack.c.h.b16 %v907
        %v1110 = vunpack.c.l.b16 %v908
        %v1111 = vunpack.c.h.b16 %v908
        %v1112 = vunpack.c.l.b16 %v909
        %v1113 = vunpack.c.h.b16 %v909
        %v1114 = vunpack.c.l.b16 %v910
        %v1115 = vunpack.c.h.b16 %v910
        %v1116 = vunpack.c.l.b16 %v911
        %v1117 = vunpack.c.h.b16 %v911
        %v1118 = vunpack.c.l.b16 %v912
        %v1119 = vunpack.c.h.b16 %v912
        %v1120 = vunpack.c.l.b16 %v913
        %v1121 = vunpack.c.h.b16 %v913
        %v1122 = vunpack.c.l.b16 %v914
        %v1123 = vunpack.c.h.b16 %v914
        %v1124 = vunpack.c.l.b16 %v915
        %v1125 = vunpack.c.h.b16 %v915
        %v1126 = vunpack.c.l.b16 %v916
        %v1127 = vunpack.c.h.b16 %v916
        %v1128 = vunpack.c.l.b16 %v917
        %v1129 = vunpack.c.h.b16 %v917
        %v1130 = vunpack.c.l.b16 %v918
        %v1131 = vunpack.c.h.b16 %v918
        %v1132 = vunpack.c.l.b16 %v919
        %v1133 = vunpack.c.h.b16 %v919
        %v1134 = vunpack.c.l.b16 %v920
        %v1135 = vunpack.c.h.b16 %v920
        %v1136 = vunpack.c.l.b16 %v921
        %v1137 = vunpack.c.h.b16 %v921
        %v1138 = vunpack.c.l.b16 %v922
        %v1139 = vunpack.c.h.b16 %v922
        %v1140 = vunpack.c.l.b16 %v923
        %v1141 = vunpack.c.h.b16 %v923
        %v1142 = vunpack.c.l.b16 %v924
        %v1143 = vunpack.c.h.b16 %v924
        %v1144 = vunpack.c.l.b16 %v925
        %v1145 = vunpack.c.h.b16 %v925
        %v1146 = vunpack.c.l.b16 %v926
        %v1147 = vunpack.c.h.b16 %v926
        %v1148 = vunpack.c.l.b16 %v927
        %v1149 = vunpack.c.h.b16 %v927
        %v1150 = vunpack.c.l.b16 %v928
        %v1151 = vunpack.c.h.b16 %v928
        %v1152 = vunpack.c.l.b16 %v929
        %v1153 = vunpack.c.h.b16 %v929
        %v1154 = vunpack.c.l.b16 %v930
        %v1155 = vunpack.c.h.b16 %v930
        %v1156 = vunpack.c.l.b16 %v931
        %v1157 = vunpack.c.h.b16 %v931
        %v1158 = vunpack.c.l.b16 %v932
        %v1159 = vunpack.c.h.b16 %v932
        %v1160 = vunpack.c.l.b16 %v933
        %v1161 = vunpack.c.h.b16 %v933
        %v1162 = vunpack.c.l.b16 %v934
        %v1163 = vunpack.c.h.b16 %v934
        %v1164 = vunpack.c.l.b16 %v935
        %v1165 = vunpack.c.h.b16 %v935
        %v1166 = vunpack.c.l.b16 %v936
        %v1167 = vunpack.c.h.b16 %v936
        %v1168 = vunpack.c.l.b16 %v937
        %v1169 = vunpack.c.h.b16 %v937
        %v1170 = vunpack.c.l.b16 %v938
        %v1171 = vunpack.c.h.b16 %v938
        %v1172 = vunpack.c.l.b16 %v939
        %v1173 = vunpack.c.h.b16 %v939
        %v1174 = vunpack.c.l.b16 %v940
        %v1175 = vunpack.c.h.b16 %v940
        %v1176 = vunpack.c.l.b16 %v941
        %v1177 = vunpack.c.h.b16 %v941
        %v1178 = vunpack.c.l.b16 %v942
        %v1179 = vunpack.c.h.b16 %v942
        %v1180 = vunpack.c.l.b16 %v943
        %v1181 = vunpack.c.h.b16 %v943
        %v1182 = vunpack.c.l.b16 %v944
        %v1183 = vunpack.c.h.b16 %v944
        %v1184 = vunpack.c.l.b16 %v945
        %v1185 = vunpack.c.h.b16 %v945
        %v1186 = vunpack.c.l.b16 %v946
        %v1187 = vunpack.c.h.b16 %v946
        %v1188 = vunpack.c.l.b16 %v947
        %v1189 = vunpack.c.h.b16 %v947
        %v1190 = vunpack.c.l.b16 %v948
        %v1191 = vunpack.c.h.b16 %v948
        %v1192 = vunpack.c.l.b16 %v949
        %v1193 = vunpack.c.h.b16 %v949
        %v1194 = vunpack.c.l.b16 %v950
        %v1195 = vunpack.c.h.b16 %v950
        %v1196 = vunpack.c.l.b16 %v951
        %v1197 = vunpack.c.h.b16 %v951
        %v1198 = vunpack.c.l.b16 %v952
        %v1199 = vunpack.c.h.b16 %v952
        %v1200 = vunpack.c.l.b16 %v953
        %v1201 = vunpack.c.h.b16 %v953
        %v1202 = vunpack.c.l.b16 %v954
        %v1203 = vunpack.c.h.b16 %v954
        %v1204 = vunpack.c.l.b16 %v955
        %v1205 = vunpack.c.h.b16 %v955
        %v1206 = vunpack.c.l.b16 %v956
        %v1207 = vunpack.c.h.b16 %v956
        %v1208 = vunpack.c.l.b16 %v957
        %v1209 = vunpack.c.h.b16 %v957
        %v1210 = vunpack.c.l.b16 %v958
        %v1211 = vunpack.c.h.b16 %v958
        %v1212 = vunpack.c.l.b16 %v959
        %v1213 = vunpack.c.h.b16 %v959
        %v1214 = vunpack.c.l.b16 %v960
        %v1215 = vunpack.c.h.b16 %v960
        %v1216 = vunpack.c.l.b16 %v961
        %v1217 = vunpack.c.h.b16 %v961
        %v1218 = vunpack.c.l.b16 %v962
        %v1219 = vunpack.c.h.b16 %v962
        %v1220 = vunpack.c.l.b16 %v963
        %v1221 = vunpack.c.h.b16 %v963
        %v1222 = vunpack.c.l.b16 %v964
        %v1223 = vunpack.c.h.b16 %v964
        %v1224 = vunpack.c.l.b16 %v965
        %v1225 = vunpack.c.h.b16 %v965
        %v1226 = vunpack.c.l.b16 %v966
        %v1227 = vunpack.c.h.b16 %v966
        %v1228 = vunpack.c.l.b16 %v967
        %v1229 = vunpack.c.h.b16 %v967
        %v1230 = vunpack.c.l.b16 %v968
        %v1231 = vunpack.c.h.b16 %v968
        %v1232 = vunpack.c.l.b16 %v969
        %v1233 = vunpack.c.h.b16 %v969
        %v1234 = vunpack.c.l.b16 %v970
        %v1235 = vunpack.c.h.b16 %v970
        %v1236 = vunpack.c.l.b16 %v971
        %v1237 = vunpack.c.h.b16 %v971
        %v1238 = vunpack.c.l.b16 %v972
        %v1239 = vunpack.c.h.b16 %v972
        %v1240 = vunpack.c.l.b16 %v973
        %v1241 = vunpack.c.h.b16 %v973
        %v1242 = vunpack.c.l.b16 %v974
        %v1243 = vunpack.c.h.b16 %v974
        %v1244 = vunpack.c.l.b16 %v975
        %v1245 = vunpack.c.h.b16 %v975
        %v1246 = vunpack.c.l.b16 %v976
        %v1247 = vunpack.c.h.b16 %v976
        %v1248 = vunpack.c.l.b16 %v977
        %v1249 = vunpack.c.h.b16 %v977
        %v1250 = vunpack.c.l.b16 %v978
        %v1251 = vunpack.c.h.b16 %v978
        %v1252 = vunpack.c.l.b16 %v979
        %v1253 = vunpack.c.h.b16 %v979
        %v1254 = vunpack.c.l.b16 %v980
        %v1255 = vunpack.c.h.b16 %v980
        %v1256 = vunpack.c.l.b16 %v981
        %v1257 = vunpack.c.h.b16 %v981
        %v1258 = vunpack.c.l.b16 %v982
        %v1259 = vunpack.c.h.b16 %v982
        %v1260 = vunpack.c.l.b16 %v983
        %v1261 = vunpack.c.h.b16 %v983
        %v1262 = vunpack.c.l.b16 %v984
        %v1263 = vunpack.c.h.b16 %v984
        %v1264 = vunpack.c.l.b16 %v985
        %v1265 = vunpack.c.h.b16 %v985
        %v1266 = vunpack.c.l.b16 %v986
        %v1267 = vunpack.c.h.b16 %v986
        %v1268 = vunpack.c.l.b16 %v987
        %v1269 = vunpack.c.h.b16 %v987
        %v1270 = vunpack.c.l.b16 %v988
        %v1271 = vunpack.c.h.b16 %v988
        %v1272 = vunpack.c.l.b16 %v989
        %v1273 = vunpack.c.h.b16 %v989
        %v1274 = vunpack.c.l.b16 %v990
        %v1275 = vunpack.c.h.b16 %v990
        %v1276 = vunpack.c.l.b16 %v991
        %v1277 = vunpack.c.h.b16 %v991
        %v1278 = vunpack.c.l.b16 %v992
        %v1279 = vunpack.c.h.b16 %v992
        %v1280 = vunpack.c.l.b16 %v993
        %v1281 = vunpack.c.h.b16 %v993
        %v1282 = vunpack.c.l.b16 %v994
        %v1283 = vunpack.c.h.b16 %v994
        %v1284 = vunpack.c.l.b16 %v995
        %v1285 = vunpack.c.h.b16 %v995
        %v1286 = vpack.c.b16 %v1100, %v1094
        %v1287 = vpack.c.b16 %v1101, %v1095
        %v1288 = vpack.c.b16 %v1102, %v1096
        %v1289 = vpack.c.b16 %v1103, %v1097
        %v1290 = vpack.c.b16 %v1104, %v1098
        %v1291 = vpack.c.b16 %v1105, %v1099
        %v1292 = vpack.c.b16 %v1112, %v1106
        %v1293 = vpack.c.b16 %v1113, %v1107
        %v1294 = vpack.c.b16 %v1114, %v1108
        %v1295 = vpack.c.b16 %v1115, %v1109
        %v1296 = vpack.c.b16 %v1116, %v1110
        %v1297 = vpack.c.b16 %v1117, %v1111
        %v1298 = vpack.c.b16 %v1124, %v1118
        %v1299 = vpack.c.b16 %v1125, %v1119
        %v1300 = vpack.c.b16 %v1126, %v1120
        %v1301 = vpack.c.b16 %v1127, %v1121
        %v1302 = vpack.c.b16 %v1128, %v1122
        %v1303 = vpack.c.b16 %v1129, %v1123
        %v1304 = vpack.c.b16 %v1136, %v1130
        %v1305 = vpack.c.b16 %v1137, %v1131
        %v1306 = vpack.c.b16 %v1138, %v1132
        %v1307 = vpack.c.b16 %v1139, %v1133
        %v1308 = vpack.c.b16 %v1140, %v1134
        %v1309 = vpack.c.b16 %v1141, %v1135
        %v1310 = vpack.c.b16 %v1148, %v1142
        %v1311 = vpack.c.b16 %v1149, %v1143
        %v1312 = vpack.c.b16 %v1150, %v1144
        %v1313 = vpack.c.b16 %v1151, %v1145
        %v1314 = vpack.c.b16 %v1152, %v1146
        %v1315 = vpack.c.b16 %v1153, %v1147
        %v1316 = vpack.c.b16 %v1160, %v1154
        %v1317 = vpack.c.b16 %v1161, %v1155
        %v1318 = vpack.c.b16 %v1162, %v1156
        %v1319 = vpack.c.b16 %v1163, %v1157
        %v1320 = vpack.c.b16 %v1164, %v1158
        %v1321 = vpack.c.b16 %v1165, %v1159
        %v1322 = vpack.c.b16 %v1172, %v1166
        %v1323 = vpack.c.b16 %v1173, %v1167
        %v1324 = vpack.c.b16 %v1174, %v1168
        %v1325 = vpack.c.b16 %v1175, %v1169
        %v1326 = vpack.c.b16 %v1176, %v1170
        %v1327 = vpack.c.b16 %v1177, %v1171
        %v1328 = vpack.c.b16 %v1184, %v1178
        %v1329 = vpack.c.b16 %v1185, %v1179
        %v1330 = vpack.c.b16 %v1186, %v1180
        %v1331 = vpack.c.b16 %v1187, %v1181
        %v1332 = vpack.c.b16 %v1188, %v1182
        %v1333 = vpack.c.b16 %v1189, %v1183
        %v1334 = vpack.c.b16 %v1196, %v1190
        %v1335 = vpack.c.b16 %v1197, %v1191
        %v1336 = vpack.c.b16 %v1198, %v1192
        %v1337 = vpack.c.b16 %v1199, %v1193
        %v1338 = vpack.c.b16 %v1200, %v1194
        %v1339 = vpack.c.b16 %v1201, %v1195
        %v1340 = vpack.c.b16 %v1208, %v1202
        %v1341 = vpack.c.b16 %v1209, %v1203
        %v1342 = vpack.c.b16 %v1210, %v1204
        %v1343 = vpack.c.b16 %v1211, %v1205
        %v1344 = vpack.c.b16 %v1212, %v1206
        %v1345 = vpack.c.b16 %v1213, %v1207
        %v1346 = vpack.c.b16 %v1220, %v1214
        %v1347 = vpack.c.b16 %v1221, %v1215
        %v1348 = vpack.c.b16 %v1222, %v1216
        %v1349 = vpack.c.b16 %v1223, %v1217
        %v1350 = vpack.c.b16 %v1224, %v1218
        %v1351 = vpack.c.b16 %v1225, %v1219
        %v1352 = vpack.c.b16 %v1232, %v1226
        %v1353 = vpack.c.b16 %v1233, %v1227
        %v1354 = vpack.c.b16 %v1234, %v1228
        %v1355 = vpack.c.b16 %v1235, %v1229
        %v1356 = vpack.c.b16 %v1236, %v1230
        %v1357 = vpack.c.b16 %v1237, %v1231
        %v1358 = vpack.c.b16 %v1244, %v1238
        %v1359 = vpack.c.b16 %v1245, %v1239
        %v1360 = vpack.c.b16 %v1246, %v1240
        %v1361 = vpack.c.b16 %v1247, %v1241
        %v1362 = vpack.c.b16 %v1248, %v1242
        %v1363 = vpack.c.b16 %v1249, %v1243
        %v1364 = vpack.c.b16 %v1256, %v1250
        %v1365 = vpack.c.b16 %v1257, %v1251
        %v1366 = vpack.c.b16 %v1258, %v1252
        %v1367 = vpack.c.b16 %v1259, %v1253
        %v1368 = vpack.c.b16 %v1260, %v1254
        %v1369 = vpack.c.b16 %v1261, %v1255
        %v1370 = vpack.c.b16 %v1268, %v1262
        %v1371 = vpack.c.b16 %v1269, %v1263
        %v1372 = vpack.c.b16 %v1270, %v1264
        %v1373 = vpack.c.b16 %v1271, %v1265
        %v1374 = vpack.c.b16 %v1272, %v1266
        %v1375 = vpack.c.b16 %v1273, %v1267
        %v1376 = vpack.c.b16 %v1280, %v1274
        %v1377 = vpack.c.b16 %v1281, %v1275
        %v1378 = vpack.c.b16 %v1282, %v1276
        %v1379 = vpack.c.b16 %v1283, %v1277
        %v1380 = vpack.c.b16 %v1284, %v1278
        %v1381 = vpack.c.b16 %v1285, %v1279
        %1478 = vmatprep.subr.bf16.mxu0 %v1287
        %1479 = vmatpush1.bf16.msra.mxu0 %v1286
        %1480 = vmatprep.subr.bf16.mxu0 %v1293
        %1481 = vmatpush1.bf16.msra.mxu0 %v1292
        %1482 = vmatprep.subr.bf16.mxu0 %v1299
        %1483 = vmatpush1.bf16.msra.mxu0 %v1298
        %1484 = vmatprep.subr.bf16.mxu0 %v1305
        %1485 = vmatpush1.bf16.msra.mxu0 %v1304
        %1486 = vmatprep.subr.bf16.mxu0 %v1311
        %1487 = vmatpush1.bf16.msra.mxu0 %v1310
        %1488 = vmatprep.subr.bf16.mxu0 %v1317
        %1489 = vmatpush1.bf16.msra.mxu0 %v1316
        %1490 = vmatprep.subr.bf16.mxu0 %v1323
        %1491 = vmatpush1.bf16.msra.mxu0 %v1322
        %1492 = vmatprep.subr.bf16.mxu0 %v1329
        %1493 = vmatpush1.bf16.msra.mxu0 %v1328
        %1494 = vmatprep.subr.bf16.mxu0 %v1335
        %1495 = vmatpush1.bf16.msra.mxu0 %v1334
        %1496 = vmatprep.subr.bf16.mxu0 %v1341
        %1497 = vmatpush1.bf16.msra.mxu0 %v1340
        %1498 = vmatprep.subr.bf16.mxu0 %v1347
        %1499 = vmatpush1.bf16.msra.mxu0 %v1346
        %1500 = vmatprep.subr.bf16.mxu0 %v1353
        %1501 = vmatpush1.bf16.msra.mxu0 %v1352
        %1502 = vmatprep.subr.bf16.mxu0 %v1359
        %1503 = vmatpush1.bf16.msra.mxu0 %v1358
        %1504 = vmatprep.subr.bf16.mxu0 %v1365
        %1505 = vmatpush1.bf16.msra.mxu0 %v1364
        %1506 = vmatprep.subr.bf16.mxu0 %v1371
        %1507 = vmatpush1.bf16.msra.mxu0 %v1370
        %1508 = vmatprep.subr.bf16.mxu0 %v1377
        %1509 = vmatpush1.bf16.msra.mxu0 %v1376
        %1510 = vmatprep.mubr.bf16.mxu0 %v997
        %1511 = vmatmul.mubr.bf16.gmra.mrb[0].mxu0 %v996
        %v1512 = vpop.f32.mrb[0].mxu0
        %v1513 = vadd.f32 0.0, %v1512
        %v1514 = vpop.f32.mrb[0].mxu0
        %v1515 = vadd.f32 0.0, %v1514
        %v1516 = vpop.f32.mrb[0].mxu0
        %v1517 = vpop.f32.mrb[0].mxu0
        %1518 = vdwg.mxu0
        %1519 = vmatprep.subr.bf16.mxu0 %v1289
        %1520 = vmatpush1.bf16.msra.mxu0 %v1288
        %1521 = vmatprep.subr.bf16.mxu0 %v1295
        %1522 = vmatpush1.bf16.msra.mxu0 %v1294
        %1523 = vmatprep.subr.bf16.mxu0 %v1301
        %1524 = vmatpush1.bf16.msra.mxu0 %v1300
        %1525 = vmatprep.subr.bf16.mxu0 %v1307
        %1526 = vmatpush1.bf16.msra.mxu0 %v1306
        %1527 = vmatprep.subr.bf16.mxu0 %v1313
        %1528 = vmatpush1.bf16.msra.mxu0 %v1312
        %1529 = vmatprep.subr.bf16.mxu0 %v1319
        %1530 = vmatpush1.bf16.msra.mxu0 %v1318
        %1531 = vmatprep.subr.bf16.mxu0 %v1325
        %1532 = vmatpush1.bf16.msra.mxu0 %v1324
        %1533 = vmatprep.subr.bf16.mxu0 %v1331
        %1534 = vmatpush1.bf16.msra.mxu0 %v1330
        %1535 = vmatprep.subr.bf16.mxu0 %v1337
        %1536 = vmatpush1.bf16.msra.mxu0 %v1336
        %1537 = vmatprep.subr.bf16.mxu0 %v1343
        %1538 = vmatpush1.bf16.msra.mxu0 %v1342
        %1539 = vmatprep.subr.bf16.mxu0 %v1349
        %1540 = vmatpush1.bf16.msra.mxu0 %v1348
        %1541 = vmatprep.subr.bf16.mxu0 %v1355
        %1542 = vmatpush1.bf16.msra.mxu0 %v1354
        %1543 = vmatprep.subr.bf16.mxu0 %v1361
        %1544 = vmatpush1.bf16.msra.mxu0 %v1360
        %1545 = vmatprep.subr.bf16.mxu0 %v1367
        %1546 = vmatpush1.bf16.msra.mxu0 %v1366
        %1547 = vmatprep.subr.bf16.mxu0 %v1373
        %1548 = vmatpush1.bf16.msra.mxu0 %v1372
        %1549 = vmatprep.subr.bf16.mxu0 %v1379
        %1550 = vmatpush1.bf16.msra.mxu0 %v1378
        %1551 = vmatprep.mubr.bf16.mxu0 %v997
        %1552 = vmatmul.mubr.bf16.gmra.mrb[0].mxu0 %v996
        %v1553 = vpop.f32.mrb[0].mxu0
        %v1554 = vadd.f32 0.0, %v1553
        %v1555 = vpop.f32.mrb[0].mxu0
        %v1556 = vadd.f32 0.0, %v1555
        %v1557 = vpop.f32.mrb[0].mxu0
        %v1558 = vpop.f32.mrb[0].mxu0
        %1559 = vdwg.mxu0
        %1560 = vmatprep.subr.bf16.mxu0 %v1291
        %1561 = vmatpush1.bf16.msra.mxu0 %v1290
        %1562 = vmatprep.subr.bf16.mxu0 %v1297
        %1563 = vmatpush1.bf16.msra.mxu0 %v1296
        %1564 = vmatprep.subr.bf16.mxu0 %v1303
        %1565 = vmatpush1.bf16.msra.mxu0 %v1302
        %1566 = vmatprep.subr.bf16.mxu0 %v1309
        %1567 = vmatpush1.bf16.msra.mxu0 %v1308
        %1568 = vmatprep.subr.bf16.mxu0 %v1315
        %1569 = vmatpush1.bf16.msra.mxu0 %v1314
        %1570 = vmatprep.subr.bf16.mxu0 %v1321
        %1571 = vmatpush1.bf16.msra.mxu0 %v1320
        %1572 = vmatprep.subr.bf16.mxu0 %v1327
        %1573 = vmatpush1.bf16.msra.mxu0 %v1326
        %1574 = vmatprep.subr.bf16.mxu0 %v1333
        %1575 = vmatpush1.bf16.msra.mxu0 %v1332
        %1576 = vmatprep.subr.bf16.mxu0 %v1339
        %1577 = vmatpush1.bf16.msra.mxu0 %v1338
        %1578 = vmatprep.subr.bf16.mxu0 %v1345
        %1579 = vmatpush1.bf16.msra.mxu0 %v1344
        %1580 = vmatprep.subr.bf16.mxu0 %v1351
        %1581 = vmatpush1.bf16.msra.mxu0 %v1350
        %1582 = vmatprep.subr.bf16.mxu0 %v1357
        %1583 = vmatpush1.bf16.msra.mxu0 %v1356
        %1584 = vmatprep.subr.bf16.mxu0 %v1363
        %1585 = vmatpush1.bf16.msra.mxu0 %v1362
        %1586 = vmatprep.subr.bf16.mxu0 %v1369
        %1587 = vmatpush1.bf16.msra.mxu0 %v1368
        %1588 = vmatprep.subr.bf16.mxu0 %v1375
        %1589 = vmatpush1.bf16.msra.mxu0 %v1374
        %1590 = vmatprep.subr.bf16.mxu0 %v1381
        %1591 = vmatpush1.bf16.msra.mxu0 %v1380
        %1592 = vmatprep.mubr.bf16.mxu0 %v997
        %1593 = vmatmul.mubr.bf16.gmra.mrb[0].mxu0 %v996
        %v1594 = vpop.f32.mrb[0].mxu0
        %v1595 = vadd.f32 0.0, %v1594
        %v1596 = vpop.f32.mrb[0].mxu0
        %v1597 = vadd.f32 0.0, %v1596
        %v1598 = vpop.f32.mrb[0].mxu0
        %v1599 = vpop.f32.mrb[0].mxu0
        %1600 = vdwg.mxu0
        %v1601 = vld [vmem:[%s806] sm:$0xff]
        %v1602 = vlaneseq
        %v1603 = vand.u32 %v1602, 127
        %vm1604 = vcmp.lt.s32.totalorder %v1603, 64
        %v1605 = vsel %vm1604, -1.0, 1.0
        %v1606 = vld [vmem:[%s810] sm:$0xff]
        %v1607 = vmul.f32 %v1605, %v1606
        %v1608 = vmul.f32 %v1513, %v1601
        %1609 = vrot.lane.b32.xlu0 %v1513, 64
        %v1610 = vpop.permute.xlu0 %1609
        %v1611 = vmul.f32 %v1610, %v1607
        %v1612 = vadd.f32 %v1608, %v1611
        %v1613 = vmul.f32 %v1554, %v1601
        %1614 = vrot.lane.b32.xlu0 %v1554, 64
        %v1615 = vpop.permute.xlu0 %1614
        %v1616 = vmul.f32 %v1615, %v1607
        %v1617 = vadd.f32 %v1613, %v1616
        %1618 = vst [vmem:[#allocation3] sm:$0xff] %v1612
        %v1619 = vpack.c.bf16 %v1617, %v1617
        %1620 = vst [vmem:[%s854] sm:$0xf] %v1619
        %v1621 = vpack.c.bf16 %v1595, %v1595
        %1622 = vst [vmem:[%s863] sm:$0xf] %v1621
        %1623 = vst [vmem:[#allocation4 + $0x8] sm:$0xff] %v1617
        %1624 = vst [vmem:[#allocation5 + $0x8] sm:$0xff] %v1595
        %v1625 = vmul.f32 %v1515, %v1601
        %1626 = vrot.lane.b32.xlu0 %v1515, 64
        %v1627 = vpop.permute.xlu0 %1626
        %v1628 = vmul.f32 %v1627, %v1607
        %v1629 = vadd.f32 %v1625, %v1628
        %v1630 = vmul.f32 %v1556, %v1601
        %1631 = vrot.lane.b32.xlu0 %v1556, 64
        %v1632 = vpop.permute.xlu0 %1631
        %v1633 = vmul.f32 %v1632, %v1607
        %v1634 = vadd.f32 %v1630, %v1633
        %s1635 = scalar_lea.vmem [#allocation3], 8
        %1636 = vst [vmem:[%s1635] sm:$0xff] %v1629
        %v1637 = vpack.c.bf16 %v1634, %v1634
        %s1638 = scalar_lea.vmem %s854, 4
        %1639 = vst [vmem:[%s1638] sm:$0xf] %v1637
        %v1640 = vpack.c.bf16 %v1597, %v1597
        %s1641 = scalar_lea.vmem %s863, 4
        %1642 = vst [vmem:[%s1641] sm:$0xf] %v1640
        %s1643 = scalar_lea.vmem [#allocation4], 16
        %1644 = vst [vmem:[%s1643 + $0x8] sm:$0xff] %v1634
        %s1645 = scalar_lea.vmem [#allocation5], 16
        %1646 = vst [vmem:[%s1645 + $0x8] sm:$0xff] %v1597
        %v1647 = vld [vmem:[%s819] sm:$0xf]
        %v1648 = vld [vmem:[%s819 + $0x4] sm:$0xf]
        %v1649 = vunpack.c.l.bf16 %v1647
        %v1650 = vunpack.c.l.bf16 %v1648
        %1651 = vst [vmem:[#allocation4] sm:$0xff] %v1649
        %1652 = vst [vmem:[#allocation4 + $0x10] sm:$0xff] %v1650
        %v1653 = vld [vmem:[%s828] sm:$0xf]
        %v1654 = vld [vmem:[%s828 + $0x4] sm:$0xf]
        %v1655 = vunpack.c.l.bf16 %v1653
        %v1656 = vunpack.c.l.bf16 %v1654
        %1657 = vst [vmem:[#allocation5] sm:$0xff] %v1655
        %1658 = vst [vmem:[#allocation5 + $0x10] sm:$0xff] %v1656
        %v1659 = vlaneseq
        %v1660 = vshrl.u32 %v1659, 7
        %v1661 = vadd.s32 %v1660, 8
        %vm1662 = vcmp.le.s32.totalorder %v1603, %v1661
        %v1663 = vld [vmem:[%s802] sm:$0x1]
        %vm1664 = vcmp.gt.f32.partialorder %v1663, 0.0
        %v1665 = vsel %vm1664, 1, 0
        %v1666 = vlaneseq
        %v1667 = vshrl.u32 %v1666, 7
        %v1668 = vsub.s32 0, %v1667
        %v1669 = vrot.slane %v1665, %v1668
        %vm1670 = vcmp.eq.s32.totalorder %v1669, 1
        %vm1671 = vmand %vm1662, %vm1670
        %v1672 = vsel %vm1671, 0.0, -50.0
        %v1673 = vld [vmem:[#allocation3] sm:$0xff]
        %v1674 = vld [vmem:[#allocation3 + $0x8] sm:$0xff]
        %v1675 = vpack.c.bf16 %v1673, %v1673
        %v1676 = vpack.c.bf16 %v1674, %v1674
        %v1677 = vld [vmem:[#allocation4] sm:$0xff]
        %v1678 = vld [vmem:[#allocation4 + $0x8] sm:$0xff]
        %v1679 = vld [vmem:[#allocation4 + $0x10] sm:$0xff]
        %v1680 = vld [vmem:[#allocation4 + $0x18] sm:$0xff]
        %v1681 = vpack.c.bf16 %v1678, %v1677
        %v1682 = vpack.c.bf16 %v1680, %v1679
        %v1683 = vld [vmem:[#allocation5] sm:$0xff]
        %v1684 = vld [vmem:[#allocation5 + $0x8] sm:$0xff]
        %v1685 = vld [vmem:[#allocation5 + $0x10] sm:$0xff]
        %v1686 = vld [vmem:[#allocation5 + $0x18] sm:$0xff]
        %v1687 = vpack.c.bf16 %v1684, %v1683
        %v1688 = vpack.c.bf16 %v1686, %v1685
        %1689 = vmatprep.subr.bf16.mxu0 0
        %1690 = vmatpush1.bf16.xpose.msra.mxu0 %v1681
        %1691 = vmatprep.subr.bf16.mxu0 0
        %1692 = vmatpush1.bf16.xpose.msra.mxu0 0
        %1693 = vmatprep.subr.bf16.mxu0 0
        %1694 = vmatpush1.bf16.xpose.msra.mxu0 0
        %1695 = vmatprep.subr.bf16.mxu0 0
        %1696 = vmatpush1.bf16.xpose.msra.mxu0 0
        %1697 = vmatprep.subr.bf16.mxu0 0
        %1698 = vmatpush1.bf16.xpose.msra.mxu0 0
        %1699 = vmatprep.subr.bf16.mxu0 0
        %1700 = vmatpush1.bf16.xpose.msra.mxu0 0
        %1701 = vmatprep.subr.bf16.mxu0 0
        %1702 = vmatpush1.bf16.xpose.msra.mxu0 0
        %1703 = vmatprep.subr.bf16.mxu0 0
        %1704 = vmatpush1.bf16.xpose.msra.mxu0 0
        %1705 = vmatprep.subr.bf16.mxu0 0
        %1706 = vmatpush1.bf16.xpose.msra.mxu0 0
        %1707 = vmatprep.subr.bf16.mxu0 0
        %1708 = vmatpush1.bf16.xpose.msra.mxu0 0
        %1709 = vmatprep.subr.bf16.mxu0 0
        %1710 = vmatpush1.bf16.xpose.msra.mxu0 0
        %1711 = vmatprep.subr.bf16.mxu0 0
        %1712 = vmatpush1.bf16.xpose.msra.mxu0 0
        %1713 = vmatprep.subr.bf16.mxu0 0
        %1714 = vmatpush1.bf16.xpose.msra.mxu0 0
        %1715 = vmatprep.subr.bf16.mxu0 0
        %1716 = vmatpush1.bf16.xpose.msra.mxu0 0
        %1717 = vmatprep.subr.bf16.mxu0 0
        %1718 = vmatpush1.bf16.xpose.msra.mxu0 0
        %1719 = vmatprep.subr.bf16.mxu0 0
        %1720 = vmatpush1.bf16.xpose.msra.mxu0 0
        %1721 = vmatprep.mubr.bf16.mxu0 0
        %1722 = vmatmul.mubr.bf16.gmra.mrb[0].mxu0 %v1675
        %v1723 = vpop.f32.mrb[0].mxu0
        %v1724 = vadd.f32 %v1672, %v1723
        %v1725 = vpop.f32.mrb[0].mxu0
        %v1726 = vpop.f32.mrb[0].mxu0
        %v1727 = vpop.f32.mrb[0].mxu0
        %1728 = vdwg.mxu0
        %1729 = vmatprep.subr.bf16.mxu0 0
        %1730 = vmatpush1.bf16.xpose.msra.mxu0 %v1682
        %1731 = vmatprep.subr.bf16.mxu0 0
        %1732 = vmatpush1.bf16.xpose.msra.mxu0 0
        %1733 = vmatprep.subr.bf16.mxu0 0
        %1734 = vmatpush1.bf16.xpose.msra.mxu0 0
        %1735 = vmatprep.subr.bf16.mxu0 0
        %1736 = vmatpush1.bf16.xpose.msra.mxu0 0
        %1737 = vmatprep.subr.bf16.mxu0 0
        %1738 = vmatpush1.bf16.xpose.msra.mxu0 0
        %1739 = vmatprep.subr.bf16.mxu0 0
        %1740 = vmatpush1.bf16.xpose.msra.mxu0 0
        %1741 = vmatprep.subr.bf16.mxu0 0
        %1742 = vmatpush1.bf16.xpose.msra.mxu0 0
        %1743 = vmatprep.subr.bf16.mxu0 0
        %1744 = vmatpush1.bf16.xpose.msra.mxu0 0
        %1745 = vmatprep.subr.bf16.mxu0 0
        %1746 = vmatpush1.bf16.xpose.msra.mxu0 0
        %1747 = vmatprep.subr.bf16.mxu0 0
        %1748 = vmatpush1.bf16.xpose.msra.mxu0 0
        %1749 = vmatprep.subr.bf16.mxu0 0
        %1750 = vmatpush1.bf16.xpose.msra.mxu0 0
        %1751 = vmatprep.subr.bf16.mxu0 0
        %1752 = vmatpush1.bf16.xpose.msra.mxu0 0
        %1753 = vmatprep.subr.bf16.mxu0 0
        %1754 = vmatpush1.bf16.xpose.msra.mxu0 0
        %1755 = vmatprep.subr.bf16.mxu0 0
        %1756 = vmatpush1.bf16.xpose.msra.mxu0 0
        %1757 = vmatprep.subr.bf16.mxu0 0
        %1758 = vmatpush1.bf16.xpose.msra.mxu0 0
        %1759 = vmatprep.subr.bf16.mxu0 0
        %1760 = vmatpush1.bf16.xpose.msra.mxu0 0
        %1761 = vmatprep.mubr.bf16.mxu0 0
        %1762 = vmatmul.mubr.bf16.gmra.mrb[0].mxu0 %v1676
        %v1763 = vpop.f32.mrb[0].mxu0
        %v1764 = vadd.f32 %v1672, %v1763
        %v1765 = vpop.f32.mrb[0].mxu0
        %v1766 = vpop.f32.mrb[0].mxu0
        %v1767 = vpop.f32.mrb[0].mxu0
        %1768 = vdwg.mxu0
        %vm1769 = vcmask 130048
        %v1770 = vsel %vm1769, %v1724, -inf
        %1771 = vmax.xlane.f32.xlu0 %v1770
        %v1772 = vpop.xlane.xlu0 %1771
        %v1773 = vsel %vm1769, %v1764, -inf
        %1774 = vmax.xlane.f32.xlu0 %v1773
        %v1775 = vpop.xlane.xlu0 %1774
        %v1776 = vsub.f32 %v1724, %v1772
        %v1777 = vsub.f32 %v1764, %v1775
        %v1778 = vmul.f32 %v1776, 1.442695
        %v1779 = vpow.pop %v1778
        %v1780 = vmul.f32 %v1777, 1.442695
        %v1781 = vpow.pop %v1780
        %v1782 = vsel %vm1769, %v1779, 0.0
        %1783 = vadd.xlane.f32.xlu0 %v1782
        %v1784 = vpop.xlane.xlu0 %1783
        %v1785 = vsel %vm1769, %v1781, 0.0
        %1786 = vadd.xlane.f32.xlu0 %v1785
        %v1787 = vpop.xlane.xlu0 %1786
        %v1788 = vrcp.pop %v1784
        %v1789 = vrcp.pop %v1787
        %v1790 = vmul.f32 %v1779, %v1788
        %v1791 = vmul.f32 %v1781, %v1789
        %v1792 = vpack.c.bf16 %v1790, %v1790
        %v1793 = vpack.c.bf16 %v1791, %v1791
        %v1795 = vsel %vm1769, %v1792, 0
        %1797 = vmatprep.subr.bf16.mxu0 0
        %1798 = vmatpush1.bf16.msra.mxu0 %v1687
        %1799 = vmatprep.subr.bf16.mxu0 0
        %1800 = vmatpush1.bf16.msra.mxu0 0
        %1801 = vmatprep.subr.bf16.mxu0 0
        %1802 = vmatpush1.bf16.msra.mxu0 0
        %1803 = vmatprep.subr.bf16.mxu0 0
        %1804 = vmatpush1.bf16.msra.mxu0 0
        %1805 = vmatprep.subr.bf16.mxu0 0
        %1806 = vmatpush1.bf16.msra.mxu0 0
        %1807 = vmatprep.subr.bf16.mxu0 0
        %1808 = vmatpush1.bf16.msra.mxu0 0
        %1809 = vmatprep.subr.bf16.mxu0 0
        %1810 = vmatpush1.bf16.msra.mxu0 0
        %1811 = vmatprep.subr.bf16.mxu0 0
        %1812 = vmatpush1.bf16.msra.mxu0 0
        %1813 = vmatprep.subr.bf16.mxu0 0
        %1814 = vmatpush1.bf16.msra.mxu0 0
        %1815 = vmatprep.subr.bf16.mxu0 0
        %1816 = vmatpush1.bf16.msra.mxu0 0
        %1817 = vmatprep.subr.bf16.mxu0 0
        %1818 = vmatpush1.bf16.msra.mxu0 0
        %1819 = vmatprep.subr.bf16.mxu0 0
        %1820 = vmatpush1.bf16.msra.mxu0 0
        %1821 = vmatprep.subr.bf16.mxu0 0
        %1822 = vmatpush1.bf16.msra.mxu0 0
        %1823 = vmatprep.subr.bf16.mxu0 0
        %1824 = vmatpush1.bf16.msra.mxu0 0
        %1825 = vmatprep.subr.bf16.mxu0 0
        %1826 = vmatpush1.bf16.msra.mxu0 0
        %1827 = vmatprep.subr.bf16.mxu0 0
        %1828 = vmatpush1.bf16.msra.mxu0 0
        %1829 = vmatprep.mubr.bf16.mxu0 0
        %1830 = vmatmul.mubr.bf16.gmra.mrb[0].mxu0 %v1795
        %v1831 = vpop.f32.mrb[0].mxu0
        %v1832 = vadd.f32 0.0, %v1831
        %v1833 = vpop.f32.mrb[0].mxu0
        %v1834 = vpop.f32.mrb[0].mxu0
        %v1835 = vpop.f32.mrb[0].mxu0
        %1836 = vdwg.mxu0
        %v1838 = vsel %vm1769, %v1793, 0
        %1840 = vmatprep.subr.bf16.mxu0 0
        %1841 = vmatpush1.bf16.msra.mxu0 %v1688
        %1842 = vmatprep.subr.bf16.mxu0 0
        %1843 = vmatpush1.bf16.msra.mxu0 0
        %1844 = vmatprep.subr.bf16.mxu0 0
        %1845 = vmatpush1.bf16.msra.mxu0 0
        %1846 = vmatprep.subr.bf16.mxu0 0
        %1847 = vmatpush1.bf16.msra.mxu0 0
        %1848 = vmatprep.subr.bf16.mxu0 0
        %1849 = vmatpush1.bf16.msra.mxu0 0
        %1850 = vmatprep.subr.bf16.mxu0 0
        %1851 = vmatpush1.bf16.msra.mxu0 0
        %1852 = vmatprep.subr.bf16.mxu0 0
        %1853 = vmatpush1.bf16.msra.mxu0 0
        %1854 = vmatprep.subr.bf16.mxu0 0
        %1855 = vmatpush1.bf16.msra.mxu0 0
        %1856 = vmatprep.subr.bf16.mxu0 0
        %1857 = vmatpush1.bf16.msra.mxu0 0
        %1858 = vmatprep.subr.bf16.mxu0 0
        %1859 = vmatpush1.bf16.msra.mxu0 0
        %1860 = vmatprep.subr.bf16.mxu0 0
        %1861 = vmatpush1.bf16.msra.mxu0 0
        %1862 = vmatprep.subr.bf16.mxu0 0
        %1863 = vmatpush1.bf16.msra.mxu0 0
        %1864 = vmatprep.subr.bf16.mxu0 0
        %1865 = vmatpush1.bf16.msra.mxu0 0
        %1866 = vmatprep.subr.bf16.mxu0 0
        %1867 = vmatpush1.bf16.msra.mxu0 0
        %1868 = vmatprep.subr.bf16.mxu0 0
        %1869 = vmatpush1.bf16.msra.mxu0 0
        %1870 = vmatprep.subr.bf16.mxu0 0
        %1871 = vmatpush1.bf16.msra.mxu0 0
        %1872 = vmatprep.mubr.bf16.mxu0 0
        %1873 = vmatmul.mubr.bf16.gmra.mrb[0].mxu0 %v1838
        %v1874 = vpop.f32.mrb[0].mxu0
        %v1875 = vadd.f32 0.0, %v1874
        %v1876 = vpop.f32.mrb[0].mxu0
        %v1877 = vpop.f32.mrb[0].mxu0
        %v1878 = vpop.f32.mrb[0].mxu0
        %1879 = vdwg.mxu0
        %v1880 = vld [vmem:[%s833] sm:$0xff]
        %v1881 = vld [vmem:[%s833 + $0x8] sm:$0xff]
        %v1882 = vld [vmem:[%s833 + $0x10] sm:$0xff]
        %v1883 = vld [vmem:[%s833 + $0x18] sm:$0xff]
        %v1884 = vld [vmem:[%s833 + $0x20] sm:$0xff]
        %v1885 = vld [vmem:[%s833 + $0x28] sm:$0xff]
        %v1886 = vld [vmem:[%s833 + $0x30] sm:$0xff]
        %v1887 = vld [vmem:[%s833 + $0x38] sm:$0xff]
        %v1888 = vld [vmem:[%s833 + $0x40] sm:$0xff]
        %v1889 = vld [vmem:[%s833 + $0x48] sm:$0xff]
        %v1890 = vld [vmem:[%s833 + $0x50] sm:$0xff]
        %v1891 = vld [vmem:[%s833 + $0x58] sm:$0xff]
        %v1892 = vld [vmem:[%s833 + $0x60] sm:$0xff]
        %v1893 = vld [vmem:[%s833 + $0x68] sm:$0xff]
        %v1894 = vld [vmem:[%s833 + $0x70] sm:$0xff]
        %v1895 = vld [vmem:[%s833 + $0x78] sm:$0xff]
        %v1896 = vld [vmem:[%s833 + $0x80] sm:$0xff]
        %v1897 = vld [vmem:[%s833 + $0x88] sm:$0xff]
        %v1898 = vld [vmem:[%s833 + $0x90] sm:$0xff]
        %v1899 = vld [vmem:[%s833 + $0x98] sm:$0xff]
        %v1900 = vld [vmem:[%s833 + $0xa0] sm:$0xff]
        %v1901 = vld [vmem:[%s833 + $0xa8] sm:$0xff]
        %v1902 = vld [vmem:[%s833 + $0xb0] sm:$0xff]
        %v1903 = vld [vmem:[%s833 + $0xb8] sm:$0xff]
        %v1904 = vld [vmem:[%s833 + $0xc0] sm:$0xff]
        %v1905 = vld [vmem:[%s833 + $0xc8] sm:$0xff]
        %v1906 = vld [vmem:[%s833 + $0xd0] sm:$0xff]
        %v1907 = vld [vmem:[%s833 + $0xd8] sm:$0xff]
        %v1908 = vld [vmem:[%s833 + $0xe0] sm:$0xff]
        %v1909 = vld [vmem:[%s833 + $0xe8] sm:$0xff]
        %v1910 = vld [vmem:[%s833 + $0xf0] sm:$0xff]
        %v1911 = vld [vmem:[%s833 + $0xf8] sm:$0xff]
        %v1912 = vpack.c.bf16 %v1832, %v1832
        %v1913 = vpack.c.bf16 %v1875, %v1875
        %v1946 = vunpack.c.l.b16 %v1880
        %v1947 = vunpack.c.h.b16 %v1880
        %v1948 = vunpack.c.l.b16 %v1881
        %v1949 = vunpack.c.h.b16 %v1881
        %v1950 = vunpack.c.l.b16 %v1882
        %v1951 = vunpack.c.h.b16 %v1882
        %v1952 = vunpack.c.l.b16 %v1883
        %v1953 = vunpack.c.h.b16 %v1883
        %v1954 = vunpack.c.l.b16 %v1884
        %v1955 = vunpack.c.h.b16 %v1884
        %v1956 = vunpack.c.l.b16 %v1885
        %v1957 = vunpack.c.h.b16 %v1885
        %v1958 = vunpack.c.l.b16 %v1886
        %v1959 = vunpack.c.h.b16 %v1886
        %v1960 = vunpack.c.l.b16 %v1887
        %v1961 = vunpack.c.h.b16 %v1887
        %v1962 = vunpack.c.l.b16 %v1888
        %v1963 = vunpack.c.h.b16 %v1888
        %v1964 = vunpack.c.l.b16 %v1889
        %v1965 = vunpack.c.h.b16 %v1889
        %v1966 = vunpack.c.l.b16 %v1890
        %v1967 = vunpack.c.h.b16 %v1890
        %v1968 = vunpack.c.l.b16 %v1891
        %v1969 = vunpack.c.h.b16 %v1891
        %v1970 = vunpack.c.l.b16 %v1892
        %v1971 = vunpack.c.h.b16 %v1892
        %v1972 = vunpack.c.l.b16 %v1893
        %v1973 = vunpack.c.h.b16 %v1893
        %v1974 = vunpack.c.l.b16 %v1894
        %v1975 = vunpack.c.h.b16 %v1894
        %v1976 = vunpack.c.l.b16 %v1895
        %v1977 = vunpack.c.h.b16 %v1895
        %v1978 = vunpack.c.l.b16 %v1896
        %v1979 = vunpack.c.h.b16 %v1896
        %v1980 = vunpack.c.l.b16 %v1897
        %v1981 = vunpack.c.h.b16 %v1897
        %v1982 = vunpack.c.l.b16 %v1898
        %v1983 = vunpack.c.h.b16 %v1898
        %v1984 = vunpack.c.l.b16 %v1899
        %v1985 = vunpack.c.h.b16 %v1899
        %v1986 = vunpack.c.l.b16 %v1900
        %v1987 = vunpack.c.h.b16 %v1900
        %v1988 = vunpack.c.l.b16 %v1901
        %v1989 = vunpack.c.h.b16 %v1901
        %v1990 = vunpack.c.l.b16 %v1902
        %v1991 = vunpack.c.h.b16 %v1902
        %v1992 = vunpack.c.l.b16 %v1903
        %v1993 = vunpack.c.h.b16 %v1903
        %v1994 = vunpack.c.l.b16 %v1904
        %v1995 = vunpack.c.h.b16 %v1904
        %v1996 = vunpack.c.l.b16 %v1905
        %v1997 = vunpack.c.h.b16 %v1905
        %v1998 = vunpack.c.l.b16 %v1906
        %v1999 = vunpack.c.h.b16 %v1906
        %v2000 = vunpack.c.l.b16 %v1907
        %v2001 = vunpack.c.h.b16 %v1907
        %v2002 = vunpack.c.l.b16 %v1908
        %v2003 = vunpack.c.h.b16 %v1908
        %v2004 = vunpack.c.l.b16 %v1909
        %v2005 = vunpack.c.h.b16 %v1909
        %v2006 = vunpack.c.l.b16 %v1910
        %v2007 = vunpack.c.h.b16 %v1910
        %v2008 = vunpack.c.l.b16 %v1911
        %v2009 = vunpack.c.h.b16 %v1911
        %v2010 = vpack.c.b16 %v1948, %v1946
        %v2011 = vpack.c.b16 %v1949, %v1947
        %v2012 = vpack.c.b16 %v1952, %v1950
        %v2013 = vpack.c.b16 %v1953, %v1951
        %v2014 = vpack.c.b16 %v1956, %v1954
        %v2015 = vpack.c.b16 %v1957, %v1955
        %v2016 = vpack.c.b16 %v1960, %v1958
        %v2017 = vpack.c.b16 %v1961, %v1959
        %v2018 = vpack.c.b16 %v1964, %v1962
        %v2019 = vpack.c.b16 %v1965, %v1963
        %v2020 = vpack.c.b16 %v1968, %v1966
        %v2021 = vpack.c.b16 %v1969, %v1967
        %v2022 = vpack.c.b16 %v1972, %v1970
        %v2023 = vpack.c.b16 %v1973, %v1971
        %v2024 = vpack.c.b16 %v1976, %v1974
        %v2025 = vpack.c.b16 %v1977, %v1975
        %v2026 = vpack.c.b16 %v1980, %v1978
        %v2027 = vpack.c.b16 %v1981, %v1979
        %v2028 = vpack.c.b16 %v1984, %v1982
        %v2029 = vpack.c.b16 %v1985, %v1983
        %v2030 = vpack.c.b16 %v1988, %v1986
        %v2031 = vpack.c.b16 %v1989, %v1987
        %v2032 = vpack.c.b16 %v1992, %v1990
        %v2033 = vpack.c.b16 %v1993, %v1991
        %v2034 = vpack.c.b16 %v1996, %v1994
        %v2035 = vpack.c.b16 %v1997, %v1995
        %v2036 = vpack.c.b16 %v2000, %v1998
        %v2037 = vpack.c.b16 %v2001, %v1999
        %v2038 = vpack.c.b16 %v2004, %v2002
        %v2039 = vpack.c.b16 %v2005, %v2003
        %v2040 = vpack.c.b16 %v2008, %v2006
        %v2041 = vpack.c.b16 %v2009, %v2007
        %2074 = vmatprep.subr.bf16.mxu0 %v2011
        %2075 = vmatpush1.bf16.msra.mxu0 %v2010
        %2076 = vmatprep.subr.bf16.mxu0 %v2013
        %2077 = vmatpush1.bf16.msra.mxu0 %v2012
        %2078 = vmatprep.subr.bf16.mxu0 %v2015
        %2079 = vmatpush1.bf16.msra.mxu0 %v2014
        %2080 = vmatprep.subr.bf16.mxu0 %v2017
        %2081 = vmatpush1.bf16.msra.mxu0 %v2016
        %2082 = vmatprep.subr.bf16.mxu0 %v2019
        %2083 = vmatpush1.bf16.msra.mxu0 %v2018
        %2084 = vmatprep.subr.bf16.mxu0 %v2021
        %2085 = vmatpush1.bf16.msra.mxu0 %v2020
        %2086 = vmatprep.subr.bf16.mxu0 %v2023
        %2087 = vmatpush1.bf16.msra.mxu0 %v2022
        %2088 = vmatprep.subr.bf16.mxu0 %v2025
        %2089 = vmatpush1.bf16.msra.mxu0 %v2024
        %2090 = vmatprep.subr.bf16.mxu0 %v2027
        %2091 = vmatpush1.bf16.msra.mxu0 %v2026
        %2092 = vmatprep.subr.bf16.mxu0 %v2029
        %2093 = vmatpush1.bf16.msra.mxu0 %v2028
        %2094 = vmatprep.subr.bf16.mxu0 %v2031
        %2095 = vmatpush1.bf16.msra.mxu0 %v2030
        %2096 = vmatprep.subr.bf16.mxu0 %v2033
        %2097 = vmatpush1.bf16.msra.mxu0 %v2032
        %2098 = vmatprep.subr.bf16.mxu0 %v2035
        %2099 = vmatpush1.bf16.msra.mxu0 %v2034
        %2100 = vmatprep.subr.bf16.mxu0 %v2037
        %2101 = vmatpush1.bf16.msra.mxu0 %v2036
        %2102 = vmatprep.subr.bf16.mxu0 %v2039
        %2103 = vmatpush1.bf16.msra.mxu0 %v2038
        %2104 = vmatprep.subr.bf16.mxu0 %v2041
        %2105 = vmatpush1.bf16.msra.mxu0 %v2040
        %2106 = vmatprep.mubr.bf16.mxu0 %v1913
        %2107 = vmatmul.mubr.bf16.gmra.mrb[0].mxu0 %v1912
        %v2108 = vpop.f32.mrb[0].mxu0
        %v2109 = vadd.f32 0.0, %v2108
        %v2110 = vpop.f32.mrb[0].mxu0
        %v2111 = vadd.f32 0.0, %v2110
        %v2112 = vpop.f32.mrb[0].mxu0
        %v2113 = vpop.f32.mrb[0].mxu0
        %2114 = vdwg.mxu0
        %v2115 = vadd.f32 %v873, %v2109
        %v2116 = vadd.f32 %v874, %v2111
        %v2117 = vld [vmem:[%s841] sm:$0x3]
        %v2118 = vmul.f32 %v2115, %v2115
        %v2119 = vmul.f32 %v2116, %v2116
        %v2120 = vadd.f32 %v2118, %v2119
        %2121 = vadd.xlane.f32.xlu0 %v2120
        %v2122 = vpop.xlane.xlu0 %2121
        %v2123 = vmul.f32 %v2122, %v881
        %v2124 = vadd.f32 %v2123, 1e-05
        %v2125 = vrsqrt.pop %v2124
        %v2126 = vmul.f32 %v2115, %v2125
        %v2127 = vmul.f32 %v2116, %v2125
        %v2129 = vlaneseq
        %v2130 = vshrl.u32 %v2129, 7
        %v2131 = vsub.s32 0, %v2130
        %v2132 = vrot.slane %v2117, %v2131
        %v2133 = vlaneseq
        %v2134 = vshrl.u32 %v2133, 7
        %v2135 = vsub.s32 1, %v2134
        %v2136 = vrot.slane %v2117, %v2135
        %v2139 = vmul.f32 %v2126, %v2132
        %v2140 = vmul.f32 %v2127, %v2136
        %v2141 = vld [vmem:[%s663] sm:$0xff]
        %v2142 = vld [vmem:[%s663 + $0x8] sm:$0xff]
        %v2143 = vld [vmem:[%s663 + $0x10] sm:$0xff]
        %v2144 = vld [vmem:[%s663 + $0x18] sm:$0xff]
        %v2145 = vld [vmem:[%s663 + $0x20] sm:$0xff]
        %v2146 = vld [vmem:[%s663 + $0x28] sm:$0xff]
        %v2147 = vld [vmem:[%s663 + $0x30] sm:$0xff]
        %v2148 = vld [vmem:[%s663 + $0x38] sm:$0xff]
        %v2149 = vld [vmem:[%s663 + $0x40] sm:$0xff]
        %v2150 = vld [vmem:[%s663 + $0x48] sm:$0xff]
        %v2151 = vld [vmem:[%s663 + $0x50] sm:$0xff]
        %v2152 = vld [vmem:[%s663 + $0x58] sm:$0xff]
        %v2153 = vld [vmem:[%s663 + $0x60] sm:$0xff]
        %v2154 = vld [vmem:[%s663 + $0x68] sm:$0xff]
        %v2155 = vld [vmem:[%s663 + $0x70] sm:$0xff]
        %v2156 = vld [vmem:[%s663 + $0x78] sm:$0xff]
        %v2157 = vld [vmem:[%s663 + $0x80] sm:$0xff]
        %v2158 = vld [vmem:[%s663 + $0x88] sm:$0xff]
        %v2159 = vld [vmem:[%s663 + $0x90] sm:$0xff]
        %v2160 = vld [vmem:[%s663 + $0x98] sm:$0xff]
        %v2161 = vld [vmem:[%s663 + $0xa0] sm:$0xff]
        %v2162 = vld [vmem:[%s663 + $0xa8] sm:$0xff]
        %v2163 = vld [vmem:[%s663 + $0xb0] sm:$0xff]
        %v2164 = vld [vmem:[%s663 + $0xb8] sm:$0xff]
        %v2165 = vld [vmem:[%s663 + $0xc0] sm:$0xff]
        %v2166 = vld [vmem:[%s663 + $0xc8] sm:$0xff]
        %v2167 = vld [vmem:[%s663 + $0xd0] sm:$0xff]
        %v2168 = vld [vmem:[%s663 + $0xd8] sm:$0xff]
        %v2169 = vld [vmem:[%s663 + $0xe0] sm:$0xff]
        %v2170 = vld [vmem:[%s663 + $0xe8] sm:$0xff]
        %v2171 = vld [vmem:[%s663 + $0xf0] sm:$0xff]
        %v2172 = vld [vmem:[%s663 + $0xf8] sm:$0xff]
        %v2173 = vld [vmem:[%s663 + $0x100] sm:$0xff]
        %v2174 = vld [vmem:[%s663 + $0x108] sm:$0xff]
        %v2175 = vld [vmem:[%s663 + $0x110] sm:$0xff]
        %v2176 = vld [vmem:[%s663 + $0x118] sm:$0xff]
        %v2177 = vld [vmem:[%s663 + $0x120] sm:$0xff]
        %v2178 = vld [vmem:[%s663 + $0x128] sm:$0xff]
        %v2179 = vld [vmem:[%s663 + $0x130] sm:$0xff]
        %v2180 = vld [vmem:[%s663 + $0x138] sm:$0xff]
        %v2181 = vld [vmem:[%s663 + $0x140] sm:$0xff]
        %v2182 = vld [vmem:[%s663 + $0x148] sm:$0xff]
        %v2183 = vld [vmem:[%s663 + $0x150] sm:$0xff]
        %v2184 = vld [vmem:[%s663 + $0x158] sm:$0xff]
        %v2185 = vld [vmem:[%s663 + $0x160] sm:$0xff]
        %v2186 = vld [vmem:[%s663 + $0x168] sm:$0xff]
        %v2187 = vld [vmem:[%s663 + $0x170] sm:$0xff]
        %v2188 = vld [vmem:[%s663 + $0x178] sm:$0xff]
        %v2189 = vld [vmem:[%s663 + $0x180] sm:$0xff]
        %v2190 = vld [vmem:[%s663 + $0x188] sm:$0xff]
        %v2191 = vld [vmem:[%s663 + $0x190] sm:$0xff]
        %v2192 = vld [vmem:[%s663 + $0x198] sm:$0xff]
        %v2193 = vld [vmem:[%s663 + $0x1a0] sm:$0xff]
        %v2194 = vld [vmem:[%s663 + $0x1a8] sm:$0xff]
        %v2195 = vld [vmem:[%s663 + $0x1b0] sm:$0xff]
        %v2196 = vld [vmem:[%s663 + $0x1b8] sm:$0xff]
        %v2197 = vld [vmem:[%s663 + $0x1c0] sm:$0xff]
        %v2198 = vld [vmem:[%s663 + $0x1c8] sm:$0xff]
        %v2199 = vld [vmem:[%s663 + $0x1d0] sm:$0xff]
        %v2200 = vld [vmem:[%s663 + $0x1d8] sm:$0xff]
        %v2201 = vld [vmem:[%s663 + $0x1e0] sm:$0xff]
        %v2202 = vld [vmem:[%s663 + $0x1e8] sm:$0xff]
        %v2203 = vld [vmem:[%s663 + $0x1f0] sm:$0xff]
        %v2204 = vld [vmem:[%s663 + $0x1f8] sm:$0xff]
        %v2205 = vpack.c.bf16 %v2139, %v2139
        %v2206 = vpack.c.bf16 %v2140, %v2140
        %v2271 = vunpack.c.l.b16 %v2141
        %v2272 = vunpack.c.h.b16 %v2141
        %v2273 = vunpack.c.l.b16 %v2142
        %v2274 = vunpack.c.h.b16 %v2142
        %v2275 = vunpack.c.l.b16 %v2143
        %v2276 = vunpack.c.h.b16 %v2143
        %v2277 = vunpack.c.l.b16 %v2144
        %v2278 = vunpack.c.h.b16 %v2144
        %v2279 = vunpack.c.l.b16 %v2145
        %v2280 = vunpack.c.h.b16 %v2145
        %v2281 = vunpack.c.l.b16 %v2146
        %v2282 = vunpack.c.h.b16 %v2146
        %v2283 = vunpack.c.l.b16 %v2147
        %v2284 = vunpack.c.h.b16 %v2147
        %v2285 = vunpack.c.l.b16 %v2148
        %v2286 = vunpack.c.h.b16 %v2148
        %v2287 = vunpack.c.l.b16 %v2149
        %v2288 = vunpack.c.h.b16 %v2149
        %v2289 = vunpack.c.l.b16 %v2150
        %v2290 = vunpack.c.h.b16 %v2150
        %v2291 = vunpack.c.l.b16 %v2151
        %v2292 = vunpack.c.h.b16 %v2151
        %v2293 = vunpack.c.l.b16 %v2152
        %v2294 = vunpack.c.h.b16 %v2152
        %v2295 = vunpack.c.l.b16 %v2153
        %v2296 = vunpack.c.h.b16 %v2153
        %v2297 = vunpack.c.l.b16 %v2154
        %v2298 = vunpack.c.h.b16 %v2154
        %v2299 = vunpack.c.l.b16 %v2155
        %v2300 = vunpack.c.h.b16 %v2155
        %v2301 = vunpack.c.l.b16 %v2156
        %v2302 = vunpack.c.h.b16 %v2156
        %v2303 = vunpack.c.l.b16 %v2157
        %v2304 = vunpack.c.h.b16 %v2157
        %v2305 = vunpack.c.l.b16 %v2158
        %v2306 = vunpack.c.h.b16 %v2158
        %v2307 = vunpack.c.l.b16 %v2159
        %v2308 = vunpack.c.h.b16 %v2159
        %v2309 = vunpack.c.l.b16 %v2160
        %v2310 = vunpack.c.h.b16 %v2160
        %v2311 = vunpack.c.l.b16 %v2161
        %v2312 = vunpack.c.h.b16 %v2161
        %v2313 = vunpack.c.l.b16 %v2162
        %v2314 = vunpack.c.h.b16 %v2162
        %v2315 = vunpack.c.l.b16 %v2163
        %v2316 = vunpack.c.h.b16 %v2163
        %v2317 = vunpack.c.l.b16 %v2164
        %v2318 = vunpack.c.h.b16 %v2164
        %v2319 = vunpack.c.l.b16 %v2165
        %v2320 = vunpack.c.h.b16 %v2165
        %v2321 = vunpack.c.l.b16 %v2166
        %v2322 = vunpack.c.h.b16 %v2166
        %v2323 = vunpack.c.l.b16 %v2167
        %v2324 = vunpack.c.h.b16 %v2167
        %v2325 = vunpack.c.l.b16 %v2168
        %v2326 = vunpack.c.h.b16 %v2168
        %v2327 = vunpack.c.l.b16 %v2169
        %v2328 = vunpack.c.h.b16 %v2169
        %v2329 = vunpack.c.l.b16 %v2170
        %v2330 = vunpack.c.h.b16 %v2170
        %v2331 = vunpack.c.l.b16 %v2171
        %v2332 = vunpack.c.h.b16 %v2171
        %v2333 = vunpack.c.l.b16 %v2172
        %v2334 = vunpack.c.h.b16 %v2172
        %v2335 = vunpack.c.l.b16 %v2173
        %v2336 = vunpack.c.h.b16 %v2173
        %v2337 = vunpack.c.l.b16 %v2174
        %v2338 = vunpack.c.h.b16 %v2174
        %v2339 = vunpack.c.l.b16 %v2175
        %v2340 = vunpack.c.h.b16 %v2175
        %v2341 = vunpack.c.l.b16 %v2176
        %v2342 = vunpack.c.h.b16 %v2176
        %v2343 = vunpack.c.l.b16 %v2177
        %v2344 = vunpack.c.h.b16 %v2177
        %v2345 = vunpack.c.l.b16 %v2178
        %v2346 = vunpack.c.h.b16 %v2178
        %v2347 = vunpack.c.l.b16 %v2179
        %v2348 = vunpack.c.h.b16 %v2179
        %v2349 = vunpack.c.l.b16 %v2180
        %v2350 = vunpack.c.h.b16 %v2180
        %v2351 = vunpack.c.l.b16 %v2181
        %v2352 = vunpack.c.h.b16 %v2181
        %v2353 = vunpack.c.l.b16 %v2182
        %v2354 = vunpack.c.h.b16 %v2182
        %v2355 = vunpack.c.l.b16 %v2183
        %v2356 = vunpack.c.h.b16 %v2183
        %v2357 = vunpack.c.l.b16 %v2184
        %v2358 = vunpack.c.h.b16 %v2184
        %v2359 = vunpack.c.l.b16 %v2185
        %v2360 = vunpack.c.h.b16 %v2185
        %v2361 = vunpack.c.l.b16 %v2186
        %v2362 = vunpack.c.h.b16 %v2186
        %v2363 = vunpack.c.l.b16 %v2187
        %v2364 = vunpack.c.h.b16 %v2187
        %v2365 = vunpack.c.l.b16 %v2188
        %v2366 = vunpack.c.h.b16 %v2188
        %v2367 = vunpack.c.l.b16 %v2189
        %v2368 = vunpack.c.h.b16 %v2189
        %v2369 = vunpack.c.l.b16 %v2190
        %v2370 = vunpack.c.h.b16 %v2190
        %v2371 = vunpack.c.l.b16 %v2191
        %v2372 = vunpack.c.h.b16 %v2191
        %v2373 = vunpack.c.l.b16 %v2192
        %v2374 = vunpack.c.h.b16 %v2192
        %v2375 = vunpack.c.l.b16 %v2193
        %v2376 = vunpack.c.h.b16 %v2193
        %v2377 = vunpack.c.l.b16 %v2194
        %v2378 = vunpack.c.h.b16 %v2194
        %v2379 = vunpack.c.l.b16 %v2195
        %v2380 = vunpack.c.h.b16 %v2195
        %v2381 = vunpack.c.l.b16 %v2196
        %v2382 = vunpack.c.h.b16 %v2196
        %v2383 = vunpack.c.l.b16 %v2197
        %v2384 = vunpack.c.h.b16 %v2197
        %v2385 = vunpack.c.l.b16 %v2198
        %v2386 = vunpack.c.h.b16 %v2198
        %v2387 = vunpack.c.l.b16 %v2199
        %v2388 = vunpack.c.h.b16 %v2199
        %v2389 = vunpack.c.l.b16 %v2200
        %v2390 = vunpack.c.h.b16 %v2200
        %v2391 = vunpack.c.l.b16 %v2201
        %v2392 = vunpack.c.h.b16 %v2201
        %v2393 = vunpack.c.l.b16 %v2202
        %v2394 = vunpack.c.h.b16 %v2202
        %v2395 = vunpack.c.l.b16 %v2203
        %v2396 = vunpack.c.h.b16 %v2203
        %v2397 = vunpack.c.l.b16 %v2204
        %v2398 = vunpack.c.h.b16 %v2204
        %v2399 = vpack.c.b16 %v2275, %v2271
        %v2400 = vpack.c.b16 %v2276, %v2272
        %v2401 = vpack.c.b16 %v2277, %v2273
        %v2402 = vpack.c.b16 %v2278, %v2274
        %v2403 = vpack.c.b16 %v2283, %v2279
        %v2404 = vpack.c.b16 %v2284, %v2280
        %v2405 = vpack.c.b16 %v2285, %v2281
        %v2406 = vpack.c.b16 %v2286, %v2282
        %v2407 = vpack.c.b16 %v2291, %v2287
        %v2408 = vpack.c.b16 %v2292, %v2288
        %v2409 = vpack.c.b16 %v2293, %v2289
        %v2410 = vpack.c.b16 %v2294, %v2290
        %v2411 = vpack.c.b16 %v2299, %v2295
        %v2412 = vpack.c.b16 %v2300, %v2296
        %v2413 = vpack.c.b16 %v2301, %v2297
        %v2414 = vpack.c.b16 %v2302, %v2298
        %v2415 = vpack.c.b16 %v2307, %v2303
        %v2416 = vpack.c.b16 %v2308, %v2304
        %v2417 = vpack.c.b16 %v2309, %v2305
        %v2418 = vpack.c.b16 %v2310, %v2306
        %v2419 = vpack.c.b16 %v2315, %v2311
        %v2420 = vpack.c.b16 %v2316, %v2312
        %v2421 = vpack.c.b16 %v2317, %v2313
        %v2422 = vpack.c.b16 %v2318, %v2314
        %v2423 = vpack.c.b16 %v2323, %v2319
        %v2424 = vpack.c.b16 %v2324, %v2320
        %v2425 = vpack.c.b16 %v2325, %v2321
        %v2426 = vpack.c.b16 %v2326, %v2322
        %v2427 = vpack.c.b16 %v2331, %v2327
        %v2428 = vpack.c.b16 %v2332, %v2328
        %v2429 = vpack.c.b16 %v2333, %v2329
        %v2430 = vpack.c.b16 %v2334, %v2330
        %v2431 = vpack.c.b16 %v2339, %v2335
        %v2432 = vpack.c.b16 %v2340, %v2336
        %v2433 = vpack.c.b16 %v2341, %v2337
        %v2434 = vpack.c.b16 %v2342, %v2338
        %v2435 = vpack.c.b16 %v2347, %v2343
        %v2436 = vpack.c.b16 %v2348, %v2344
        %v2437 = vpack.c.b16 %v2349, %v2345
        %v2438 = vpack.c.b16 %v2350, %v2346
        %v2439 = vpack.c.b16 %v2355, %v2351
        %v2440 = vpack.c.b16 %v2356, %v2352
        %v2441 = vpack.c.b16 %v2357, %v2353
        %v2442 = vpack.c.b16 %v2358, %v2354
        %v2443 = vpack.c.b16 %v2363, %v2359
        %v2444 = vpack.c.b16 %v2364, %v2360
        %v2445 = vpack.c.b16 %v2365, %v2361
        %v2446 = vpack.c.b16 %v2366, %v2362
        %v2447 = vpack.c.b16 %v2371, %v2367
        %v2448 = vpack.c.b16 %v2372, %v2368
        %v2449 = vpack.c.b16 %v2373, %v2369
        %v2450 = vpack.c.b16 %v2374, %v2370
        %v2451 = vpack.c.b16 %v2379, %v2375
        %v2452 = vpack.c.b16 %v2380, %v2376
        %v2453 = vpack.c.b16 %v2381, %v2377
        %v2454 = vpack.c.b16 %v2382, %v2378
        %v2455 = vpack.c.b16 %v2387, %v2383
        %v2456 = vpack.c.b16 %v2388, %v2384
        %v2457 = vpack.c.b16 %v2389, %v2385
        %v2458 = vpack.c.b16 %v2390, %v2386
        %v2459 = vpack.c.b16 %v2395, %v2391
        %v2460 = vpack.c.b16 %v2396, %v2392
        %v2461 = vpack.c.b16 %v2397, %v2393
        %v2462 = vpack.c.b16 %v2398, %v2394
        %2527 = vmatprep.subr.bf16.mxu0 %v2400
        %2528 = vmatpush1.bf16.msra.mxu0 %v2399
        %2529 = vmatprep.subr.bf16.mxu0 %v2404
        %2530 = vmatpush1.bf16.msra.mxu0 %v2403
        %2531 = vmatprep.subr.bf16.mxu0 %v2408
        %2532 = vmatpush1.bf16.msra.mxu0 %v2407
        %2533 = vmatprep.subr.bf16.mxu0 %v2412
        %2534 = vmatpush1.bf16.msra.mxu0 %v2411
        %2535 = vmatprep.subr.bf16.mxu0 %v2416
        %2536 = vmatpush1.bf16.msra.mxu0 %v2415
        %2537 = vmatprep.subr.bf16.mxu0 %v2420
        %2538 = vmatpush1.bf16.msra.mxu0 %v2419
        %2539 = vmatprep.subr.bf16.mxu0 %v2424
        %2540 = vmatpush1.bf16.msra.mxu0 %v2423
        %2541 = vmatprep.subr.bf16.mxu0 %v2428
        %2542 = vmatpush1.bf16.msra.mxu0 %v2427
        %2543 = vmatprep.subr.bf16.mxu0 %v2432
        %2544 = vmatpush1.bf16.msra.mxu0 %v2431
        %2545 = vmatprep.subr.bf16.mxu0 %v2436
        %2546 = vmatpush1.bf16.msra.mxu0 %v2435
        %2547 = vmatprep.subr.bf16.mxu0 %v2440
        %2548 = vmatpush1.bf16.msra.mxu0 %v2439
        %2549 = vmatprep.subr.bf16.mxu0 %v2444
        %2550 = vmatpush1.bf16.msra.mxu0 %v2443
        %2551 = vmatprep.subr.bf16.mxu0 %v2448
        %2552 = vmatpush1.bf16.msra.mxu0 %v2447
        %2553 = vmatprep.subr.bf16.mxu0 %v2452
        %2554 = vmatpush1.bf16.msra.mxu0 %v2451
        %2555 = vmatprep.subr.bf16.mxu0 %v2456
        %2556 = vmatpush1.bf16.msra.mxu0 %v2455
        %2557 = vmatprep.subr.bf16.mxu0 %v2460
        %2558 = vmatpush1.bf16.msra.mxu0 %v2459
        %2559 = vmatprep.mubr.bf16.mxu0 %v2206
        %2560 = vmatmul.mubr.bf16.gmra.mrb[0].mxu0 %v2205
        %v2561 = vpop.f32.mrb[0].mxu0
        %v2562 = vadd.f32 0.0, %v2561
        %v2563 = vpop.f32.mrb[0].mxu0
        %v2564 = vadd.f32 0.0, %v2563
        %v2565 = vpop.f32.mrb[0].mxu0
        %v2566 = vpop.f32.mrb[0].mxu0
        %2567 = vdwg.mxu0
        %2568 = vmatprep.subr.bf16.mxu0 %v2402
        %2569 = vmatpush1.bf16.msra.mxu0 %v2401
        %2570 = vmatprep.subr.bf16.mxu0 %v2406
        %2571 = vmatpush1.bf16.msra.mxu0 %v2405
        %2572 = vmatprep.subr.bf16.mxu0 %v2410
        %2573 = vmatpush1.bf16.msra.mxu0 %v2409
        %2574 = vmatprep.subr.bf16.mxu0 %v2414
        %2575 = vmatpush1.bf16.msra.mxu0 %v2413
        %2576 = vmatprep.subr.bf16.mxu0 %v2418
        %2577 = vmatpush1.bf16.msra.mxu0 %v2417
        %2578 = vmatprep.subr.bf16.mxu0 %v2422
        %2579 = vmatpush1.bf16.msra.mxu0 %v2421
        %2580 = vmatprep.subr.bf16.mxu0 %v2426
        %2581 = vmatpush1.bf16.msra.mxu0 %v2425
        %2582 = vmatprep.subr.bf16.mxu0 %v2430
        %2583 = vmatpush1.bf16.msra.mxu0 %v2429
        %2584 = vmatprep.subr.bf16.mxu0 %v2434
        %2585 = vmatpush1.bf16.msra.mxu0 %v2433
        %2586 = vmatprep.subr.bf16.mxu0 %v2438
        %2587 = vmatpush1.bf16.msra.mxu0 %v2437
        %2588 = vmatprep.subr.bf16.mxu0 %v2442
        %2589 = vmatpush1.bf16.msra.mxu0 %v2441
        %2590 = vmatprep.subr.bf16.mxu0 %v2446
        %2591 = vmatpush1.bf16.msra.mxu0 %v2445
        %2592 = vmatprep.subr.bf16.mxu0 %v2450
        %2593 = vmatpush1.bf16.msra.mxu0 %v2449
        %2594 = vmatprep.subr.bf16.mxu0 %v2454
        %2595 = vmatpush1.bf16.msra.mxu0 %v2453
        %2596 = vmatprep.subr.bf16.mxu0 %v2458
        %2597 = vmatpush1.bf16.msra.mxu0 %v2457
        %2598 = vmatprep.subr.bf16.mxu0 %v2462
        %2599 = vmatpush1.bf16.msra.mxu0 %v2461
        %2600 = vmatprep.mubr.bf16.mxu0 %v2206
        %2601 = vmatmul.mubr.bf16.gmra.mrb[0].mxu0 %v2205
        %v2602 = vpop.f32.mrb[0].mxu0
        %v2603 = vadd.f32 0.0, %v2602
        %v2604 = vpop.f32.mrb[0].mxu0
        %v2605 = vadd.f32 0.0, %v2604
        %v2606 = vpop.f32.mrb[0].mxu0
        %v2607 = vpop.f32.mrb[0].mxu0
        %2608 = vdwg.mxu0
        %v2609 = vmax.f32 %v2562, 0.0
        %v2610 = vmax.f32 %v2564, 0.0
        %v2611 = vmax.f32 %v2603, 0.0
        %v2612 = vmax.f32 %v2605, 0.0
        %v2613 = vld [vmem:[%s672] sm:$0xff]
        %v2614 = vld [vmem:[%s672 + $0x8] sm:$0xff]
        %v2615 = vld [vmem:[%s672 + $0x10] sm:$0xff]
        %v2616 = vld [vmem:[%s672 + $0x18] sm:$0xff]
        %v2617 = vld [vmem:[%s672 + $0x20] sm:$0xff]
        %v2618 = vld [vmem:[%s672 + $0x28] sm:$0xff]
        %v2619 = vld [vmem:[%s672 + $0x30] sm:$0xff]
        %v2620 = vld [vmem:[%s672 + $0x38] sm:$0xff]
        %v2621 = vld [vmem:[%s672 + $0x40] sm:$0xff]
        %v2622 = vld [vmem:[%s672 + $0x48] sm:$0xff]
        %v2623 = vld [vmem:[%s672 + $0x50] sm:$0xff]
        %v2624 = vld [vmem:[%s672 + $0x58] sm:$0xff]
        %v2625 = vld [vmem:[%s672 + $0x60] sm:$0xff]
        %v2626 = vld [vmem:[%s672 + $0x68] sm:$0xff]
        %v2627 = vld [vmem:[%s672 + $0x70] sm:$0xff]
        %v2628 = vld [vmem:[%s672 + $0x78] sm:$0xff]
        %v2629 = vld [vmem:[%s672 + $0x80] sm:$0xff]
        %v2630 = vld [vmem:[%s672 + $0x88] sm:$0xff]
        %v2631 = vld [vmem:[%s672 + $0x90] sm:$0xff]
        %v2632 = vld [vmem:[%s672 + $0x98] sm:$0xff]
        %v2633 = vld [vmem:[%s672 + $0xa0] sm:$0xff]
        %v2634 = vld [vmem:[%s672 + $0xa8] sm:$0xff]
        %v2635 = vld [vmem:[%s672 + $0xb0] sm:$0xff]
        %v2636 = vld [vmem:[%s672 + $0xb8] sm:$0xff]
        %v2637 = vld [vmem:[%s672 + $0xc0] sm:$0xff]
        %v2638 = vld [vmem:[%s672 + $0xc8] sm:$0xff]
        %v2639 = vld [vmem:[%s672 + $0xd0] sm:$0xff]
        %v2640 = vld [vmem:[%s672 + $0xd8] sm:$0xff]
        %v2641 = vld [vmem:[%s672 + $0xe0] sm:$0xff]
        %v2642 = vld [vmem:[%s672 + $0xe8] sm:$0xff]
        %v2643 = vld [vmem:[%s672 + $0xf0] sm:$0xff]
        %v2644 = vld [vmem:[%s672 + $0xf8] sm:$0xff]
        %v2645 = vld [vmem:[%s672 + $0x100] sm:$0xff]
        %v2646 = vld [vmem:[%s672 + $0x108] sm:$0xff]
        %v2647 = vld [vmem:[%s672 + $0x110] sm:$0xff]
        %v2648 = vld [vmem:[%s672 + $0x118] sm:$0xff]
        %v2649 = vld [vmem:[%s672 + $0x120] sm:$0xff]
        %v2650 = vld [vmem:[%s672 + $0x128] sm:$0xff]
        %v2651 = vld [vmem:[%s672 + $0x130] sm:$0xff]
        %v2652 = vld [vmem:[%s672 + $0x138] sm:$0xff]
        %v2653 = vld [vmem:[%s672 + $0x140] sm:$0xff]
        %v2654 = vld [vmem:[%s672 + $0x148] sm:$0xff]
        %v2655 = vld [vmem:[%s672 + $0x150] sm:$0xff]
        %v2656 = vld [vmem:[%s672 + $0x158] sm:$0xff]
        %v2657 = vld [vmem:[%s672 + $0x160] sm:$0xff]
        %v2658 = vld [vmem:[%s672 + $0x168] sm:$0xff]
        %v2659 = vld [vmem:[%s672 + $0x170] sm:$0xff]
        %v2660 = vld [vmem:[%s672 + $0x178] sm:$0xff]
        %v2661 = vld [vmem:[%s672 + $0x180] sm:$0xff]
        %v2662 = vld [vmem:[%s672 + $0x188] sm:$0xff]
        %v2663 = vld [vmem:[%s672 + $0x190] sm:$0xff]
        %v2664 = vld [vmem:[%s672 + $0x198] sm:$0xff]
        %v2665 = vld [vmem:[%s672 + $0x1a0] sm:$0xff]
        %v2666 = vld [vmem:[%s672 + $0x1a8] sm:$0xff]
        %v2667 = vld [vmem:[%s672 + $0x1b0] sm:$0xff]
        %v2668 = vld [vmem:[%s672 + $0x1b8] sm:$0xff]
        %v2669 = vld [vmem:[%s672 + $0x1c0] sm:$0xff]
        %v2670 = vld [vmem:[%s672 + $0x1c8] sm:$0xff]
        %v2671 = vld [vmem:[%s672 + $0x1d0] sm:$0xff]
        %v2672 = vld [vmem:[%s672 + $0x1d8] sm:$0xff]
        %v2673 = vld [vmem:[%s672 + $0x1e0] sm:$0xff]
        %v2674 = vld [vmem:[%s672 + $0x1e8] sm:$0xff]
        %v2675 = vld [vmem:[%s672 + $0x1f0] sm:$0xff]
        %v2676 = vld [vmem:[%s672 + $0x1f8] sm:$0xff]
        %v2677 = vpack.c.bf16 %v2609, %v2609
        %v2678 = vpack.c.bf16 %v2610, %v2610
        %v2679 = vpack.c.bf16 %v2611, %v2611
        %v2680 = vpack.c.bf16 %v2612, %v2612
        %v2745 = vunpack.c.l.b16 %v2613
        %v2746 = vunpack.c.h.b16 %v2613
        %v2747 = vunpack.c.l.b16 %v2614
        %v2748 = vunpack.c.h.b16 %v2614
        %v2749 = vunpack.c.l.b16 %v2615
        %v2750 = vunpack.c.h.b16 %v2615
        %v2751 = vunpack.c.l.b16 %v2616
        %v2752 = vunpack.c.h.b16 %v2616
        %v2753 = vunpack.c.l.b16 %v2617
        %v2754 = vunpack.c.h.b16 %v2617
        %v2755 = vunpack.c.l.b16 %v2618
        %v2756 = vunpack.c.h.b16 %v2618
        %v2757 = vunpack.c.l.b16 %v2619
        %v2758 = vunpack.c.h.b16 %v2619
        %v2759 = vunpack.c.l.b16 %v2620
        %v2760 = vunpack.c.h.b16 %v2620
        %v2761 = vunpack.c.l.b16 %v2621
        %v2762 = vunpack.c.h.b16 %v2621
        %v2763 = vunpack.c.l.b16 %v2622
        %v2764 = vunpack.c.h.b16 %v2622
        %v2765 = vunpack.c.l.b16 %v2623
        %v2766 = vunpack.c.h.b16 %v2623
        %v2767 = vunpack.c.l.b16 %v2624
        %v2768 = vunpack.c.h.b16 %v2624
        %v2769 = vunpack.c.l.b16 %v2625
        %v2770 = vunpack.c.h.b16 %v2625
        %v2771 = vunpack.c.l.b16 %v2626
        %v2772 = vunpack.c.h.b16 %v2626
        %v2773 = vunpack.c.l.b16 %v2627
        %v2774 = vunpack.c.h.b16 %v2627
        %v2775 = vunpack.c.l.b16 %v2628
        %v2776 = vunpack.c.h.b16 %v2628
        %v2777 = vunpack.c.l.b16 %v2629
        %v2778 = vunpack.c.h.b16 %v2629
        %v2779 = vunpack.c.l.b16 %v2630
        %v2780 = vunpack.c.h.b16 %v2630
        %v2781 = vunpack.c.l.b16 %v2631
        %v2782 = vunpack.c.h.b16 %v2631
        %v2783 = vunpack.c.l.b16 %v2632
        %v2784 = vunpack.c.h.b16 %v2632
        %v2785 = vunpack.c.l.b16 %v2633
        %v2786 = vunpack.c.h.b16 %v2633
        %v2787 = vunpack.c.l.b16 %v2634
        %v2788 = vunpack.c.h.b16 %v2634
        %v2789 = vunpack.c.l.b16 %v2635
        %v2790 = vunpack.c.h.b16 %v2635
        %v2791 = vunpack.c.l.b16 %v2636
        %v2792 = vunpack.c.h.b16 %v2636
        %v2793 = vunpack.c.l.b16 %v2637
        %v2794 = vunpack.c.h.b16 %v2637
        %v2795 = vunpack.c.l.b16 %v2638
        %v2796 = vunpack.c.h.b16 %v2638
        %v2797 = vunpack.c.l.b16 %v2639
        %v2798 = vunpack.c.h.b16 %v2639
        %v2799 = vunpack.c.l.b16 %v2640
        %v2800 = vunpack.c.h.b16 %v2640
        %v2801 = vunpack.c.l.b16 %v2641
        %v2802 = vunpack.c.h.b16 %v2641
        %v2803 = vunpack.c.l.b16 %v2642
        %v2804 = vunpack.c.h.b16 %v2642
        %v2805 = vunpack.c.l.b16 %v2643
        %v2806 = vunpack.c.h.b16 %v2643
        %v2807 = vunpack.c.l.b16 %v2644
        %v2808 = vunpack.c.h.b16 %v2644
        %v2809 = vunpack.c.l.b16 %v2645
        %v2810 = vunpack.c.h.b16 %v2645
        %v2811 = vunpack.c.l.b16 %v2646
        %v2812 = vunpack.c.h.b16 %v2646
        %v2813 = vunpack.c.l.b16 %v2647
        %v2814 = vunpack.c.h.b16 %v2647
        %v2815 = vunpack.c.l.b16 %v2648
        %v2816 = vunpack.c.h.b16 %v2648
        %v2817 = vunpack.c.l.b16 %v2649
        %v2818 = vunpack.c.h.b16 %v2649
        %v2819 = vunpack.c.l.b16 %v2650
        %v2820 = vunpack.c.h.b16 %v2650
        %v2821 = vunpack.c.l.b16 %v2651
        %v2822 = vunpack.c.h.b16 %v2651
        %v2823 = vunpack.c.l.b16 %v2652
        %v2824 = vunpack.c.h.b16 %v2652
        %v2825 = vunpack.c.l.b16 %v2653
        %v2826 = vunpack.c.h.b16 %v2653
        %v2827 = vunpack.c.l.b16 %v2654
        %v2828 = vunpack.c.h.b16 %v2654
        %v2829 = vunpack.c.l.b16 %v2655
        %v2830 = vunpack.c.h.b16 %v2655
        %v2831 = vunpack.c.l.b16 %v2656
        %v2832 = vunpack.c.h.b16 %v2656
        %v2833 = vunpack.c.l.b16 %v2657
        %v2834 = vunpack.c.h.b16 %v2657
        %v2835 = vunpack.c.l.b16 %v2658
        %v2836 = vunpack.c.h.b16 %v2658
        %v2837 = vunpack.c.l.b16 %v2659
        %v2838 = vunpack.c.h.b16 %v2659
        %v2839 = vunpack.c.l.b16 %v2660
        %v2840 = vunpack.c.h.b16 %v2660
        %v2841 = vunpack.c.l.b16 %v2661
        %v2842 = vunpack.c.h.b16 %v2661
        %v2843 = vunpack.c.l.b16 %v2662
        %v2844 = vunpack.c.h.b16 %v2662
        %v2845 = vunpack.c.l.b16 %v2663
        %v2846 = vunpack.c.h.b16 %v2663
        %v2847 = vunpack.c.l.b16 %v2664
        %v2848 = vunpack.c.h.b16 %v2664
        %v2849 = vunpack.c.l.b16 %v2665
        %v2850 = vunpack.c.h.b16 %v2665
        %v2851 = vunpack.c.l.b16 %v2666
        %v2852 = vunpack.c.h.b16 %v2666
        %v2853 = vunpack.c.l.b16 %v2667
        %v2854 = vunpack.c.h.b16 %v2667
        %v2855 = vunpack.c.l.b16 %v2668
        %v2856 = vunpack.c.h.b16 %v2668
        %v2857 = vunpack.c.l.b16 %v2669
        %v2858 = vunpack.c.h.b16 %v2669
        %v2859 = vunpack.c.l.b16 %v2670
        %v2860 = vunpack.c.h.b16 %v2670
        %v2861 = vunpack.c.l.b16 %v2671
        %v2862 = vunpack.c.h.b16 %v2671
        %v2863 = vunpack.c.l.b16 %v2672
        %v2864 = vunpack.c.h.b16 %v2672
        %v2865 = vunpack.c.l.b16 %v2673
        %v2866 = vunpack.c.h.b16 %v2673
        %v2867 = vunpack.c.l.b16 %v2674
        %v2868 = vunpack.c.h.b16 %v2674
        %v2869 = vunpack.c.l.b16 %v2675
        %v2870 = vunpack.c.h.b16 %v2675
        %v2871 = vunpack.c.l.b16 %v2676
        %v2872 = vunpack.c.h.b16 %v2676
        %v2873 = vpack.c.b16 %v2747, %v2745
        %v2874 = vpack.c.b16 %v2748, %v2746
        %v2875 = vpack.c.b16 %v2751, %v2749
        %v2876 = vpack.c.b16 %v2752, %v2750
        %v2877 = vpack.c.b16 %v2755, %v2753
        %v2878 = vpack.c.b16 %v2756, %v2754
        %v2879 = vpack.c.b16 %v2759, %v2757
        %v2880 = vpack.c.b16 %v2760, %v2758
        %v2881 = vpack.c.b16 %v2763, %v2761
        %v2882 = vpack.c.b16 %v2764, %v2762
        %v2883 = vpack.c.b16 %v2767, %v2765
        %v2884 = vpack.c.b16 %v2768, %v2766
        %v2885 = vpack.c.b16 %v2771, %v2769
        %v2886 = vpack.c.b16 %v2772, %v2770
        %v2887 = vpack.c.b16 %v2775, %v2773
        %v2888 = vpack.c.b16 %v2776, %v2774
        %v2889 = vpack.c.b16 %v2779, %v2777
        %v2890 = vpack.c.b16 %v2780, %v2778
        %v2891 = vpack.c.b16 %v2783, %v2781
        %v2892 = vpack.c.b16 %v2784, %v2782
        %v2893 = vpack.c.b16 %v2787, %v2785
        %v2894 = vpack.c.b16 %v2788, %v2786
        %v2895 = vpack.c.b16 %v2791, %v2789
        %v2896 = vpack.c.b16 %v2792, %v2790
        %v2897 = vpack.c.b16 %v2795, %v2793
        %v2898 = vpack.c.b16 %v2796, %v2794
        %v2899 = vpack.c.b16 %v2799, %v2797
        %v2900 = vpack.c.b16 %v2800, %v2798
        %v2901 = vpack.c.b16 %v2803, %v2801
        %v2902 = vpack.c.b16 %v2804, %v2802
        %v2903 = vpack.c.b16 %v2807, %v2805
        %v2904 = vpack.c.b16 %v2808, %v2806
        %v2905 = vpack.c.b16 %v2811, %v2809
        %v2906 = vpack.c.b16 %v2812, %v2810
        %v2907 = vpack.c.b16 %v2815, %v2813
        %v2908 = vpack.c.b16 %v2816, %v2814
        %v2909 = vpack.c.b16 %v2819, %v2817
        %v2910 = vpack.c.b16 %v2820, %v2818
        %v2911 = vpack.c.b16 %v2823, %v2821
        %v2912 = vpack.c.b16 %v2824, %v2822
        %v2913 = vpack.c.b16 %v2827, %v2825
        %v2914 = vpack.c.b16 %v2828, %v2826
        %v2915 = vpack.c.b16 %v2831, %v2829
        %v2916 = vpack.c.b16 %v2832, %v2830
        %v2917 = vpack.c.b16 %v2835, %v2833
        %v2918 = vpack.c.b16 %v2836, %v2834
        %v2919 = vpack.c.b16 %v2839, %v2837
        %v2920 = vpack.c.b16 %v2840, %v2838
        %v2921 = vpack.c.b16 %v2843, %v2841
        %v2922 = vpack.c.b16 %v2844, %v2842
        %v2923 = vpack.c.b16 %v2847, %v2845
        %v2924 = vpack.c.b16 %v2848, %v2846
        %v2925 = vpack.c.b16 %v2851, %v2849
        %v2926 = vpack.c.b16 %v2852, %v2850
        %v2927 = vpack.c.b16 %v2855, %v2853
        %v2928 = vpack.c.b16 %v2856, %v2854
        %v2929 = vpack.c.b16 %v2859, %v2857
        %v2930 = vpack.c.b16 %v2860, %v2858
        %v2931 = vpack.c.b16 %v2863, %v2861
        %v2932 = vpack.c.b16 %v2864, %v2862
        %v2933 = vpack.c.b16 %v2867, %v2865
        %v2934 = vpack.c.b16 %v2868, %v2866
        %v2935 = vpack.c.b16 %v2871, %v2869
        %v2936 = vpack.c.b16 %v2872, %v2870
        %3001 = vmatprep.subr.bf16.mxu0 %v2874
        %3002 = vmatpush1.bf16.msra.mxu0 %v2873
        %3003 = vmatprep.subr.bf16.mxu0 %v2876
        %3004 = vmatpush1.bf16.msra.mxu0 %v2875
        %3005 = vmatprep.subr.bf16.mxu0 %v2878
        %3006 = vmatpush1.bf16.msra.mxu0 %v2877
        %3007 = vmatprep.subr.bf16.mxu0 %v2880
        %3008 = vmatpush1.bf16.msra.mxu0 %v2879
        %3009 = vmatprep.subr.bf16.mxu0 %v2882
        %3010 = vmatpush1.bf16.msra.mxu0 %v2881
        %3011 = vmatprep.subr.bf16.mxu0 %v2884
        %3012 = vmatpush1.bf16.msra.mxu0 %v2883
        %3013 = vmatprep.subr.bf16.mxu0 %v2886
        %3014 = vmatpush1.bf16.msra.mxu0 %v2885
        %3015 = vmatprep.subr.bf16.mxu0 %v2888
        %3016 = vmatpush1.bf16.msra.mxu0 %v2887
        %3017 = vmatprep.subr.bf16.mxu0 %v2890
        %3018 = vmatpush1.bf16.msra.mxu0 %v2889
        %3019 = vmatprep.subr.bf16.mxu0 %v2892
        %3020 = vmatpush1.bf16.msra.mxu0 %v2891
        %3021 = vmatprep.subr.bf16.mxu0 %v2894
        %3022 = vmatpush1.bf16.msra.mxu0 %v2893
        %3023 = vmatprep.subr.bf16.mxu0 %v2896
        %3024 = vmatpush1.bf16.msra.mxu0 %v2895
        %3025 = vmatprep.subr.bf16.mxu0 %v2898
        %3026 = vmatpush1.bf16.msra.mxu0 %v2897
        %3027 = vmatprep.subr.bf16.mxu0 %v2900
        %3028 = vmatpush1.bf16.msra.mxu0 %v2899
        %3029 = vmatprep.subr.bf16.mxu0 %v2902
        %3030 = vmatpush1.bf16.msra.mxu0 %v2901
        %3031 = vmatprep.subr.bf16.mxu0 %v2904
        %3032 = vmatpush1.bf16.msra.mxu0 %v2903
        %3033 = vmatprep.mubr.bf16.mxu0 %v2678
        %3034 = vmatmul.mubr.bf16.gmra.mrb[0].mxu0 %v2677
        %v3035 = vpop.f32.mrb[0].mxu0
        %v3036 = vadd.f32 0.0, %v3035
        %v3037 = vpop.f32.mrb[0].mxu0
        %v3038 = vadd.f32 0.0, %v3037
        %v3039 = vpop.f32.mrb[0].mxu0
        %v3040 = vpop.f32.mrb[0].mxu0
        %3041 = vdwg.mxu0
        %3042 = vmatprep.subr.bf16.mxu0 %v2906
        %3043 = vmatpush1.bf16.msra.mxu0 %v2905
        %3044 = vmatprep.subr.bf16.mxu0 %v2908
        %3045 = vmatpush1.bf16.msra.mxu0 %v2907
        %3046 = vmatprep.subr.bf16.mxu0 %v2910
        %3047 = vmatpush1.bf16.msra.mxu0 %v2909
        %3048 = vmatprep.subr.bf16.mxu0 %v2912
        %3049 = vmatpush1.bf16.msra.mxu0 %v2911
        %3050 = vmatprep.subr.bf16.mxu0 %v2914
        %3051 = vmatpush1.bf16.msra.mxu0 %v2913
        %3052 = vmatprep.subr.bf16.mxu0 %v2916
        %3053 = vmatpush1.bf16.msra.mxu0 %v2915
        %3054 = vmatprep.subr.bf16.mxu0 %v2918
        %3055 = vmatpush1.bf16.msra.mxu0 %v2917
        %3056 = vmatprep.subr.bf16.mxu0 %v2920
        %3057 = vmatpush1.bf16.msra.mxu0 %v2919
        %3058 = vmatprep.subr.bf16.mxu0 %v2922
        %3059 = vmatpush1.bf16.msra.mxu0 %v2921
        %3060 = vmatprep.subr.bf16.mxu0 %v2924
        %3061 = vmatpush1.bf16.msra.mxu0 %v2923
        %3062 = vmatprep.subr.bf16.mxu0 %v2926
        %3063 = vmatpush1.bf16.msra.mxu0 %v2925
        %3064 = vmatprep.subr.bf16.mxu0 %v2928
        %3065 = vmatpush1.bf16.msra.mxu0 %v2927
        %3066 = vmatprep.subr.bf16.mxu0 %v2930
        %3067 = vmatpush1.bf16.msra.mxu0 %v2929
        %3068 = vmatprep.subr.bf16.mxu0 %v2932
        %3069 = vmatpush1.bf16.msra.mxu0 %v2931
        %3070 = vmatprep.subr.bf16.mxu0 %v2934
        %3071 = vmatpush1.bf16.msra.mxu0 %v2933
        %3072 = vmatprep.subr.bf16.mxu0 %v2936
        %3073 = vmatpush1.bf16.msra.mxu0 %v2935
        %3074 = vmatprep.mubr.bf16.mxu0 %v2680
        %3075 = vmatmul.mubr.bf16.gmra.mrb[0].mxu0 %v2679
        %v3076 = vpop.f32.mrb[0].mxu0
        %v3077 = vadd.f32 %v3036, %v3076
        %v3078 = vpop.f32.mrb[0].mxu0
        %v3079 = vadd.f32 %v3038, %v3078
        %v3080 = vpop.f32.mrb[0].mxu0
        %v3081 = vpop.f32.mrb[0].mxu0
        %3082 = vdwg.mxu0
        %v3083 = vadd.f32 %v2115, %v3077
        %v3084 = vadd.f32 %v2116, %v3079
        %3085 = vst [vmem:[#allocation2] sm:$0xff] %v3083
        %3086 = vst [vmem:[#allocation2 + $0x8] sm:$0xff] %v3084
        %p3087 = scmp.eq.s32.totalorder %s39, 1
        // Predicated region
        $region93: #{_generator_step.1} parent=75 // pred_check
          %p3088 = pneg %p3087
        $region94: #{_generator_step.1} parent=75 // pred_check_branch
          %3090 = sbr.rel (%p3088) target = $region96
        $region95: #{_generator_step.1} parent=75 // pred_region
          %v3091 = vld [vmem:[%s12] sm:$0x3]
          %v3092 = vmul.f32 %v3083, %v3083
          %v3093 = vmul.f32 %v3084, %v3084
          %v3094 = vadd.f32 %v3092, %v3093
          %3095 = vadd.xlane.f32.xlu0 %v3094
          %v3096 = vpop.xlane.xlu0 %3095
          %v3097 = vmul.f32 %v3096, %v881
          %v3098 = vadd.f32 %v3097, 1e-05
          %v3099 = vrsqrt.pop %v3098
          %v3100 = vmul.f32 %v3083, %v3099
          %v3101 = vmul.f32 %v3084, %v3099
          %v3103 = vlaneseq
          %v3104 = vshrl.u32 %v3103, 7
          %v3105 = vsub.s32 0, %v3104
          %v3106 = vrot.slane %v3091, %v3105
          %v3107 = vlaneseq
          %v3108 = vshrl.u32 %v3107, 7
          %v3109 = vsub.s32 1, %v3108
          %v3110 = vrot.slane %v3091, %v3109
          %v3113 = vmul.f32 %v3100, %v3106
          %v3114 = vmul.f32 %v3101, %v3110
          %v3115 = vld [vmem:[%s13] sm:$0xf]
          %v3116 = vld [vmem:[%s13 + $0x4] sm:$0xf]
          %v3117 = vld [vmem:[%s13 + $0x8] sm:$0xf]
          %v3118 = vld [vmem:[%s13 + $0xc] sm:$0xf]
          %v3119 = vld [vmem:[%s13 + $0x10] sm:$0xf]
          %v3120 = vld [vmem:[%s13 + $0x14] sm:$0xf]
          %v3121 = vld [vmem:[%s13 + $0x18] sm:$0xf]
          %v3122 = vld [vmem:[%s13 + $0x1c] sm:$0xf]
          %v3123 = vld [vmem:[%s13 + $0x20] sm:$0xf]
          %v3124 = vld [vmem:[%s13 + $0x24] sm:$0xf]
          %v3125 = vld [vmem:[%s13 + $0x28] sm:$0xf]
          %v3126 = vld [vmem:[%s13 + $0x2c] sm:$0xf]
          %v3127 = vld [vmem:[%s13 + $0x30] sm:$0xf]
          %v3128 = vld [vmem:[%s13 + $0x34] sm:$0xf]
          %v3129 = vld [vmem:[%s13 + $0x38] sm:$0xf]
          %v3130 = vld [vmem:[%s13 + $0x3c] sm:$0xf]
          %v3131 = vld [vmem:[%s13 + $0x40] sm:$0xf]
          %v3132 = vld [vmem:[%s13 + $0x44] sm:$0xf]
          %v3133 = vld [vmem:[%s13 + $0x48] sm:$0xf]
          %v3134 = vld [vmem:[%s13 + $0x4c] sm:$0xf]
          %v3135 = vld [vmem:[%s13 + $0x50] sm:$0xf]
          %v3136 = vld [vmem:[%s13 + $0x54] sm:$0xf]
          %v3137 = vld [vmem:[%s13 + $0x58] sm:$0xf]
          %v3138 = vld [vmem:[%s13 + $0x5c] sm:$0xf]
          %v3139 = vld [vmem:[%s13 + $0x60] sm:$0xf]
          %v3140 = vld [vmem:[%s13 + $0x64] sm:$0xf]
          %v3141 = vld [vmem:[%s13 + $0x68] sm:$0xf]
          %v3142 = vld [vmem:[%s13 + $0x6c] sm:$0xf]
          %v3143 = vld [vmem:[%s13 + $0x70] sm:$0xf]
          %v3144 = vld [vmem:[%s13 + $0x74] sm:$0xf]
          %v3145 = vld [vmem:[%s13 + $0x78] sm:$0xf]
          %v3146 = vld [vmem:[%s13 + $0x7c] sm:$0xf]
          %v3147 = vpack.c.bf16 %v3113, %v3113
          %v3148 = vpack.c.bf16 %v3114, %v3114
          %v3181 = vunpack.c.l.b16 %v3115
          %v3182 = vunpack.c.l.b16 %v3116
          %v3183 = vunpack.c.l.b16 %v3117
          %v3184 = vunpack.c.l.b16 %v3118
          %v3185 = vunpack.c.l.b16 %v3119
          %v3186 = vunpack.c.l.b16 %v3120
          %v3187 = vunpack.c.l.b16 %v3121
          %v3188 = vunpack.c.l.b16 %v3122
          %v3189 = vunpack.c.l.b16 %v3123
          %v3190 = vunpack.c.l.b16 %v3124
          %v3191 = vunpack.c.l.b16 %v3125
          %v3192 = vunpack.c.l.b16 %v3126
          %v3193 = vunpack.c.l.b16 %v3127
          %v3194 = vunpack.c.l.b16 %v3128
          %v3195 = vunpack.c.l.b16 %v3129
          %v3196 = vunpack.c.l.b16 %v3130
          %v3197 = vunpack.c.l.b16 %v3131
          %v3198 = vunpack.c.l.b16 %v3132
          %v3199 = vunpack.c.l.b16 %v3133
          %v3200 = vunpack.c.l.b16 %v3134
          %v3201 = vunpack.c.l.b16 %v3135
          %v3202 = vunpack.c.l.b16 %v3136
          %v3203 = vunpack.c.l.b16 %v3137
          %v3204 = vunpack.c.l.b16 %v3138
          %v3205 = vunpack.c.l.b16 %v3139
          %v3206 = vunpack.c.l.b16 %v3140
          %v3207 = vunpack.c.l.b16 %v3141
          %v3208 = vunpack.c.l.b16 %v3142
          %v3209 = vunpack.c.l.b16 %v3143
          %v3210 = vunpack.c.l.b16 %v3144
          %v3211 = vunpack.c.l.b16 %v3145
          %v3212 = vunpack.c.l.b16 %v3146
          %v3213 = vpack.c.b16 %v3182, %v3181
          %v3214 = vpack.c.b16 %v3184, %v3183
          %v3215 = vpack.c.b16 %v3186, %v3185
          %v3216 = vpack.c.b16 %v3188, %v3187
          %v3217 = vpack.c.b16 %v3190, %v3189
          %v3218 = vpack.c.b16 %v3192, %v3191
          %v3219 = vpack.c.b16 %v3194, %v3193
          %v3220 = vpack.c.b16 %v3196, %v3195
          %v3221 = vpack.c.b16 %v3198, %v3197
          %v3222 = vpack.c.b16 %v3200, %v3199
          %v3223 = vpack.c.b16 %v3202, %v3201
          %v3224 = vpack.c.b16 %v3204, %v3203
          %v3225 = vpack.c.b16 %v3206, %v3205
          %v3226 = vpack.c.b16 %v3208, %v3207
          %v3227 = vpack.c.b16 %v3210, %v3209
          %v3228 = vpack.c.b16 %v3212, %v3211
          %3245 = vmatprep.subr.bf16.mxu0 0
          %3246 = vmatpush1.bf16.msra.mxu0 %v3213
          %3247 = vmatprep.subr.bf16.mxu0 0
          %3248 = vmatpush1.bf16.msra.mxu0 %v3214
          %3249 = vmatprep.subr.bf16.mxu0 0
          %3250 = vmatpush1.bf16.msra.mxu0 %v3215
          %3251 = vmatprep.subr.bf16.mxu0 0
          %3252 = vmatpush1.bf16.msra.mxu0 %v3216
          %3253 = vmatprep.subr.bf16.mxu0 0
          %3254 = vmatpush1.bf16.msra.mxu0 %v3217
          %3255 = vmatprep.subr.bf16.mxu0 0
          %3256 = vmatpush1.bf16.msra.mxu0 %v3218
          %3257 = vmatprep.subr.bf16.mxu0 0
          %3258 = vmatpush1.bf16.msra.mxu0 %v3219
          %3259 = vmatprep.subr.bf16.mxu0 0
          %3260 = vmatpush1.bf16.msra.mxu0 %v3220
          %3261 = vmatprep.subr.bf16.mxu0 0
          %3262 = vmatpush1.bf16.msra.mxu0 %v3221
          %3263 = vmatprep.subr.bf16.mxu0 0
          %3264 = vmatpush1.bf16.msra.mxu0 %v3222
          %3265 = vmatprep.subr.bf16.mxu0 0
          %3266 = vmatpush1.bf16.msra.mxu0 %v3223
          %3267 = vmatprep.subr.bf16.mxu0 0
          %3268 = vmatpush1.bf16.msra.mxu0 %v3224
          %3269 = vmatprep.subr.bf16.mxu0 0
          %3270 = vmatpush1.bf16.msra.mxu0 %v3225
          %3271 = vmatprep.subr.bf16.mxu0 0
          %3272 = vmatpush1.bf16.msra.mxu0 %v3226
          %3273 = vmatprep.subr.bf16.mxu0 0
          %3274 = vmatpush1.bf16.msra.mxu0 %v3227
          %3275 = vmatprep.subr.bf16.mxu0 0
          %3276 = vmatpush1.bf16.msra.mxu0 %v3228
          %3277 = vmatprep.mubr.bf16.mxu0 %v3148
          %3278 = vmatmul.mubr.bf16.gmra.mrb[0].mxu0 %v3147
          %v3279 = vpop.f32.mrb[0].mxu0
          %v3280 = vadd.f32 0.0, %v3279
          %v3281 = vpop.f32.mrb[0].mxu0
          %v3282 = vpop.f32.mrb[0].mxu0
          %v3283 = vpop.f32.mrb[0].mxu0
          %3284 = vdwg.mxu0
          %3285 = vst [vmem:[%s845] sm:$0xff] %v3280
        $region96: #{_generator_step.1} parent=75 // pred_fallthru
          _
        %p3286 = scmp.lt.s32.totalorder %s38, 1
        %s3287 = scalar_select %p3286, %s38, 1
        %s3288 = smul.addr %s3287, 8
        %s3289 = scalar_lea.vmem %s14, %s3288
        %p3290 = scmp.lt.s32.totalorder %s39, 1
        %s3291 = scalar_select %p3290, %s39, 1
        %p3292 = scmp.lt.s32.totalorder %s38, 1
        %s3293 = scalar_select %p3292, %s38, 1
        %s3294 = smul.addr %s3293, 2
        %s3295 = smul.addr %s3291, 4
        %s3296 = sadd.s32 %s3294, %s3295
        %s3297 = smul.addr %s3296, 4
        %s3298 = scalar_lea.vmem %s15, %s3297
        %p3299 = scmp.lt.s32.totalorder %s39, 1
        %s3300 = scalar_select %p3299, %s39, 1
        %p3301 = scmp.lt.s32.totalorder %s38, 1
        %s3302 = scalar_select %p3301, %s38, 1
        %s3303 = smul.addr %s3302, 2
        %s3304 = smul.addr %s3300, 4
        %s3305 = sadd.s32 %s3303, %s3304
        %s3306 = smul.addr %s3305, 4
        %s3307 = scalar_lea.vmem %s16, %s3306
        // Predicated region
        $region97: #{_generator_step.1} parent=75 // pred_check
          %p3308 = pneg %p422
        $region98: #{_generator_step.1} parent=75 // pred_check_branch
          %3310 = sbr.rel (%p3308) target = $region100
        $region99: #{_generator_step.1} parent=75 // pred_region
          _
        $region100: #{_generator_step.1} parent=75 // pred_fallthru
          _
        // Predicated region
        $region101: #{_generator_step.1} parent=75 // pred_check
          %p3311 = pneg %p450
        $region102: #{_generator_step.1} parent=75 // pred_check_branch
          %3313 = sbr.rel (%p3311) target = $region104
        $region103: #{_generator_step.1} parent=75 // pred_region
          _
        $region104: #{_generator_step.1} parent=75 // pred_fallthru
          _
        // Predicated region
        $region105: #{_generator_step.1} parent=75 // pred_check
          %p3314 = pneg %p478
        $region106: #{_generator_step.1} parent=75 // pred_check_branch
          %3316 = sbr.rel (%p3314) target = $region108
        $region107: #{_generator_step.1} parent=75 // pred_region
          _
        $region108: #{_generator_step.1} parent=75 // pred_fallthru
          _
      $region76: #{_generator_step.1} parent=5 // pred_fallthru
        _
      %p3317 = scmp.le.s32.totalorder 2, %s29
      // Predicated region
      $region109: #{_generator_step.1} parent=5 // pred_check
        %p3318 = pneg %p3317
      $region110: #{_generator_step.1} parent=5 // pred_check_branch
        %3320 = sbr.rel (%p3318) target = $region112
      $region111: #{_generator_step.1} parent=5 // pred_region
        %s3321 = ssub.s32 %s29, 2
        // Predicated region
        $region113: #{_generator_step.1} parent=111 // pred_check
          %p3322 = pneg %p428
        $region114: #{_generator_step.1} parent=111 // pred_check_branch
          %3324 = sbr.rel (%p3322) target = $region116
        $region115: #{_generator_step.1} parent=111 // pred_region
          %p3325 = scmp.lt.s32.totalorder %s40, 1
          %s3326 = scalar_select %p3325, %s40, 1
          %s3327 = smul.addr %s3326, 8
          %s3328 = scalar_lea.vmem %s14, %s3327
        $region116: #{_generator_step.1} parent=111 // pred_fallthru
          _
        // Predicated region
        $region117: #{_generator_step.1} parent=111 // pred_check
          %p3329 = pneg %p456
        $region118: #{_generator_step.1} parent=111 // pred_check_branch
          %3331 = sbr.rel (%p3329) target = $region120
        $region119: #{_generator_step.1} parent=111 // pred_region
          %p3332 = scmp.lt.s32.totalorder %s41, 1
          %s3333 = scalar_select %p3332, %s41, 1
          %p3334 = scmp.lt.s32.totalorder %s40, 1
          %s3335 = scalar_select %p3334, %s40, 1
          %s3336 = smul.addr %s3335, 2
          %s3337 = smul.addr %s3333, 4
          %s3338 = sadd.s32 %s3336, %s3337
          %s3339 = smul.addr %s3338, 4
          %s3340 = scalar_lea.vmem %s15, %s3339
        $region120: #{_generator_step.1} parent=111 // pred_fallthru
          _
        // Predicated region
        $region121: #{_generator_step.1} parent=111 // pred_check
          %p3341 = pneg %p484
        $region122: #{_generator_step.1} parent=111 // pred_check_branch
          %3343 = sbr.rel (%p3341) target = $region124
        $region123: #{_generator_step.1} parent=111 // pred_region
          %p3344 = scmp.lt.s32.totalorder %s41, 1
          %s3345 = scalar_select %p3344, %s41, 1
          %p3346 = scmp.lt.s32.totalorder %s40, 1
          %s3347 = scalar_select %p3346, %s40, 1
          %s3348 = smul.addr %s3347, 2
          %s3349 = smul.addr %s3345, 4
          %s3350 = sadd.s32 %s3348, %s3349
          %s3351 = smul.addr %s3350, 4
          %s3352 = scalar_lea.vmem %s16, %s3351
        $region124: #{_generator_step.1} parent=111 // pred_fallthru
          _
      $region112: #{_generator_step.1} parent=5 // pred_fallthru
        _
    $region6: #{_generator_step.1} parent=1 // loop_footer
      %s33 = sadd.s32 1, %s29
    $region7: #{_generator_step.1} parent=1 // loop_footer_branch
      %28 = sbr.rel target = $region3
    $region8: #{_generator_step.1} parent=1 // loop_exit
      _
    %3353 = vsyncpa [#allocation7], 1
    %s3354 = scalar_lea.sflag [#allocation7], 1
    %3355 = vsyncpa %s3354, 1
    %3356 = vsyncpa [#allocation9], 1
    %s3357 = scalar_lea.sflag [#allocation9], 1
    %3358 = vsyncpa %s3357, 1

</llo_original>
